<compile_context>
chip_gen: v7x
topology: tpu7x:2x2x1
jax: 0.10.0
libtpu: 0.0.40
codegen_flags: <defaults>
</compile_context>

<pallas_src>
import functools
import math

import jax
import jax.numpy as jnp
from jax.experimental import pallas as pl
from jax.experimental.pallas import tpu as pltpu


# ----------------------------------------------------------------------------
# Fused kernel: block-diagonal Q/K/V LSTM stacks + MultiheadAttention.
# ----------------------------------------------------------------------------
def _fused_forward_kernel(x_ref, h0_ref, c0_ref, wih_ref, whh_ref, b_ref,
                          wq_ref, wk_ref, wv_ref, wo_ref,
                          bq_ref, bk_ref, bv_ref, bo_ref, mask_ref,
                          o_ref, y_scr,
                          *, hidden, num_layers, seq_len, batch, num_heads):
    H, L, T, B, NH = hidden, num_layers, seq_len, batch, num_heads
    H3 = 3 * H
    TB = T * B
    E = o_ref.shape[-1]
    hd = E // NH
    scale = 1.0 / math.sqrt(hd)

    # ---------------- fused block-diagonal Q/K/V LSTM stacks ----------------
    x_l = x_ref[...].astype(jnp.float32)           # (TB, 3F): [x_q | x_k | x_v]
    for l in range(L):
        if l > 0:
            x_l = y_scr[...]                       # previous layer's full sequence
        w_ih = wih_ref[l]                          # (3H, 12H) block-diag, gate-major cols
        w_hh = whh_ref[l]                          # (3H, 12H) block-diag
        bias = b_ref[l]                            # (1, 12H)  (b_ih + b_hh, all stacks)

        # Hoisted input projection for the whole sequence: one wide MXU matmul
        # per layer.  NOTE(scaling): gx is T*B*12H*4 bytes -- chunk it over time
        # tiles and set pltpu.CompilerParams(vmem_limit_bytes=...) if the model
        # dims grow (v7x has only 64 MiB VMEM).  Also cast operands to bf16
        # (keep preferred_element_type=f32) once the matmuls fill the MXU.
        gx = jnp.dot(x_l, w_ih, preferred_element_type=jnp.float32) + bias  # (TB, 12H)

        h = h0_ref[l].astype(jnp.float32)          # (B, 3H) = [h_q | h_k | h_v]
        c = c0_ref[l].astype(jnp.float32)          # (B, 3H)

        # Serial recurrence: ONE (B,3H)@(3H,12H) matmul per step covers all
        # three stacks.  Static unroll is fine at T=8; switch to lax.fori_loop
        # carrying (h, c) if T grows beyond ~32 (vreg pressure / compile time).
        for t in range(T):
            gates = gx[t * B:(t + 1) * B, :] + jnp.dot(
                h, w_hh, preferred_element_type=jnp.float32)     # (B, 12H)
            i_g = jax.nn.sigmoid(gates[:, 0:H3])
            f_g = jax.nn.sigmoid(gates[:, H3:2 * H3])
            g_g = jnp.tanh(gates[:, 2 * H3:3 * H3])
            o_g = jax.nn.sigmoid(gates[:, 3 * H3:4 * H3])
            c = f_g * c + i_g * g_g
            h = o_g * jnp.tanh(c)
            # Per-timestep write into the VMEM scratch (inter-layer handoff and
            # final LSTM output) -- no hs-list / concatenate epilogue.
            y_scr[t * B:(t + 1) * B, :] = h

    y = y_scr[...]                                 # (TB, 3H) = [q_out | k_out | v_out]
    xq = y[:, 0:H]
    xk = y[:, H:2 * H]
    xv = y[:, 2 * H:3 * H]

    # ---------------- MultiheadAttention (batch + heads fused) ----------------
    # Projections over all T*B rows at once; 1/sqrt(hd) folded into the biased
    # Q projection (matches torch: scale applied after in_proj bias).
    qp = (jnp.dot(xq, wq_ref[...], preferred_element_type=jnp.float32)
          + bq_ref[...]) * scale                                  # (TB, E)
    kp = jnp.dot(xk, wk_ref[...], preferred_element_type=jnp.float32) + bk_ref[...]
    vp = jnp.dot(xv, wv_ref[...], preferred_element_type=jnp.float32) + bv_ref[...]

    # Head-major row stacking: (NH*TB, hd).  Cross-(head, batch) score blocks
    # are killed by the precomputed additive mask, so one wide score matmul
    # replaces the per-head AND per-batch loops.
    q_hm = jnp.concatenate([qp[:, hh * hd:(hh + 1) * hd] for hh in range(NH)], axis=0)
    k_hm = jnp.concatenate([kp[:, hh * hd:(hh + 1) * hd] for hh in range(NH)], axis=0)
    v_hm = jnp.concatenate([vp[:, hh * hd:(hh + 1) * hd] for hh in range(NH)], axis=0)

    # Q . K^T contracting the last dims (no materialized K transpose).
    s = jax.lax.dot_general(q_hm, k_hm, (((1,), (1,)), ((), ())),
                            preferred_element_type=jnp.float32)   # (NH*TB, NH*TB)
    s = s + mask_ref[...]                                         # 0 / -1e30 mask

    # Exact softmax (no approx reciprocal) to stay tight to torch numerics.
    p = jnp.exp(s - jnp.max(s, axis=-1, keepdims=True))
    p = p / jnp.sum(p, axis=-1, keepdims=True)

    o_hm = jnp.dot(p, v_hm, preferred_element_type=jnp.float32)   # (NH*TB, hd)

    # Back to (TB, E): heads concatenated along lanes, then output projection.
    # NOTE(scaling): trailing dim is E=32 here; keep the output lane-dense
    # (multiple of 128) once the model dims are scaled up.
    o_cat = jnp.concatenate([o_hm[hh * TB:(hh + 1) * TB, :] for hh in range(NH)],
                            axis=1)                               # (TB, E)
    out = jnp.dot(o_cat, wo_ref[...], preferred_element_type=jnp.float32) + bo_ref[...]
    o_ref[...] = out.astype(o_ref.dtype)


# ----------------------------------------------------------------------------
# Wrapper-side parameter packing (traced once; pure layout work).
# ----------------------------------------------------------------------------
def _pack_fused_lstm_weights(params, hidden, num_layers):
    """Block-diagonal fusion of the Q/K/V LSTM stacks, gate-major columns.

    Fused gate-column layout (width 12H):
        [ i_q i_k i_v | f_q f_k f_v | g_q g_k g_v | o_q o_k o_v ]
    so the carried h/c inside the kernel are (B, 3H) = [·_q | ·_k | ·_v].
    """
    H = hidden
    stacks = (params["lstm_q"], params["lstm_k"], params["lstm_v"])
    wih_layers, whh_layers, b_layers = [], [], []
    for l in range(num_layers):
        in_size = stacks[0][l][0].shape[1]        # == F (layer 0) == H (layers >0)
        wih = jnp.zeros((3 * in_size, 12 * H), jnp.float32)
        whh = jnp.zeros((3 * H, 12 * H), jnp.float32)
        b = jnp.zeros((1, 12 * H), jnp.float32)
        for s in range(3):
            w_ih, w_hh, b_ih, b_hh = stacks[s][l]
            wt = w_ih.T                            # (in, 4H), cols = [i|f|g|o]
            ht = w_hh.T                            # (H, 4H)
            bb = b_ih + b_hh                       # (4H,)
            for g in range(4):
                col = g * 3 * H + s * H
                wih = wih.at[s * in_size:(s + 1) * in_size,
                             col:col + H].set(wt[:, g * H:(g + 1) * H])
                whh = whh.at[s * H:(s + 1) * H,
                             col:col + H].set(ht[:, g * H:(g + 1) * H])
                b = b.at[0, col:col + H].set(bb[g * H:(g + 1) * H])
        wih_layers.append(wih)
        whh_layers.append(whh)
        b_layers.append(b)
    return jnp.stack(wih_layers), jnp.stack(whh_layers), jnp.stack(b_layers)


def _build_attn_mask(seq_len, batch, num_heads):
    """Additive 0 / -1e30 mask selecting same-(head, batch) score blocks."""
    TB = seq_len * batch
    n = num_heads * TB
    r = jnp.arange(n)
    head = r // TB
    bat = (r % TB) % batch          # rows inside a head block are t*B + b
    valid = (head[:, None] == head[None, :]) & (bat[:, None] == bat[None, :])
    return jnp.where(valid, 0.0, -1e30).astype(jnp.float32)


# ----------------------------------------------------------------------------
# Full module forward: LSTM_q(query), LSTM_k(key), LSTM_v(value) -> MHA output.
# ----------------------------------------------------------------------------
def lstm_multihead_attention_forward(params, query, key, value):
    T, B, F = query.shape
    L = len(params["lstm_q"])
    H = params["lstm_q"][0][1].shape[1]           # w_hh: (4H, H)
    E = F
    NH = params["num_heads"]
    assert F == H, "feature_size must equal lstm_hidden_dim (module requirement)"
    assert E % NH == 0, "embed_dim must be divisible by num_heads"

    wihf, whhf, bf = _pack_fused_lstm_weights(params, H, L)          # (L,3H,12H)x2, (L,1,12H)
    h0f = jnp.concatenate([params["h0_q"], params["h0_k"], params["h0_v"]], axis=-1)
    c0f = jnp.concatenate([params["c0_q"], params["c0_k"], params["c0_v"]], axis=-1)
    x_fused = jnp.concatenate([query, key, value], axis=-1).reshape(T * B, 3 * F)

    in_w, in_b = params["in_proj_w"], params["in_proj_b"]
    wq_t = in_w[0:E].T
    wk_t = in_w[E:2 * E].T
    wv_t = in_w[2 * E:3 * E].T
    wo_t = params["out_proj_w"].T
    bq = in_b[0:E].reshape(1, E)
    bk = in_b[E:2 * E].reshape(1, E)
    bv = in_b[2 * E:3 * E].reshape(1, E)
    bo = params["out_proj_b"].reshape(1, E)

    mask = _build_attn_mask(T, B, NH)              # (NH*T*B, NH*T*B)

    kernel = functools.partial(_fused_forward_kernel, hidden=H, num_layers=L,
                               seq_len=T, batch=B, num_heads=NH)
    vmem_spec = pl.BlockSpec(memory_space=pltpu.MemorySpace.VMEM)

    out_flat = pl.pallas_call(
        kernel,
        out_shape=jax.ShapeDtypeStruct((T * B, E), query.dtype),
        in_specs=[vmem_spec] * 15,
        out_specs=vmem_spec,
        scratch_shapes=[pltpu.VMEM((T * B, 3 * H), jnp.float32)],
    )(x_fused, h0f, c0f, wihf, whhf, bf,
      wq_t, wk_t, wv_t, wo_t, bq, bk, bv, bo, mask)

    return out_flat.reshape(T, B, E)               # free row-major reshape


# ----------------------------------------------------------------------------
# Pure-JAX reference (for correctness check).
# ----------------------------------------------------------------------------
def _lstm_layer_ref(x, h0, c0, w_ih, w_hh, b_ih, b_hh):
    H = h0.shape[-1]

    def step(carry, x_t):
        h, c = carry
        gates = x_t @ w_ih.T + b_ih + h @ w_hh.T + b_hh
        i = jax.nn.sigmoid(gates[:, 0:H])
        f = jax.nn.sigmoid(gates[:, H:2 * H])
        g = jnp.tanh(gates[:, 2 * H:3 * H])
        o = jax.nn.sigmoid(gates[:, 3 * H:4 * H])
        c = f * c + i * g
        h = o * jnp.tanh(c)
        return (h, c), h

    _, ys = jax.lax.scan(step, (h0, c0), x)
    return ys


def _mha_ref(q, k, v, in_w, in_b, out_w, out_b, nh):
    T, B, E = q.shape
    hd = E // nh
    qp = jnp.einsum("tbe,fe->tbf", q, in_w[0:E]) + in_b[0:E]
    kp = jnp.einsum("tbe,fe->tbf", k, in_w[E:2 * E]) + in_b[E:2 * E]
    vp = jnp.einsum("tbe,fe->tbf", v, in_w[2 * E:3 * E]) + in_b[2 * E:3 * E]
    qh = qp.reshape(T, B, nh, hd) / math.sqrt(hd)
    kh = kp.reshape(T, B, nh, hd)
    vh = vp.reshape(T, B, nh, hd)
    s = jnp.einsum("tbhd,sbhd->bhts", qh, kh)
    p = jax.nn.softmax(s, axis=-1)
    o = jnp.einsum("bhts,sbhd->tbhd", p, vh).reshape(T, B, E)
    return jnp.einsum("tbe,fe->tbf", o, out_w) + out_b


def _forward_ref(params, query, key, value):
    def stack(x, layers, h0, c0):
        for l, (w_ih, w_hh, b_ih, b_hh) in enumerate(layers):
            x = _lstm_layer_ref(x, h0[l], c0[l], w_ih, w_hh, b_ih, b_hh)
        return x

    q = stack(query, params["lstm_q"], params["h0_q"], params["c0_q"])
    k = stack(key, params["lstm_k"], params["h0_k"], params["c0_k"])
    v = stack(value, params["lstm_v"], params["h0_v"], params["c0_v"])
    return _mha_ref(q, k, v, params["in_proj_w"], params["in_proj_b"],
                    params["out_proj_w"], params["out_proj_b"],
                    params["num_heads"])


# ----------------------------------------------------------------------------
# Deterministic parameter construction (synthetic; mirrors the torch shapes).
# ----------------------------------------------------------------------------
def make_params(key, *, num_layers, batch, feat, hidden, num_heads):
    dt = jnp.float32
    keys = iter(jax.random.split(key, 64))

    def lstm_params():
        layers = []
        for l in range(num_layers):
            in_size = feat if l == 0 else hidden
            w_ih = 0.1 * jax.random.normal(next(keys), (4 * hidden, in_size), dt)
            w_hh = 0.1 * jax.random.normal(next(keys), (4 * hidden, hidden), dt)
            b_ih = 0.1 * jax.random.normal(next(keys), (4 * hidden,), dt)
            b_hh = 0.1 * jax.random.normal(next(keys), (4 * hidden,), dt)
            layers.append((w_ih, w_hh, b_ih, b_hh))
        return layers

    def init_state():
        return jax.random.normal(next(keys), (num_layers, batch, hidden), dt)

    params = dict(
        lstm_q=lstm_params(), lstm_k=lstm_params(), lstm_v=lstm_params(),
        h0_q=init_state(), c0_q=init_state(),
        h0_k=init_state(), c0_k=init_state(),
        h0_v=init_state(), c0_v=init_state(),
        # MHA (embed_dim = feat); bias=False -> zero biases, no add_bias_kv.
        in_proj_w=0.1 * jax.random.normal(next(keys), (3 * feat, feat), dt),
        in_proj_b=jnp.zeros((3 * feat,), dt),
        out_proj_w=0.1 * jax.random.normal(next(keys), (feat, feat), dt),
        out_proj_b=jnp.zeros((feat,), dt),
        num_heads=num_heads,
    )
    return params


if __name__ == "__main__":
    SEQ_LEN = 8
    BATCH = 2
    FEAT = 32          # feature_size == embed_dim == lstm_hidden_dim
    HIDDEN = 32
    NUM_HEADS = 4
    NUM_LAYERS = 2

    root = jax.random.PRNGKey(0)
    k_params, k_q, k_k, k_v = jax.random.split(root, 4)
    params = make_params(k_params, num_layers=NUM_LAYERS, batch=BATCH,
                         feat=FEAT, hidden=HIDDEN, num_heads=NUM_HEADS)

    query = jax.random.normal(k_q, (SEQ_LEN, BATCH, FEAT), jnp.float32)
    key = jax.random.normal(k_k, (SEQ_LEN, BATCH, FEAT), jnp.float32)
    value = jax.random.normal(k_v, (SEQ_LEN, BATCH, FEAT), jnp.float32)

    out = lstm_multihead_attention_forward(params, query, key, value)
    out = jax.block_until_ready(out)

    ref = jax.block_until_ready(_forward_ref(params, query, key, value))

    assert out.shape == (SEQ_LEN, BATCH, FEAT), out.shape
    max_err = float(jnp.max(jnp.abs(out - ref)))
    if not bool(jnp.allclose(out, ref, rtol=2e-3, atol=2e-3)):
        raise AssertionError(f"Pallas output mismatch vs reference, max_err={max_err}")

    print("KERNEL_OK")
</pallas_src>

<mosaic_0001>
module attributes {stable_mosaic.version = 11 : i64} {
  func.func @_fused_forward_kernel(%arg0: memref<16x96xf32, #tpu.memory_space<vmem>>, %arg1: memref<2x2x96xf32, #tpu.memory_space<vmem>>, %arg2: memref<2x2x96xf32, #tpu.memory_space<vmem>>, %arg3: memref<2x96x384xf32, #tpu.memory_space<vmem>>, %arg4: memref<2x96x384xf32, #tpu.memory_space<vmem>>, %arg5: memref<2x1x384xf32, #tpu.memory_space<vmem>>, %arg6: memref<32x32xf32, #tpu.memory_space<vmem>>, %arg7: memref<32x32xf32, #tpu.memory_space<vmem>>, %arg8: memref<32x32xf32, #tpu.memory_space<vmem>>, %arg9: memref<32x32xf32, #tpu.memory_space<vmem>>, %arg10: memref<1x32xf32, #tpu.memory_space<vmem>>, %arg11: memref<1x32xf32, #tpu.memory_space<vmem>>, %arg12: memref<1x32xf32, #tpu.memory_space<vmem>>, %arg13: memref<1x32xf32, #tpu.memory_space<vmem>>, %arg14: memref<64x64xf32, #tpu.memory_space<vmem>>, %arg15: memref<16x32xf32, #tpu.memory_space<vmem>>, %arg16: memref<16x96xf32, #tpu.memory_space<vmem>>) attributes {dimension_semantics = [], scalar_prefetch = 0 : i64, scratch_operands = 1 : i64, tpu.core_type = #tpu.core_type<tc>} {
    %c0 = arith.constant 0 : index
    %c0_0 = arith.constant 0 : index
    %0 = vector.load %arg0[%c0, %c0_0] : memref<16x96xf32, #tpu.memory_space<vmem>>, vector<16x96xf32>
    %c0_1 = arith.constant 0 : index
    %c0_2 = arith.constant 0 : index
    %c0_3 = arith.constant 0 : index
    %1 = vector.load %arg3[%c0_1, %c0_2, %c0_3] : memref<2x96x384xf32, #tpu.memory_space<vmem>>, vector<1x96x384xf32>
    %2 = vector.shape_cast %1 : vector<1x96x384xf32> to vector<96x384xf32>
    %c0_4 = arith.constant 0 : index
    %c0_5 = arith.constant 0 : index
    %c0_6 = arith.constant 0 : index
    %3 = vector.load %arg4[%c0_4, %c0_5, %c0_6] : memref<2x96x384xf32, #tpu.memory_space<vmem>>, vector<1x96x384xf32>
    %4 = vector.shape_cast %3 : vector<1x96x384xf32> to vector<96x384xf32>
    %c0_7 = arith.constant 0 : index
    %c0_8 = arith.constant 0 : index
    %c0_9 = arith.constant 0 : index
    %5 = vector.load %arg5[%c0_7, %c0_8, %c0_9] : memref<2x1x384xf32, #tpu.memory_space<vmem>>, vector<1x1x384xf32>
    %6 = vector.shape_cast %5 : vector<1x1x384xf32> to vector<1x384xf32>
    %cst = arith.constant dense<0.000000e+00> : vector<16x384xf32>
    %7 = tpu.matmul %0, %2, %cst {dimension_numbers = #tpu.dot_dimension_numbers<[1], [0], [0], [1], [0, 0, 1, 1], [], []>} : vector<16x96xf32>, vector<96x384xf32>, vector<16x384xf32> -> vector<16x384xf32>
    %8 = vector.broadcast %6 : vector<1x384xf32> to vector<16x384xf32>
    %9 = arith.addf %7, %8 : vector<16x384xf32>
    %c0_10 = arith.constant 0 : index
    %c0_11 = arith.constant 0 : index
    %c0_12 = arith.constant 0 : index
    %10 = vector.load %arg1[%c0_10, %c0_11, %c0_12] : memref<2x2x96xf32, #tpu.memory_space<vmem>>, vector<1x2x96xf32>
    %11 = vector.shape_cast %10 : vector<1x2x96xf32> to vector<2x96xf32>
    %c0_13 = arith.constant 0 : index
    %c0_14 = arith.constant 0 : index
    %c0_15 = arith.constant 0 : index
    %12 = vector.load %arg2[%c0_13, %c0_14, %c0_15] : memref<2x2x96xf32, #tpu.memory_space<vmem>>, vector<1x2x96xf32>
    %13 = vector.shape_cast %12 : vector<1x2x96xf32> to vector<2x96xf32>
    %14 = vector.extract_strided_slice %9 {offsets = [0, 0], sizes = [2, 384], strides = [1, 1]} : vector<16x384xf32> to vector<2x384xf32>
    %cst_16 = arith.constant dense<0.000000e+00> : vector<2x384xf32>
    %15 = tpu.matmul %11, %4, %cst_16 {dimension_numbers = #tpu.dot_dimension_numbers<[1], [0], [0], [1], [0, 0, 1, 1], [], []>} : vector<2x96xf32>, vector<96x384xf32>, vector<2x384xf32> -> vector<2x384xf32>
    %16 = arith.addf %14, %15 : vector<2x384xf32>
    %17 = vector.extract_strided_slice %16 {offsets = [0, 0], sizes = [2, 96], strides = [1, 1]} : vector<2x384xf32> to vector<2x96xf32>
    %18 = arith.negf %17 : vector<2x96xf32>
    %19 = math.exp %18 : vector<2x96xf32>
    %cst_17 = arith.constant 1.000000e+00 : f32
    %20 = vector.broadcast %cst_17 : f32 to vector<2x96xf32>
    %21 = arith.addf %20, %19 : vector<2x96xf32>
    %22 = arith.divf %20, %21 : vector<2x96xf32>
    %23 = vector.extract_strided_slice %16 {offsets = [0, 96], sizes = [2, 96], strides = [1, 1]} : vector<2x384xf32> to vector<2x96xf32>
    %24 = arith.negf %23 : vector<2x96xf32>
    %25 = math.exp %24 : vector<2x96xf32>
    %cst_18 = arith.constant 1.000000e+00 : f32
    %26 = vector.broadcast %cst_18 : f32 to vector<2x96xf32>
    %27 = arith.addf %26, %25 : vector<2x96xf32>
    %28 = arith.divf %26, %27 : vector<2x96xf32>
    %29 = vector.extract_strided_slice %16 {offsets = [0, 192], sizes = [2, 96], strides = [1, 1]} : vector<2x384xf32> to vector<2x96xf32>
    %30 = math.tanh %29 : vector<2x96xf32>
    %31 = vector.extract_strided_slice %16 {offsets = [0, 288], sizes = [2, 96], strides = [1, 1]} : vector<2x384xf32> to vector<2x96xf32>
    %32 = arith.negf %31 : vector<2x96xf32>
    %33 = math.exp %32 : vector<2x96xf32>
    %cst_19 = arith.constant 1.000000e+00 : f32
    %34 = vector.broadcast %cst_19 : f32 to vector<2x96xf32>
    %35 = arith.addf %34, %33 : vector<2x96xf32>
    %36 = arith.divf %34, %35 : vector<2x96xf32>
    %37 = arith.mulf %28, %13 : vector<2x96xf32>
    %38 = arith.mulf %22, %30 : vector<2x96xf32>
    %39 = arith.addf %37, %38 : vector<2x96xf32>
    %40 = math.tanh %39 : vector<2x96xf32>
    %41 = arith.mulf %36, %40 : vector<2x96xf32>
    %c0_20 = arith.constant 0 : index
    %c0_21 = arith.constant 0 : index
    %42 = vector.load %arg16[%c0_20, %c0_21] : memref<16x96xf32, #tpu.memory_space<vmem>>, vector<2x96xf32>
    tpu.vector_store %arg16[%c0_20, %c0_21], %41 {strides = array<i32>} : memref<16x96xf32, #tpu.memory_space<vmem>>, vector<2x96xf32>,
    %43 = vector.extract_strided_slice %9 {offsets = [2, 0], sizes = [2, 384], strides = [1, 1]} : vector<16x384xf32> to vector<2x384xf32>
    %cst_22 = arith.constant dense<0.000000e+00> : vector<2x384xf32>
    %44 = tpu.matmul %41, %4, %cst_22 {dimension_numbers = #tpu.dot_dimension_numbers<[1], [0], [0], [1], [0, 0, 1, 1], [], []>} : vector<2x96xf32>, vector<96x384xf32>, vector<2x384xf32> -> vector<2x384xf32>
    %45 = arith.addf %43, %44 : vector<2x384xf32>
    %46 = vector.extract_strided_slice %45 {offsets = [0, 0], sizes = [2, 96], strides = [1, 1]} : vector<2x384xf32> to vector<2x96xf32>
    %47 = arith.negf %46 : vector<2x96xf32>
    %48 = math.exp %47 : vector<2x96xf32>
    %cst_23 = arith.constant 1.000000e+00 : f32
    %49 = vector.broadcast %cst_23 : f32 to vector<2x96xf32>
    %50 = arith.addf %49, %48 : vector<2x96xf32>
    %51 = arith.divf %49, %50 : vector<2x96xf32>
    %52 = vector.extract_strided_slice %45 {offsets = [0, 96], sizes = [2, 96], strides = [1, 1]} : vector<2x384xf32> to vector<2x96xf32>
    %53 = arith.negf %52 : vector<2x96xf32>
    %54 = math.exp %53 : vector<2x96xf32>
    %cst_24 = arith.constant 1.000000e+00 : f32
    %55 = vector.broadcast %cst_24 : f32 to vector<2x96xf32>
    %56 = arith.addf %55, %54 : vector<2x96xf32>
    %57 = arith.divf %55, %56 : vector<2x96xf32>
    %58 = vector.extract_strided_slice %45 {offsets = [0, 192], sizes = [2, 96], strides = [1, 1]} : vector<2x384xf32> to vector<2x96xf32>
    %59 = math.tanh %58 : vector<2x96xf32>
    %60 = vector.extract_strided_slice %45 {offsets = [0, 288], sizes = [2, 96], strides = [1, 1]} : vector<2x384xf32> to vector<2x96xf32>
    %61 = arith.negf %60 : vector<2x96xf32>
    %62 = math.exp %61 : vector<2x96xf32>
    %cst_25 = arith.constant 1.000000e+00 : f32
    %63 = vector.broadcast %cst_25 : f32 to vector<2x96xf32>
    %64 = arith.addf %63, %62 : vector<2x96xf32>
    %65 = arith.divf %63, %64 : vector<2x96xf32>
    %66 = arith.mulf %57, %39 : vector<2x96xf32>
    %67 = arith.mulf %51, %59 : vector<2x96xf32>
    %68 = arith.addf %66, %67 : vector<2x96xf32>
    %69 = math.tanh %68 : vector<2x96xf32>
    %70 = arith.mulf %65, %69 : vector<2x96xf32>
    %c2 = arith.constant 2 : index
    %c0_26 = arith.constant 0 : index
    %71 = vector.load %arg16[%c2, %c0_26] : memref<16x96xf32, #tpu.memory_space<vmem>>, vector<2x96xf32>
    tpu.vector_store %arg16[%c2, %c0_26], %70 {strides = array<i32>} : memref<16x96xf32, #tpu.memory_space<vmem>>, vector<2x96xf32>,
    %72 = vector.extract_strided_slice %9 {offsets = [4, 0], sizes = [2, 384], strides = [1, 1]} : vector<16x384xf32> to vector<2x384xf32>
    %cst_27 = arith.constant dense<0.000000e+00> : vector<2x384xf32>
    %73 = tpu.matmul %70, %4, %cst_27 {dimension_numbers = #tpu.dot_dimension_numbers<[1], [0], [0], [1], [0, 0, 1, 1], [], []>} : vector<2x96xf32>, vector<96x384xf32>, vector<2x384xf32> -> vector<2x384xf32>
    %74 = arith.addf %72, %73 : vector<2x384xf32>
    %75 = vector.extract_strided_slice %74 {offsets = [0, 0], sizes = [2, 96], strides = [1, 1]} : vector<2x384xf32> to vector<2x96xf32>
    %76 = arith.negf %75 : vector<2x96xf32>
    %77 = math.exp %76 : vector<2x96xf32>
    %cst_28 = arith.constant 1.000000e+00 : f32
    %78 = vector.broadcast %cst_28 : f32 to vector<2x96xf32>
    %79 = arith.addf %78, %77 : vector<2x96xf32>
    %80 = arith.divf %78, %79 : vector<2x96xf32>
    %81 = vector.extract_strided_slice %74 {offsets = [0, 96], sizes = [2, 96], strides = [1, 1]} : vector<2x384xf32> to vector<2x96xf32>
    %82 = arith.negf %81 : vector<2x96xf32>
    %83 = math.exp %82 : vector<2x96xf32>
    %cst_29 = arith.constant 1.000000e+00 : f32
    %84 = vector.broadcast %cst_29 : f32 to vector<2x96xf32>
    %85 = arith.addf %84, %83 : vector<2x96xf32>
    %86 = arith.divf %84, %85 : vector<2x96xf32>
    %87 = vector.extract_strided_slice %74 {offsets = [0, 192], sizes = [2, 96], strides = [1, 1]} : vector<2x384xf32> to vector<2x96xf32>
    %88 = math.tanh %87 : vector<2x96xf32>
    %89 = vector.extract_strided_slice %74 {offsets = [0, 288], sizes = [2, 96], strides = [1, 1]} : vector<2x384xf32> to vector<2x96xf32>
    %90 = arith.negf %89 : vector<2x96xf32>
    %91 = math.exp %90 : vector<2x96xf32>
    %cst_30 = arith.constant 1.000000e+00 : f32
    %92 = vector.broadcast %cst_30 : f32 to vector<2x96xf32>
    %93 = arith.addf %92, %91 : vector<2x96xf32>
    %94 = arith.divf %92, %93 : vector<2x96xf32>
    %95 = arith.mulf %86, %68 : vector<2x96xf32>
    %96 = arith.mulf %80, %88 : vector<2x96xf32>
    %97 = arith.addf %95, %96 : vector<2x96xf32>
    %98 = math.tanh %97 : vector<2x96xf32>
    %99 = arith.mulf %94, %98 : vector<2x96xf32>
    %c4 = arith.constant 4 : index
    %c0_31 = arith.constant 0 : index
    %100 = vector.load %arg16[%c4, %c0_31] : memref<16x96xf32, #tpu.memory_space<vmem>>, vector<2x96xf32>
    tpu.vector_store %arg16[%c4, %c0_31], %99 {strides = array<i32>} : memref<16x96xf32, #tpu.memory_space<vmem>>, vector<2x96xf32>,
    %101 = vector.extract_strided_slice %9 {offsets = [6, 0], sizes = [2, 384], strides = [1, 1]} : vector<16x384xf32> to vector<2x384xf32>
    %cst_32 = arith.constant dense<0.000000e+00> : vector<2x384xf32>
    %102 = tpu.matmul %99, %4, %cst_32 {dimension_numbers = #tpu.dot_dimension_numbers<[1], [0], [0], [1], [0, 0, 1, 1], [], []>} : vector<2x96xf32>, vector<96x384xf32>, vector<2x384xf32> -> vector<2x384xf32>
    %103 = arith.addf %101, %102 : vector<2x384xf32>
    %104 = vector.extract_strided_slice %103 {offsets = [0, 0], sizes = [2, 96], strides = [1, 1]} : vector<2x384xf32> to vector<2x96xf32>
    %105 = arith.negf %104 : vector<2x96xf32>
    %106 = math.exp %105 : vector<2x96xf32>
    %cst_33 = arith.constant 1.000000e+00 : f32
    %107 = vector.broadcast %cst_33 : f32 to vector<2x96xf32>
    %108 = arith.addf %107, %106 : vector<2x96xf32>
    %109 = arith.divf %107, %108 : vector<2x96xf32>
    %110 = vector.extract_strided_slice %103 {offsets = [0, 96], sizes = [2, 96], strides = [1, 1]} : vector<2x384xf32> to vector<2x96xf32>
    %111 = arith.negf %110 : vector<2x96xf32>
    %112 = math.exp %111 : vector<2x96xf32>
    %cst_34 = arith.constant 1.000000e+00 : f32
    %113 = vector.broadcast %cst_34 : f32 to vector<2x96xf32>
    %114 = arith.addf %113, %112 : vector<2x96xf32>
    %115 = arith.divf %113, %114 : vector<2x96xf32>
    %116 = vector.extract_strided_slice %103 {offsets = [0, 192], sizes = [2, 96], strides = [1, 1]} : vector<2x384xf32> to vector<2x96xf32>
    %117 = math.tanh %116 : vector<2x96xf32>
    %118 = vector.extract_strided_slice %103 {offsets = [0, 288], sizes = [2, 96], strides = [1, 1]} : vector<2x384xf32> to vector<2x96xf32>
    %119 = arith.negf %118 : vector<2x96xf32>
    %120 = math.exp %119 : vector<2x96xf32>
    %cst_35 = arith.constant 1.000000e+00 : f32
    %121 = vector.broadcast %cst_35 : f32 to vector<2x96xf32>
    %122 = arith.addf %121, %120 : vector<2x96xf32>
    %123 = arith.divf %121, %122 : vector<2x96xf32>
    %124 = arith.mulf %115, %97 : vector<2x96xf32>
    %125 = arith.mulf %109, %117 : vector<2x96xf32>
    %126 = arith.addf %124, %125 : vector<2x96xf32>
    %127 = math.tanh %126 : vector<2x96xf32>
    %128 = arith.mulf %123, %127 : vector<2x96xf32>
    %c6 = arith.constant 6 : index
    %c0_36 = arith.constant 0 : index
    %129 = vector.load %arg16[%c6, %c0_36] : memref<16x96xf32, #tpu.memory_space<vmem>>, vector<2x96xf32>
    tpu.vector_store %arg16[%c6, %c0_36], %128 {strides = array<i32>} : memref<16x96xf32, #tpu.memory_space<vmem>>, vector<2x96xf32>,
    %130 = vector.extract_strided_slice %9 {offsets = [8, 0], sizes = [2, 384], strides = [1, 1]} : vector<16x384xf32> to vector<2x384xf32>
    %cst_37 = arith.constant dense<0.000000e+00> : vector<2x384xf32>
    %131 = tpu.matmul %128, %4, %cst_37 {dimension_numbers = #tpu.dot_dimension_numbers<[1], [0], [0], [1], [0, 0, 1, 1], [], []>} : vector<2x96xf32>, vector<96x384xf32>, vector<2x384xf32> -> vector<2x384xf32>
    %132 = arith.addf %130, %131 : vector<2x384xf32>
    %133 = vector.extract_strided_slice %132 {offsets = [0, 0], sizes = [2, 96], strides = [1, 1]} : vector<2x384xf32> to vector<2x96xf32>
    %134 = arith.negf %133 : vector<2x96xf32>
    %135 = math.exp %134 : vector<2x96xf32>
    %cst_38 = arith.constant 1.000000e+00 : f32
    %136 = vector.broadcast %cst_38 : f32 to vector<2x96xf32>
    %137 = arith.addf %136, %135 : vector<2x96xf32>
    %138 = arith.divf %136, %137 : vector<2x96xf32>
    %139 = vector.extract_strided_slice %132 {offsets = [0, 96], sizes = [2, 96], strides = [1, 1]} : vector<2x384xf32> to vector<2x96xf32>
    %140 = arith.negf %139 : vector<2x96xf32>
    %141 = math.exp %140 : vector<2x96xf32>
    %cst_39 = arith.constant 1.000000e+00 : f32
    %142 = vector.broadcast %cst_39 : f32 to vector<2x96xf32>
    %143 = arith.addf %142, %141 : vector<2x96xf32>
    %144 = arith.divf %142, %143 : vector<2x96xf32>
    %145 = vector.extract_strided_slice %132 {offsets = [0, 192], sizes = [2, 96], strides = [1, 1]} : vector<2x384xf32> to vector<2x96xf32>
    %146 = math.tanh %145 : vector<2x96xf32>
    %147 = vector.extract_strided_slice %132 {offsets = [0, 288], sizes = [2, 96], strides = [1, 1]} : vector<2x384xf32> to vector<2x96xf32>
    %148 = arith.negf %147 : vector<2x96xf32>
    %149 = math.exp %148 : vector<2x96xf32>
    %cst_40 = arith.constant 1.000000e+00 : f32
    %150 = vector.broadcast %cst_40 : f32 to vector<2x96xf32>
    %151 = arith.addf %150, %149 : vector<2x96xf32>
    %152 = arith.divf %150, %151 : vector<2x96xf32>
    %153 = arith.mulf %144, %126 : vector<2x96xf32>
    %154 = arith.mulf %138, %146 : vector<2x96xf32>
    %155 = arith.addf %153, %154 : vector<2x96xf32>
    %156 = math.tanh %155 : vector<2x96xf32>
    %157 = arith.mulf %152, %156 : vector<2x96xf32>
    %c8 = arith.constant 8 : index
    %c0_41 = arith.constant 0 : index
    %158 = vector.load %arg16[%c8, %c0_41] : memref<16x96xf32, #tpu.memory_space<vmem>>, vector<2x96xf32>
    tpu.vector_store %arg16[%c8, %c0_41], %157 {strides = array<i32>} : memref<16x96xf32, #tpu.memory_space<vmem>>, vector<2x96xf32>,
    %159 = vector.extract_strided_slice %9 {offsets = [10, 0], sizes = [2, 384], strides = [1, 1]} : vector<16x384xf32> to vector<2x384xf32>
    %cst_42 = arith.constant dense<0.000000e+00> : vector<2x384xf32>
    %160 = tpu.matmul %157, %4, %cst_42 {dimension_numbers = #tpu.dot_dimension_numbers<[1], [0], [0], [1], [0, 0, 1, 1], [], []>} : vector<2x96xf32>, vector<96x384xf32>, vector<2x384xf32> -> vector<2x384xf32>
    %161 = arith.addf %159, %160 : vector<2x384xf32>
    %162 = vector.extract_strided_slice %161 {offsets = [0, 0], sizes = [2, 96], strides = [1, 1]} : vector<2x384xf32> to vector<2x96xf32>
    %163 = arith.negf %162 : vector<2x96xf32>
    %164 = math.exp %163 : vector<2x96xf32>
    %cst_43 = arith.constant 1.000000e+00 : f32
    %165 = vector.broadcast %cst_43 : f32 to vector<2x96xf32>
    %166 = arith.addf %165, %164 : vector<2x96xf32>
    %167 = arith.divf %165, %166 : vector<2x96xf32>
    %168 = vector.extract_strided_slice %161 {offsets = [0, 96], sizes = [2, 96], strides = [1, 1]} : vector<2x384xf32> to vector<2x96xf32>
    %169 = arith.negf %168 : vector<2x96xf32>
    %170 = math.exp %169 : vector<2x96xf32>
    %cst_44 = arith.constant 1.000000e+00 : f32
    %171 = vector.broadcast %cst_44 : f32 to vector<2x96xf32>
    %172 = arith.addf %171, %170 : vector<2x96xf32>
    %173 = arith.divf %171, %172 : vector<2x96xf32>
    %174 = vector.extract_strided_slice %161 {offsets = [0, 192], sizes = [2, 96], strides = [1, 1]} : vector<2x384xf32> to vector<2x96xf32>
    %175 = math.tanh %174 : vector<2x96xf32>
    %176 = vector.extract_strided_slice %161 {offsets = [0, 288], sizes = [2, 96], strides = [1, 1]} : vector<2x384xf32> to vector<2x96xf32>
    %177 = arith.negf %176 : vector<2x96xf32>
    %178 = math.exp %177 : vector<2x96xf32>
    %cst_45 = arith.constant 1.000000e+00 : f32
    %179 = vector.broadcast %cst_45 : f32 to vector<2x96xf32>
    %180 = arith.addf %179, %178 : vector<2x96xf32>
    %181 = arith.divf %179, %180 : vector<2x96xf32>
    %182 = arith.mulf %173, %155 : vector<2x96xf32>
    %183 = arith.mulf %167, %175 : vector<2x96xf32>
    %184 = arith.addf %182, %183 : vector<2x96xf32>
    %185 = math.tanh %184 : vector<2x96xf32>
    %186 = arith.mulf %181, %185 : vector<2x96xf32>
    %c10 = arith.constant 10 : index
    %c0_46 = arith.constant 0 : index
    %187 = vector.load %arg16[%c10, %c0_46] : memref<16x96xf32, #tpu.memory_space<vmem>>, vector<2x96xf32>
    tpu.vector_store %arg16[%c10, %c0_46], %186 {strides = array<i32>} : memref<16x96xf32, #tpu.memory_space<vmem>>, vector<2x96xf32>,
    %188 = vector.extract_strided_slice %9 {offsets = [12, 0], sizes = [2, 384], strides = [1, 1]} : vector<16x384xf32> to vector<2x384xf32>
    %cst_47 = arith.constant dense<0.000000e+00> : vector<2x384xf32>
    %189 = tpu.matmul %186, %4, %cst_47 {dimension_numbers = #tpu.dot_dimension_numbers<[1], [0], [0], [1], [0, 0, 1, 1], [], []>} : vector<2x96xf32>, vector<96x384xf32>, vector<2x384xf32> -> vector<2x384xf32>
    %190 = arith.addf %188, %189 : vector<2x384xf32>
    %191 = vector.extract_strided_slice %190 {offsets = [0, 0], sizes = [2, 96], strides = [1, 1]} : vector<2x384xf32> to vector<2x96xf32>
    %192 = arith.negf %191 : vector<2x96xf32>
    %193 = math.exp %192 : vector<2x96xf32>
    %cst_48 = arith.constant 1.000000e+00 : f32
    %194 = vector.broadcast %cst_48 : f32 to vector<2x96xf32>
    %195 = arith.addf %194, %193 : vector<2x96xf32>
    %196 = arith.divf %194, %195 : vector<2x96xf32>
    %197 = vector.extract_strided_slice %190 {offsets = [0, 96], sizes = [2, 96], strides = [1, 1]} : vector<2x384xf32> to vector<2x96xf32>
    %198 = arith.negf %197 : vector<2x96xf32>
    %199 = math.exp %198 : vector<2x96xf32>
    %cst_49 = arith.constant 1.000000e+00 : f32
    %200 = vector.broadcast %cst_49 : f32 to vector<2x96xf32>
    %201 = arith.addf %200, %199 : vector<2x96xf32>
    %202 = arith.divf %200, %201 : vector<2x96xf32>
    %203 = vector.extract_strided_slice %190 {offsets = [0, 192], sizes = [2, 96], strides = [1, 1]} : vector<2x384xf32> to vector<2x96xf32>
    %204 = math.tanh %203 : vector<2x96xf32>
    %205 = vector.extract_strided_slice %190 {offsets = [0, 288], sizes = [2, 96], strides = [1, 1]} : vector<2x384xf32> to vector<2x96xf32>
    %206 = arith.negf %205 : vector<2x96xf32>
    %207 = math.exp %206 : vector<2x96xf32>
    %cst_50 = arith.constant 1.000000e+00 : f32
    %208 = vector.broadcast %cst_50 : f32 to vector<2x96xf32>
    %209 = arith.addf %208, %207 : vector<2x96xf32>
    %210 = arith.divf %208, %209 : vector<2x96xf32>
    %211 = arith.mulf %202, %184 : vector<2x96xf32>
    %212 = arith.mulf %196, %204 : vector<2x96xf32>
    %213 = arith.addf %211, %212 : vector<2x96xf32>
    %214 = math.tanh %213 : vector<2x96xf32>
    %215 = arith.mulf %210, %214 : vector<2x96xf32>
    %c12 = arith.constant 12 : index
    %c0_51 = arith.constant 0 : index
    %216 = vector.load %arg16[%c12, %c0_51] : memref<16x96xf32, #tpu.memory_space<vmem>>, vector<2x96xf32>
    tpu.vector_store %arg16[%c12, %c0_51], %215 {strides = array<i32>} : memref<16x96xf32, #tpu.memory_space<vmem>>, vector<2x96xf32>,
    %217 = vector.extract_strided_slice %9 {offsets = [14, 0], sizes = [2, 384], strides = [1, 1]} : vector<16x384xf32> to vector<2x384xf32>
    %cst_52 = arith.constant dense<0.000000e+00> : vector<2x384xf32>
    %218 = tpu.matmul %215, %4, %cst_52 {dimension_numbers = #tpu.dot_dimension_numbers<[1], [0], [0], [1], [0, 0, 1, 1], [], []>} : vector<2x96xf32>, vector<96x384xf32>, vector<2x384xf32> -> vector<2x384xf32>
    %219 = arith.addf %217, %218 : vector<2x384xf32>
    %220 = vector.extract_strided_slice %219 {offsets = [0, 0], sizes = [2, 96], strides = [1, 1]} : vector<2x384xf32> to vector<2x96xf32>
    %221 = arith.negf %220 : vector<2x96xf32>
    %222 = math.exp %221 : vector<2x96xf32>
    %cst_53 = arith.constant 1.000000e+00 : f32
    %223 = vector.broadcast %cst_53 : f32 to vector<2x96xf32>
    %224 = arith.addf %223, %222 : vector<2x96xf32>
    %225 = arith.divf %223, %224 : vector<2x96xf32>
    %226 = vector.extract_strided_slice %219 {offsets = [0, 96], sizes = [2, 96], strides = [1, 1]} : vector<2x384xf32> to vector<2x96xf32>
    %227 = arith.negf %226 : vector<2x96xf32>
    %228 = math.exp %227 : vector<2x96xf32>
    %cst_54 = arith.constant 1.000000e+00 : f32
    %229 = vector.broadcast %cst_54 : f32 to vector<2x96xf32>
    %230 = arith.addf %229, %228 : vector<2x96xf32>
    %231 = arith.divf %229, %230 : vector<2x96xf32>
    %232 = vector.extract_strided_slice %219 {offsets = [0, 192], sizes = [2, 96], strides = [1, 1]} : vector<2x384xf32> to vector<2x96xf32>
    %233 = math.tanh %232 : vector<2x96xf32>
    %234 = vector.extract_strided_slice %219 {offsets = [0, 288], sizes = [2, 96], strides = [1, 1]} : vector<2x384xf32> to vector<2x96xf32>
    %235 = arith.negf %234 : vector<2x96xf32>
    %236 = math.exp %235 : vector<2x96xf32>
    %cst_55 = arith.constant 1.000000e+00 : f32
    %237 = vector.broadcast %cst_55 : f32 to vector<2x96xf32>
    %238 = arith.addf %237, %236 : vector<2x96xf32>
    %239 = arith.divf %237, %238 : vector<2x96xf32>
    %240 = arith.mulf %231, %213 : vector<2x96xf32>
    %241 = arith.mulf %225, %233 : vector<2x96xf32>
    %242 = arith.addf %240, %241 : vector<2x96xf32>
    %243 = math.tanh %242 : vector<2x96xf32>
    %244 = arith.mulf %239, %243 : vector<2x96xf32>
    %c14 = arith.constant 14 : index
    %c0_56 = arith.constant 0 : index
    %245 = vector.load %arg16[%c14, %c0_56] : memref<16x96xf32, #tpu.memory_space<vmem>>, vector<2x96xf32>
    tpu.vector_store %arg16[%c14, %c0_56], %244 {strides = array<i32>} : memref<16x96xf32, #tpu.memory_space<vmem>>, vector<2x96xf32>,
    %c0_57 = arith.constant 0 : index
    %c0_58 = arith.constant 0 : index
    %246 = vector.load %arg16[%c0_57, %c0_58] : memref<16x96xf32, #tpu.memory_space<vmem>>, vector<16x96xf32>
    %c1 = arith.constant 1 : index
    %c0_59 = arith.constant 0 : index
    %c0_60 = arith.constant 0 : index
    %247 = vector.load %arg3[%c1, %c0_59, %c0_60] : memref<2x96x384xf32, #tpu.memory_space<vmem>>, vector<1x96x384xf32>
    %248 = vector.shape_cast %247 : vector<1x96x384xf32> to vector<96x384xf32>
    %c1_61 = arith.constant 1 : index
    %c0_62 = arith.constant 0 : index
    %c0_63 = arith.constant 0 : index
    %249 = vector.load %arg4[%c1_61, %c0_62, %c0_63] : memref<2x96x384xf32, #tpu.memory_space<vmem>>, vector<1x96x384xf32>
    %250 = vector.shape_cast %249 : vector<1x96x384xf32> to vector<96x384xf32>
    %c1_64 = arith.constant 1 : index
    %c0_65 = arith.constant 0 : index
    %c0_66 = arith.constant 0 : index
    %251 = vector.load %arg5[%c1_64, %c0_65, %c0_66] : memref<2x1x384xf32, #tpu.memory_space<vmem>>, vector<1x1x384xf32>
    %252 = vector.shape_cast %251 : vector<1x1x384xf32> to vector<1x384xf32>
    %cst_67 = arith.constant dense<0.000000e+00> : vector<16x384xf32>
    %253 = tpu.matmul %246, %248, %cst_67 {dimension_numbers = #tpu.dot_dimension_numbers<[1], [0], [0], [1], [0, 0, 1, 1], [], []>} : vector<16x96xf32>, vector<96x384xf32>, vector<16x384xf32> -> vector<16x384xf32>
    %254 = vector.broadcast %252 : vector<1x384xf32> to vector<16x384xf32>
    %255 = arith.addf %253, %254 : vector<16x384xf32>
    %c1_68 = arith.constant 1 : index
    %c0_69 = arith.constant 0 : index
    %c0_70 = arith.constant 0 : index
    %256 = vector.load %arg1[%c1_68, %c0_69, %c0_70] : memref<2x2x96xf32, #tpu.memory_space<vmem>>, vector<1x2x96xf32>
    %257 = vector.shape_cast %256 : vector<1x2x96xf32> to vector<2x96xf32>
    %c1_71 = arith.constant 1 : index
    %c0_72 = arith.constant 0 : index
    %c0_73 = arith.constant 0 : index
    %258 = vector.load %arg2[%c1_71, %c0_72, %c0_73] : memref<2x2x96xf32, #tpu.memory_space<vmem>>, vector<1x2x96xf32>
    %259 = vector.shape_cast %258 : vector<1x2x96xf32> to vector<2x96xf32>
    %260 = vector.extract_strided_slice %255 {offsets = [0, 0], sizes = [2, 384], strides = [1, 1]} : vector<16x384xf32> to vector<2x384xf32>
    %cst_74 = arith.constant dense<0.000000e+00> : vector<2x384xf32>
    %261 = tpu.matmul %257, %250, %cst_74 {dimension_numbers = #tpu.dot_dimension_numbers<[1], [0], [0], [1], [0, 0, 1, 1], [], []>} : vector<2x96xf32>, vector<96x384xf32>, vector<2x384xf32> -> vector<2x384xf32>
    %262 = arith.addf %260, %261 : vector<2x384xf32>
    %263 = vector.extract_strided_slice %262 {offsets = [0, 0], sizes = [2, 96], strides = [1, 1]} : vector<2x384xf32> to vector<2x96xf32>
    %264 = arith.negf %263 : vector<2x96xf32>
    %265 = math.exp %264 : vector<2x96xf32>
    %cst_75 = arith.constant 1.000000e+00 : f32
    %266 = vector.broadcast %cst_75 : f32 to vector<2x96xf32>
    %267 = arith.addf %266, %265 : vector<2x96xf32>
    %268 = arith.divf %266, %267 : vector<2x96xf32>
    %269 = vector.extract_strided_slice %262 {offsets = [0, 96], sizes = [2, 96], strides = [1, 1]} : vector<2x384xf32> to vector<2x96xf32>
    %270 = arith.negf %269 : vector<2x96xf32>
    %271 = math.exp %270 : vector<2x96xf32>
    %cst_76 = arith.constant 1.000000e+00 : f32
    %272 = vector.broadcast %cst_76 : f32 to vector<2x96xf32>
    %273 = arith.addf %272, %271 : vector<2x96xf32>
    %274 = arith.divf %272, %273 : vector<2x96xf32>
    %275 = vector.extract_strided_slice %262 {offsets = [0, 192], sizes = [2, 96], strides = [1, 1]} : vector<2x384xf32> to vector<2x96xf32>
    %276 = math.tanh %275 : vector<2x96xf32>
    %277 = vector.extract_strided_slice %262 {offsets = [0, 288], sizes = [2, 96], strides = [1, 1]} : vector<2x384xf32> to vector<2x96xf32>
    %278 = arith.negf %277 : vector<2x96xf32>
    %279 = math.exp %278 : vector<2x96xf32>
    %cst_77 = arith.constant 1.000000e+00 : f32
    %280 = vector.broadcast %cst_77 : f32 to vector<2x96xf32>
    %281 = arith.addf %280, %279 : vector<2x96xf32>
    %282 = arith.divf %280, %281 : vector<2x96xf32>
    %283 = arith.mulf %274, %259 : vector<2x96xf32>
    %284 = arith.mulf %268, %276 : vector<2x96xf32>
    %285 = arith.addf %283, %284 : vector<2x96xf32>
    %286 = math.tanh %285 : vector<2x96xf32>
    %287 = arith.mulf %282, %286 : vector<2x96xf32>
    %c0_78 = arith.constant 0 : index
    %c0_79 = arith.constant 0 : index
    %288 = vector.load %arg16[%c0_78, %c0_79] : memref<16x96xf32, #tpu.memory_space<vmem>>, vector<2x96xf32>
    tpu.vector_store %arg16[%c0_78, %c0_79], %287 {strides = array<i32>} : memref<16x96xf32, #tpu.memory_space<vmem>>, vector<2x96xf32>,
    %289 = vector.extract_strided_slice %255 {offsets = [2, 0], sizes = [2, 384], strides = [1, 1]} : vector<16x384xf32> to vector<2x384xf32>
    %cst_80 = arith.constant dense<0.000000e+00> : vector<2x384xf32>
    %290 = tpu.matmul %287, %250, %cst_80 {dimension_numbers = #tpu.dot_dimension_numbers<[1], [0], [0], [1], [0, 0, 1, 1], [], []>} : vector<2x96xf32>, vector<96x384xf32>, vector<2x384xf32> -> vector<2x384xf32>
    %291 = arith.addf %289, %290 : vector<2x384xf32>
    %292 = vector.extract_strided_slice %291 {offsets = [0, 0], sizes = [2, 96], strides = [1, 1]} : vector<2x384xf32> to vector<2x96xf32>
    %293 = arith.negf %292 : vector<2x96xf32>
    %294 = math.exp %293 : vector<2x96xf32>
    %cst_81 = arith.constant 1.000000e+00 : f32
    %295 = vector.broadcast %cst_81 : f32 to vector<2x96xf32>
    %296 = arith.addf %295, %294 : vector<2x96xf32>
    %297 = arith.divf %295, %296 : vector<2x96xf32>
    %298 = vector.extract_strided_slice %291 {offsets = [0, 96], sizes = [2, 96], strides = [1, 1]} : vector<2x384xf32> to vector<2x96xf32>
    %299 = arith.negf %298 : vector<2x96xf32>
    %300 = math.exp %299 : vector<2x96xf32>
    %cst_82 = arith.constant 1.000000e+00 : f32
    %301 = vector.broadcast %cst_82 : f32 to vector<2x96xf32>
    %302 = arith.addf %301, %300 : vector<2x96xf32>
    %303 = arith.divf %301, %302 : vector<2x96xf32>
    %304 = vector.extract_strided_slice %291 {offsets = [0, 192], sizes = [2, 96], strides = [1, 1]} : vector<2x384xf32> to vector<2x96xf32>
    %305 = math.tanh %304 : vector<2x96xf32>
    %306 = vector.extract_strided_slice %291 {offsets = [0, 288], sizes = [2, 96], strides = [1, 1]} : vector<2x384xf32> to vector<2x96xf32>
    %307 = arith.negf %306 : vector<2x96xf32>
    %308 = math.exp %307 : vector<2x96xf32>
    %cst_83 = arith.constant 1.000000e+00 : f32
    %309 = vector.broadcast %cst_83 : f32 to vector<2x96xf32>
    %310 = arith.addf %309, %308 : vector<2x96xf32>
    %311 = arith.divf %309, %310 : vector<2x96xf32>
    %312 = arith.mulf %303, %285 : vector<2x96xf32>
    %313 = arith.mulf %297, %305 : vector<2x96xf32>
    %314 = arith.addf %312, %313 : vector<2x96xf32>
    %315 = math.tanh %314 : vector<2x96xf32>
    %316 = arith.mulf %311, %315 : vector<2x96xf32>
    %c2_84 = arith.constant 2 : index
    %c0_85 = arith.constant 0 : index
    %317 = vector.load %arg16[%c2_84, %c0_85] : memref<16x96xf32, #tpu.memory_space<vmem>>, vector<2x96xf32>
    tpu.vector_store %arg16[%c2_84, %c0_85], %316 {strides = array<i32>} : memref<16x96xf32, #tpu.memory_space<vmem>>, vector<2x96xf32>,
    %318 = vector.extract_strided_slice %255 {offsets = [4, 0], sizes = [2, 384], strides = [1, 1]} : vector<16x384xf32> to vector<2x384xf32>
    %cst_86 = arith.constant dense<0.000000e+00> : vector<2x384xf32>
    %319 = tpu.matmul %316, %250, %cst_86 {dimension_numbers = #tpu.dot_dimension_numbers<[1], [0], [0], [1], [0, 0, 1, 1], [], []>} : vector<2x96xf32>, vector<96x384xf32>, vector<2x384xf32> -> vector<2x384xf32>
    %320 = arith.addf %318, %319 : vector<2x384xf32>
    %321 = vector.extract_strided_slice %320 {offsets = [0, 0], sizes = [2, 96], strides = [1, 1]} : vector<2x384xf32> to vector<2x96xf32>
    %322 = arith.negf %321 : vector<2x96xf32>
    %323 = math.exp %322 : vector<2x96xf32>
    %cst_87 = arith.constant 1.000000e+00 : f32
    %324 = vector.broadcast %cst_87 : f32 to vector<2x96xf32>
    %325 = arith.addf %324, %323 : vector<2x96xf32>
    %326 = arith.divf %324, %325 : vector<2x96xf32>
    %327 = vector.extract_strided_slice %320 {offsets = [0, 96], sizes = [2, 96], strides = [1, 1]} : vector<2x384xf32> to vector<2x96xf32>
    %328 = arith.negf %327 : vector<2x96xf32>
    %329 = math.exp %328 : vector<2x96xf32>
    %cst_88 = arith.constant 1.000000e+00 : f32
    %330 = vector.broadcast %cst_88 : f32 to vector<2x96xf32>
    %331 = arith.addf %330, %329 : vector<2x96xf32>
    %332 = arith.divf %330, %331 : vector<2x96xf32>
    %333 = vector.extract_strided_slice %320 {offsets = [0, 192], sizes = [2, 96], strides = [1, 1]} : vector<2x384xf32> to vector<2x96xf32>
    %334 = math.tanh %333 : vector<2x96xf32>
    %335 = vector.extract_strided_slice %320 {offsets = [0, 288], sizes = [2, 96], strides = [1, 1]} : vector<2x384xf32> to vector<2x96xf32>
    %336 = arith.negf %335 : vector<2x96xf32>
    %337 = math.exp %336 : vector<2x96xf32>
    %cst_89 = arith.constant 1.000000e+00 : f32
    %338 = vector.broadcast %cst_89 : f32 to vector<2x96xf32>
    %339 = arith.addf %338, %337 : vector<2x96xf32>
    %340 = arith.divf %338, %339 : vector<2x96xf32>
    %341 = arith.mulf %332, %314 : vector<2x96xf32>
    %342 = arith.mulf %326, %334 : vector<2x96xf32>
    %343 = arith.addf %341, %342 : vector<2x96xf32>
    %344 = math.tanh %343 : vector<2x96xf32>
    %345 = arith.mulf %340, %344 : vector<2x96xf32>
    %c4_90 = arith.constant 4 : index
    %c0_91 = arith.constant 0 : index
    %346 = vector.load %arg16[%c4_90, %c0_91] : memref<16x96xf32, #tpu.memory_space<vmem>>, vector<2x96xf32>
    tpu.vector_store %arg16[%c4_90, %c0_91], %345 {strides = array<i32>} : memref<16x96xf32, #tpu.memory_space<vmem>>, vector<2x96xf32>,
    %347 = vector.extract_strided_slice %255 {offsets = [6, 0], sizes = [2, 384], strides = [1, 1]} : vector<16x384xf32> to vector<2x384xf32>
    %cst_92 = arith.constant dense<0.000000e+00> : vector<2x384xf32>
    %348 = tpu.matmul %345, %250, %cst_92 {dimension_numbers = #tpu.dot_dimension_numbers<[1], [0], [0], [1], [0, 0, 1, 1], [], []>} : vector<2x96xf32>, vector<96x384xf32>, vector<2x384xf32> -> vector<2x384xf32>
    %349 = arith.addf %347, %348 : vector<2x384xf32>
    %350 = vector.extract_strided_slice %349 {offsets = [0, 0], sizes = [2, 96], strides = [1, 1]} : vector<2x384xf32> to vector<2x96xf32>
    %351 = arith.negf %350 : vector<2x96xf32>
    %352 = math.exp %351 : vector<2x96xf32>
    %cst_93 = arith.constant 1.000000e+00 : f32
    %353 = vector.broadcast %cst_93 : f32 to vector<2x96xf32>
    %354 = arith.addf %353, %352 : vector<2x96xf32>
    %355 = arith.divf %353, %354 : vector<2x96xf32>
    %356 = vector.extract_strided_slice %349 {offsets = [0, 96], sizes = [2, 96], strides = [1, 1]} : vector<2x384xf32> to vector<2x96xf32>
    %357 = arith.negf %356 : vector<2x96xf32>
    %358 = math.exp %357 : vector<2x96xf32>
    %cst_94 = arith.constant 1.000000e+00 : f32
    %359 = vector.broadcast %cst_94 : f32 to vector<2x96xf32>
    %360 = arith.addf %359, %358 : vector<2x96xf32>
    %361 = arith.divf %359, %360 : vector<2x96xf32>
    %362 = vector.extract_strided_slice %349 {offsets = [0, 192], sizes = [2, 96], strides = [1, 1]} : vector<2x384xf32> to vector<2x96xf32>
    %363 = math.tanh %362 : vector<2x96xf32>
    %364 = vector.extract_strided_slice %349 {offsets = [0, 288], sizes = [2, 96], strides = [1, 1]} : vector<2x384xf32> to vector<2x96xf32>
    %365 = arith.negf %364 : vector<2x96xf32>
    %366 = math.exp %365 : vector<2x96xf32>
    %cst_95 = arith.constant 1.000000e+00 : f32
    %367 = vector.broadcast %cst_95 : f32 to vector<2x96xf32>
    %368 = arith.addf %367, %366 : vector<2x96xf32>
    %369 = arith.divf %367, %368 : vector<2x96xf32>
    %370 = arith.mulf %361, %343 : vector<2x96xf32>
    %371 = arith.mulf %355, %363 : vector<2x96xf32>
    %372 = arith.addf %370, %371 : vector<2x96xf32>
    %373 = math.tanh %372 : vector<2x96xf32>
    %374 = arith.mulf %369, %373 : vector<2x96xf32>
    %c6_96 = arith.constant 6 : index
    %c0_97 = arith.constant 0 : index
    %375 = vector.load %arg16[%c6_96, %c0_97] : memref<16x96xf32, #tpu.memory_space<vmem>>, vector<2x96xf32>
    tpu.vector_store %arg16[%c6_96, %c0_97], %374 {strides = array<i32>} : memref<16x96xf32, #tpu.memory_space<vmem>>, vector<2x96xf32>,
    %376 = vector.extract_strided_slice %255 {offsets = [8, 0], sizes = [2, 384], strides = [1, 1]} : vector<16x384xf32> to vector<2x384xf32>
    %cst_98 = arith.constant dense<0.000000e+00> : vector<2x384xf32>
    %377 = tpu.matmul %374, %250, %cst_98 {dimension_numbers = #tpu.dot_dimension_numbers<[1], [0], [0], [1], [0, 0, 1, 1], [], []>} : vector<2x96xf32>, vector<96x384xf32>, vector<2x384xf32> -> vector<2x384xf32>
    %378 = arith.addf %376, %377 : vector<2x384xf32>
    %379 = vector.extract_strided_slice %378 {offsets = [0, 0], sizes = [2, 96], strides = [1, 1]} : vector<2x384xf32> to vector<2x96xf32>
    %380 = arith.negf %379 : vector<2x96xf32>
    %381 = math.exp %380 : vector<2x96xf32>
    %cst_99 = arith.constant 1.000000e+00 : f32
    %382 = vector.broadcast %cst_99 : f32 to vector<2x96xf32>
    %383 = arith.addf %382, %381 : vector<2x96xf32>
    %384 = arith.divf %382, %383 : vector<2x96xf32>
    %385 = vector.extract_strided_slice %378 {offsets = [0, 96], sizes = [2, 96], strides = [1, 1]} : vector<2x384xf32> to vector<2x96xf32>
    %386 = arith.negf %385 : vector<2x96xf32>
    %387 = math.exp %386 : vector<2x96xf32>
    %cst_100 = arith.constant 1.000000e+00 : f32
    %388 = vector.broadcast %cst_100 : f32 to vector<2x96xf32>
    %389 = arith.addf %388, %387 : vector<2x96xf32>
    %390 = arith.divf %388, %389 : vector<2x96xf32>
    %391 = vector.extract_strided_slice %378 {offsets = [0, 192], sizes = [2, 96], strides = [1, 1]} : vector<2x384xf32> to vector<2x96xf32>
    %392 = math.tanh %391 : vector<2x96xf32>
    %393 = vector.extract_strided_slice %378 {offsets = [0, 288], sizes = [2, 96], strides = [1, 1]} : vector<2x384xf32> to vector<2x96xf32>
    %394 = arith.negf %393 : vector<2x96xf32>
    %395 = math.exp %394 : vector<2x96xf32>
    %cst_101 = arith.constant 1.000000e+00 : f32
    %396 = vector.broadcast %cst_101 : f32 to vector<2x96xf32>
    %397 = arith.addf %396, %395 : vector<2x96xf32>
    %398 = arith.divf %396, %397 : vector<2x96xf32>
    %399 = arith.mulf %390, %372 : vector<2x96xf32>
    %400 = arith.mulf %384, %392 : vector<2x96xf32>
    %401 = arith.addf %399, %400 : vector<2x96xf32>
    %402 = math.tanh %401 : vector<2x96xf32>
    %403 = arith.mulf %398, %402 : vector<2x96xf32>
    %c8_102 = arith.constant 8 : index
    %c0_103 = arith.constant 0 : index
    %404 = vector.load %arg16[%c8_102, %c0_103] : memref<16x96xf32, #tpu.memory_space<vmem>>, vector<2x96xf32>
    tpu.vector_store %arg16[%c8_102, %c0_103], %403 {strides = array<i32>} : memref<16x96xf32, #tpu.memory_space<vmem>>, vector<2x96xf32>,
    %405 = vector.extract_strided_slice %255 {offsets = [10, 0], sizes = [2, 384], strides = [1, 1]} : vector<16x384xf32> to vector<2x384xf32>
    %cst_104 = arith.constant dense<0.000000e+00> : vector<2x384xf32>
    %406 = tpu.matmul %403, %250, %cst_104 {dimension_numbers = #tpu.dot_dimension_numbers<[1], [0], [0], [1], [0, 0, 1, 1], [], []>} : vector<2x96xf32>, vector<96x384xf32>, vector<2x384xf32> -> vector<2x384xf32>
    %407 = arith.addf %405, %406 : vector<2x384xf32>
    %408 = vector.extract_strided_slice %407 {offsets = [0, 0], sizes = [2, 96], strides = [1, 1]} : vector<2x384xf32> to vector<2x96xf32>
    %409 = arith.negf %408 : vector<2x96xf32>
    %410 = math.exp %409 : vector<2x96xf32>
    %cst_105 = arith.constant 1.000000e+00 : f32
    %411 = vector.broadcast %cst_105 : f32 to vector<2x96xf32>
    %412 = arith.addf %411, %410 : vector<2x96xf32>
    %413 = arith.divf %411, %412 : vector<2x96xf32>
    %414 = vector.extract_strided_slice %407 {offsets = [0, 96], sizes = [2, 96], strides = [1, 1]} : vector<2x384xf32> to vector<2x96xf32>
    %415 = arith.negf %414 : vector<2x96xf32>
    %416 = math.exp %415 : vector<2x96xf32>
    %cst_106 = arith.constant 1.000000e+00 : f32
    %417 = vector.broadcast %cst_106 : f32 to vector<2x96xf32>
    %418 = arith.addf %417, %416 : vector<2x96xf32>
    %419 = arith.divf %417, %418 : vector<2x96xf32>
    %420 = vector.extract_strided_slice %407 {offsets = [0, 192], sizes = [2, 96], strides = [1, 1]} : vector<2x384xf32> to vector<2x96xf32>
    %421 = math.tanh %420 : vector<2x96xf32>
    %422 = vector.extract_strided_slice %407 {offsets = [0, 288], sizes = [2, 96], strides = [1, 1]} : vector<2x384xf32> to vector<2x96xf32>
    %423 = arith.negf %422 : vector<2x96xf32>
    %424 = math.exp %423 : vector<2x96xf32>
    %cst_107 = arith.constant 1.000000e+00 : f32
    %425 = vector.broadcast %cst_107 : f32 to vector<2x96xf32>
    %426 = arith.addf %425, %424 : vector<2x96xf32>
    %427 = arith.divf %425, %426 : vector<2x96xf32>
    %428 = arith.mulf %419, %401 : vector<2x96xf32>
    %429 = arith.mulf %413, %421 : vector<2x96xf32>
    %430 = arith.addf %428, %429 : vector<2x96xf32>
    %431 = math.tanh %430 : vector<2x96xf32>
    %432 = arith.mulf %427, %431 : vector<2x96xf32>
    %c10_108 = arith.constant 10 : index
    %c0_109 = arith.constant 0 : index
    %433 = vector.load %arg16[%c10_108, %c0_109] : memref<16x96xf32, #tpu.memory_space<vmem>>, vector<2x96xf32>
    tpu.vector_store %arg16[%c10_108, %c0_109], %432 {strides = array<i32>} : memref<16x96xf32, #tpu.memory_space<vmem>>, vector<2x96xf32>,
    %434 = vector.extract_strided_slice %255 {offsets = [12, 0], sizes = [2, 384], strides = [1, 1]} : vector<16x384xf32> to vector<2x384xf32>
    %cst_110 = arith.constant dense<0.000000e+00> : vector<2x384xf32>
    %435 = tpu.matmul %432, %250, %cst_110 {dimension_numbers = #tpu.dot_dimension_numbers<[1], [0], [0], [1], [0, 0, 1, 1], [], []>} : vector<2x96xf32>, vector<96x384xf32>, vector<2x384xf32> -> vector<2x384xf32>
    %436 = arith.addf %434, %435 : vector<2x384xf32>
    %437 = vector.extract_strided_slice %436 {offsets = [0, 0], sizes = [2, 96], strides = [1, 1]} : vector<2x384xf32> to vector<2x96xf32>
    %438 = arith.negf %437 : vector<2x96xf32>
    %439 = math.exp %438 : vector<2x96xf32>
    %cst_111 = arith.constant 1.000000e+00 : f32
    %440 = vector.broadcast %cst_111 : f32 to vector<2x96xf32>
    %441 = arith.addf %440, %439 : vector<2x96xf32>
    %442 = arith.divf %440, %441 : vector<2x96xf32>
    %443 = vector.extract_strided_slice %436 {offsets = [0, 96], sizes = [2, 96], strides = [1, 1]} : vector<2x384xf32> to vector<2x96xf32>
    %444 = arith.negf %443 : vector<2x96xf32>
    %445 = math.exp %444 : vector<2x96xf32>
    %cst_112 = arith.constant 1.000000e+00 : f32
    %446 = vector.broadcast %cst_112 : f32 to vector<2x96xf32>
    %447 = arith.addf %446, %445 : vector<2x96xf32>
    %448 = arith.divf %446, %447 : vector<2x96xf32>
    %449 = vector.extract_strided_slice %436 {offsets = [0, 192], sizes = [2, 96], strides = [1, 1]} : vector<2x384xf32> to vector<2x96xf32>
    %450 = math.tanh %449 : vector<2x96xf32>
    %451 = vector.extract_strided_slice %436 {offsets = [0, 288], sizes = [2, 96], strides = [1, 1]} : vector<2x384xf32> to vector<2x96xf32>
    %452 = arith.negf %451 : vector<2x96xf32>
    %453 = math.exp %452 : vector<2x96xf32>
    %cst_113 = arith.constant 1.000000e+00 : f32
    %454 = vector.broadcast %cst_113 : f32 to vector<2x96xf32>
    %455 = arith.addf %454, %453 : vector<2x96xf32>
    %456 = arith.divf %454, %455 : vector<2x96xf32>
    %457 = arith.mulf %448, %430 : vector<2x96xf32>
    %458 = arith.mulf %442, %450 : vector<2x96xf32>
    %459 = arith.addf %457, %458 : vector<2x96xf32>
    %460 = math.tanh %459 : vector<2x96xf32>
    %461 = arith.mulf %456, %460 : vector<2x96xf32>
    %c12_114 = arith.constant 12 : index
    %c0_115 = arith.constant 0 : index
    %462 = vector.load %arg16[%c12_114, %c0_115] : memref<16x96xf32, #tpu.memory_space<vmem>>, vector<2x96xf32>
    tpu.vector_store %arg16[%c12_114, %c0_115], %461 {strides = array<i32>} : memref<16x96xf32, #tpu.memory_space<vmem>>, vector<2x96xf32>,
    %463 = vector.extract_strided_slice %255 {offsets = [14, 0], sizes = [2, 384], strides = [1, 1]} : vector<16x384xf32> to vector<2x384xf32>
    %cst_116 = arith.constant dense<0.000000e+00> : vector<2x384xf32>
    %464 = tpu.matmul %461, %250, %cst_116 {dimension_numbers = #tpu.dot_dimension_numbers<[1], [0], [0], [1], [0, 0, 1, 1], [], []>} : vector<2x96xf32>, vector<96x384xf32>, vector<2x384xf32> -> vector<2x384xf32>
    %465 = arith.addf %463, %464 : vector<2x384xf32>
    %466 = vector.extract_strided_slice %465 {offsets = [0, 0], sizes = [2, 96], strides = [1, 1]} : vector<2x384xf32> to vector<2x96xf32>
    %467 = arith.negf %466 : vector<2x96xf32>
    %468 = math.exp %467 : vector<2x96xf32>
    %cst_117 = arith.constant 1.000000e+00 : f32
    %469 = vector.broadcast %cst_117 : f32 to vector<2x96xf32>
    %470 = arith.addf %469, %468 : vector<2x96xf32>
    %471 = arith.divf %469, %470 : vector<2x96xf32>
    %472 = vector.extract_strided_slice %465 {offsets = [0, 96], sizes = [2, 96], strides = [1, 1]} : vector<2x384xf32> to vector<2x96xf32>
    %473 = arith.negf %472 : vector<2x96xf32>
    %474 = math.exp %473 : vector<2x96xf32>
    %cst_118 = arith.constant 1.000000e+00 : f32
    %475 = vector.broadcast %cst_118 : f32 to vector<2x96xf32>
    %476 = arith.addf %475, %474 : vector<2x96xf32>
    %477 = arith.divf %475, %476 : vector<2x96xf32>
    %478 = vector.extract_strided_slice %465 {offsets = [0, 192], sizes = [2, 96], strides = [1, 1]} : vector<2x384xf32> to vector<2x96xf32>
    %479 = math.tanh %478 : vector<2x96xf32>
    %480 = vector.extract_strided_slice %465 {offsets = [0, 288], sizes = [2, 96], strides = [1, 1]} : vector<2x384xf32> to vector<2x96xf32>
    %481 = arith.negf %480 : vector<2x96xf32>
    %482 = math.exp %481 : vector<2x96xf32>
    %cst_119 = arith.constant 1.000000e+00 : f32
    %483 = vector.broadcast %cst_119 : f32 to vector<2x96xf32>
    %484 = arith.addf %483, %482 : vector<2x96xf32>
    %485 = arith.divf %483, %484 : vector<2x96xf32>
    %486 = arith.mulf %477, %459 : vector<2x96xf32>
    %487 = arith.mulf %471, %479 : vector<2x96xf32>
    %488 = arith.addf %486, %487 : vector<2x96xf32>
    %489 = math.tanh %488 : vector<2x96xf32>
    %490 = arith.mulf %485, %489 : vector<2x96xf32>
    %c14_120 = arith.constant 14 : index
    %c0_121 = arith.constant 0 : index
    %491 = vector.load %arg16[%c14_120, %c0_121] : memref<16x96xf32, #tpu.memory_space<vmem>>, vector<2x96xf32>
    tpu.vector_store %arg16[%c14_120, %c0_121], %490 {strides = array<i32>} : memref<16x96xf32, #tpu.memory_space<vmem>>, vector<2x96xf32>,
    %c0_122 = arith.constant 0 : index
    %c0_123 = arith.constant 0 : index
    %492 = vector.load %arg16[%c0_122, %c0_123] : memref<16x96xf32, #tpu.memory_space<vmem>>, vector<16x96xf32>
    %493 = vector.extract_strided_slice %492 {offsets = [0, 0], sizes = [16, 32], strides = [1, 1]} : vector<16x96xf32> to vector<16x32xf32>
    %494 = vector.extract_strided_slice %492 {offsets = [0, 32], sizes = [16, 32], strides = [1, 1]} : vector<16x96xf32> to vector<16x32xf32>
    %495 = vector.extract_strided_slice %492 {offsets = [0, 64], sizes = [16, 32], strides = [1, 1]} : vector<16x96xf32> to vector<16x32xf32>
    %c0_124 = arith.constant 0 : index
    %c0_125 = arith.constant 0 : index
    %496 = vector.load %arg6[%c0_124, %c0_125] : memref<32x32xf32, #tpu.memory_space<vmem>>, vector<32x32xf32>
    %cst_126 = arith.constant dense<0.000000e+00> : vector<16x32xf32>
    %497 = tpu.matmul %493, %496, %cst_126 {dimension_numbers = #tpu.dot_dimension_numbers<[1], [0], [0], [1], [0, 0, 1, 1], [], []>} : vector<16x32xf32>, vector<32x32xf32>, vector<16x32xf32> -> vector<16x32xf32>
    %c0_127 = arith.constant 0 : index
    %c0_128 = arith.constant 0 : index
    %498 = vector.load %arg10[%c0_127, %c0_128] : memref<1x32xf32, #tpu.memory_space<vmem>>, vector<1x32xf32>
    %499 = vector.broadcast %498 : vector<1x32xf32> to vector<16x32xf32>
    %500 = arith.addf %497, %499 : vector<16x32xf32>
    %cst_129 = arith.constant 0.353553385 : f32
    %501 = vector.broadcast %cst_129 : f32 to vector<16x32xf32>
    %502 = arith.mulf %500, %501 : vector<16x32xf32>
    %c0_130 = arith.constant 0 : index
    %c0_131 = arith.constant 0 : index
    %503 = vector.load %arg7[%c0_130, %c0_131] : memref<32x32xf32, #tpu.memory_space<vmem>>, vector<32x32xf32>
    %cst_132 = arith.constant dense<0.000000e+00> : vector<16x32xf32>
    %504 = tpu.matmul %494, %503, %cst_132 {dimension_numbers = #tpu.dot_dimension_numbers<[1], [0], [0], [1], [0, 0, 1, 1], [], []>} : vector<16x32xf32>, vector<32x32xf32>, vector<16x32xf32> -> vector<16x32xf32>
    %c0_133 = arith.constant 0 : index
    %c0_134 = arith.constant 0 : index
    %505 = vector.load %arg11[%c0_133, %c0_134] : memref<1x32xf32, #tpu.memory_space<vmem>>, vector<1x32xf32>
    %506 = vector.broadcast %505 : vector<1x32xf32> to vector<16x32xf32>
    %507 = arith.addf %504, %506 : vector<16x32xf32>
    %c0_135 = arith.constant 0 : index
    %c0_136 = arith.constant 0 : index
    %508 = vector.load %arg8[%c0_135, %c0_136] : memref<32x32xf32, #tpu.memory_space<vmem>>, vector<32x32xf32>
    %cst_137 = arith.constant dense<0.000000e+00> : vector<16x32xf32>
    %509 = tpu.matmul %495, %508, %cst_137 {dimension_numbers = #tpu.dot_dimension_numbers<[1], [0], [0], [1], [0, 0, 1, 1], [], []>} : vector<16x32xf32>, vector<32x32xf32>, vector<16x32xf32> -> vector<16x32xf32>
    %c0_138 = arith.constant 0 : index
    %c0_139 = arith.constant 0 : index
    %510 = vector.load %arg12[%c0_138, %c0_139] : memref<1x32xf32, #tpu.memory_space<vmem>>, vector<1x32xf32>
    %511 = vector.broadcast %510 : vector<1x32xf32> to vector<16x32xf32>
    %512 = arith.addf %509, %511 : vector<16x32xf32>
    %513 = vector.extract_strided_slice %502 {offsets = [0, 0], sizes = [16, 8], strides = [1, 1]} : vector<16x32xf32> to vector<16x8xf32>
    %514 = vector.extract_strided_slice %502 {offsets = [0, 8], sizes = [16, 8], strides = [1, 1]} : vector<16x32xf32> to vector<16x8xf32>
    %515 = vector.extract_strided_slice %502 {offsets = [0, 16], sizes = [16, 8], strides = [1, 1]} : vector<16x32xf32> to vector<16x8xf32>
    %516 = vector.extract_strided_slice %502 {offsets = [0, 24], sizes = [16, 8], strides = [1, 1]} : vector<16x32xf32> to vector<16x8xf32>
    %517 = tpu.concatenate %513, %514, %515, %516 in 0 : vector<16x8xf32>, vector<16x8xf32>, vector<16x8xf32>, vector<16x8xf32> -> vector<64x8xf32>
    %518 = vector.extract_strided_slice %507 {offsets = [0, 0], sizes = [16, 8], strides = [1, 1]} : vector<16x32xf32> to vector<16x8xf32>
    %519 = vector.extract_strided_slice %507 {offsets = [0, 8], sizes = [16, 8], strides = [1, 1]} : vector<16x32xf32> to vector<16x8xf32>
    %520 = vector.extract_strided_slice %507 {offsets = [0, 16], sizes = [16, 8], strides = [1, 1]} : vector<16x32xf32> to vector<16x8xf32>
    %521 = vector.extract_strided_slice %507 {offsets = [0, 24], sizes = [16, 8], strides = [1, 1]} : vector<16x32xf32> to vector<16x8xf32>
    %522 = tpu.concatenate %518, %519, %520, %521 in 0 : vector<16x8xf32>, vector<16x8xf32>, vector<16x8xf32>, vector<16x8xf32> -> vector<64x8xf32>
    %523 = vector.extract_strided_slice %512 {offsets = [0, 0], sizes = [16, 8], strides = [1, 1]} : vector<16x32xf32> to vector<16x8xf32>
    %524 = vector.extract_strided_slice %512 {offsets = [0, 8], sizes = [16, 8], strides = [1, 1]} : vector<16x32xf32> to vector<16x8xf32>
    %525 = vector.extract_strided_slice %512 {offsets = [0, 16], sizes = [16, 8], strides = [1, 1]} : vector<16x32xf32> to vector<16x8xf32>
    %526 = vector.extract_strided_slice %512 {offsets = [0, 24], sizes = [16, 8], strides = [1, 1]} : vector<16x32xf32> to vector<16x8xf32>
    %527 = tpu.concatenate %523, %524, %525, %526 in 0 : vector<16x8xf32>, vector<16x8xf32>, vector<16x8xf32>, vector<16x8xf32> -> vector<64x8xf32>
    %cst_140 = arith.constant dense<0.000000e+00> : vector<64x64xf32>
    %528 = tpu.matmul %517, %522, %cst_140 {dimension_numbers = #tpu.dot_dimension_numbers<[1], [1], [0], [0], [0, 0, 1, 0], [], []>} : vector<64x8xf32>, vector<64x8xf32>, vector<64x64xf32> -> vector<64x64xf32>
    %c0_141 = arith.constant 0 : index
    %c0_142 = arith.constant 0 : index
    %529 = vector.load %arg14[%c0_141, %c0_142] : memref<64x64xf32, #tpu.memory_space<vmem>>, vector<64x64xf32>
    %530 = arith.addf %528, %529 : vector<64x64xf32>
    %cst_143 = arith.constant dense<0xFF800000> : vector<64xf32>
    %531 = vector.multi_reduction <maximumf>, %530, %cst_143 [1] : vector<64x64xf32> to vector<64xf32>
    %532 = vector.shape_cast %531 : vector<64xf32> to vector<64x1xf32>
    %533 = vector.broadcast %532 : vector<64x1xf32> to vector<64x64xf32>
    %534 = arith.subf %530, %533 : vector<64x64xf32>
    %535 = math.exp %534 : vector<64x64xf32>
    %cst_144 = arith.constant dense<0.000000e+00> : vector<64xf32>
    %536 = vector.multi_reduction <add>, %535, %cst_144 [1] : vector<64x64xf32> to vector<64xf32>
    %537 = vector.shape_cast %536 : vector<64xf32> to vector<64x1xf32>
    %538 = vector.broadcast %537 : vector<64x1xf32> to vector<64x64xf32>
    %539 = arith.divf %535, %538 : vector<64x64xf32>
    %cst_145 = arith.constant dense<0.000000e+00> : vector<64x8xf32>
    %540 = tpu.matmul %539, %527, %cst_145 {dimension_numbers = #tpu.dot_dimension_numbers<[1], [0], [0], [1], [0, 0, 1, 1], [], []>} : vector<64x64xf32>, vector<64x8xf32>, vector<64x8xf32> -> vector<64x8xf32>
    %541 = vector.extract_strided_slice %540 {offsets = [0, 0], sizes = [16, 8], strides = [1, 1]} : vector<64x8xf32> to vector<16x8xf32>
    %542 = vector.extract_strided_slice %540 {offsets = [16, 0], sizes = [16, 8], strides = [1, 1]} : vector<64x8xf32> to vector<16x8xf32>
    %543 = vector.extract_strided_slice %540 {offsets = [32, 0], sizes = [16, 8], strides = [1, 1]} : vector<64x8xf32> to vector<16x8xf32>
    %544 = vector.extract_strided_slice %540 {offsets = [48, 0], sizes = [16, 8], strides = [1, 1]} : vector<64x8xf32> to vector<16x8xf32>
    %545 = tpu.concatenate %541, %542, %543, %544 in 1 : vector<16x8xf32>, vector<16x8xf32>, vector<16x8xf32>, vector<16x8xf32> -> vector<16x32xf32>
    %c0_146 = arith.constant 0 : index
    %c0_147 = arith.constant 0 : index
    %546 = vector.load %arg9[%c0_146, %c0_147] : memref<32x32xf32, #tpu.memory_space<vmem>>, vector<32x32xf32>
    %cst_148 = arith.constant dense<0.000000e+00> : vector<16x32xf32>
    %547 = tpu.matmul %545, %546, %cst_148 {dimension_numbers = #tpu.dot_dimension_numbers<[1], [0], [0], [1], [0, 0, 1, 1], [], []>} : vector<16x32xf32>, vector<32x32xf32>, vector<16x32xf32> -> vector<16x32xf32>
    %c0_149 = arith.constant 0 : index
    %c0_150 = arith.constant 0 : index
    %548 = vector.load %arg13[%c0_149, %c0_150] : memref<1x32xf32, #tpu.memory_space<vmem>>, vector<1x32xf32>
    %549 = vector.broadcast %548 : vector<1x32xf32> to vector<16x32xf32>
    %550 = arith.addf %547, %549 : vector<16x32xf32>
    %c0_151 = arith.constant 0 : index
    %c0_152 = arith.constant 0 : index
    %551 = vector.load %arg15[%c0_151, %c0_152] : memref<16x32xf32, #tpu.memory_space<vmem>>, vector<16x32xf32>
    tpu.vector_store %arg15[%c0_151, %c0_152], %550 {strides = array<i32>} : memref<16x32xf32, #tpu.memory_space<vmem>>, vector<16x32xf32>,
    return
  }
}

</mosaic_0001>

<llo_original>
// kernel: tpu_custom_call.1
$region0: #{tpu_custom_call.1}
  #allocation0 [shape = 'u32[]', space=smem, size = 0x4, offset = 0x4, fixed_abs, tag = 'smem constant byte address 0x4 - core index']
  #allocation1 [shape = 'u32[144,128]{1,0:T(1,128)}', space=vmem, size = 0x12000, scoped, tag = 'internal scratch']
  #allocation2 [shape = 'f32[16,96]{1,0:T(8,128)}', space=vmem, size = 0x2000, scoped, tag = 'scratch operand']
  %s0 = inlined_call_operand.hbm [shape: f32[16,96], index: 0, kind: input, shape index: {}]
  %s1 = inlined_call_operand.hbm [shape: f32[2,2,96], index: 1, kind: input, shape index: {}]
  %s2 = inlined_call_operand.hbm [shape: f32[2,2,96], index: 2, kind: input, shape index: {}]
  %s3 = inlined_call_operand.hbm [shape: f32[2,96,384], index: 3, kind: input, shape index: {}]
  %s4 = inlined_call_operand.hbm [shape: f32[2,96,384], index: 4, kind: input, shape index: {}]
  %s5 = inlined_call_operand.hbm [shape: f32[2,1,384], index: 5, kind: input, shape index: {}]
  %s6 = inlined_call_operand.hbm [shape: f32[32,32], index: 6, kind: input, shape index: {}]
  %s7 = inlined_call_operand.hbm [shape: f32[32,32], index: 7, kind: input, shape index: {}]
  %s8 = inlined_call_operand.hbm [shape: f32[32,32], index: 8, kind: input, shape index: {}]
  %s9 = inlined_call_operand.vmem [shape: f32[32,32], index: 9, kind: input, shape index: {}]
  %s10 = inlined_call_operand.vmem [shape: f32[1,32], index: 10, kind: input, shape index: {}]
  %s11 = inlined_call_operand.vmem [shape: f32[1,32], index: 11, kind: input, shape index: {}]
  %s12 = inlined_call_operand.vmem [shape: f32[1,32], index: 12, kind: input, shape index: {}]
  %s13 = inlined_call_operand.vmem [shape: f32[1,32], index: 13, kind: input, shape index: {}]
  %s14 = inlined_call_operand.hbm [shape: f32[64,64], index: 14, kind: input, shape index: {}]
  %s15 = inlined_call_operand.hbm [shape: f32[16,32], index: 15, kind: output, shape index: {}]
  %s16 = sld [smem:[#allocation0]]
  $region110: #{tpu_custom_call.1} parent=0
    _
  %s18 = ssub.s32 1, %s16
  %s19 = scalar_select 0, %s18, %s16
  $region1: #{tpu_custom_call.1} parent=0
    #allocation3 [shape = 'u8[8192]{0}', space=vmem, size = 0x2000, scoped, tag = 'input window, operand 0, single buffered']
    #allocation4 [shape = 's32[1]{0}', space=sflag, size = 0x4, scoped, tag = 'scoped memory for tpu_custom_call.1']
    #allocation5 [shape = 's32[1]{0}', space=sflag, size = 0x4, scoped, tag = 'scoped memory for tpu_custom_call.1']
    #allocation6 [shape = 'u8[2048]{0}', space=vmem, size = 0x800, scoped, tag = 'input window, operand 1, single buffered']
    #allocation7 [shape = 's32[1]{0}', space=sflag, size = 0x4, scoped, tag = 'scoped memory for tpu_custom_call.1']
    #allocation8 [shape = 'u8[2048]{0}', space=vmem, size = 0x800, scoped, tag = 'input window, operand 2, single buffered']
    #allocation9 [shape = 'u8[294912]{0}', space=vmem, size = 0x48000, scoped, tag = 'input window, operand 3, single buffered']
    #allocation10 [shape = 's32[1]{0}', space=sflag, size = 0x4, scoped, tag = 'scoped memory for tpu_custom_call.1']
    #allocation11 [shape = 'u8[294912]{0}', space=vmem, size = 0x48000, scoped, tag = 'input window, operand 4, single buffered']
    #allocation12 [shape = 'u8[3072]{0}', space=vmem, size = 0xc00, scoped, tag = 'input window, operand 5, single buffered']
    #allocation13 [shape = 's32[1]{0}', space=sflag, size = 0x4, scoped, tag = 'scoped memory for tpu_custom_call.1']
    #allocation14 [shape = 'u8[16384]{0}', space=vmem, size = 0x4000, scoped, tag = 'input window, operand 6, single buffered']
    #allocation15 [shape = 'u8[16384]{0}', space=vmem, size = 0x4000, scoped, tag = 'input window, operand 7, single buffered']
    #allocation16 [shape = 's32[1]{0}', space=sflag, size = 0x4, scoped, tag = 'scoped memory for tpu_custom_call.1']
    #allocation17 [shape = 'u8[16384]{0}', space=vmem, size = 0x4000, scoped, tag = 'input window, operand 8, single buffered']
    #allocation18 [shape = 'u8[32768]{0}', space=vmem, size = 0x8000, scoped, tag = 'input window, operand 14, single buffered']
    #allocation19 [shape = 's32[1]{0}', space=sflag, size = 0x4, scoped, tag = 'scoped memory for tpu_custom_call.1']
    #allocation20 [shape = 'u8[8192]{0}', space=vmem, size = 0x2000, scoped, tag = 'output window, operand 0, single buffered']
    %20 = vsyncpa [#allocation4], 0
    %21 = vsyncpa [#allocation7], 0
    %22 = vsyncpa [#allocation10], 0
    %23 = vsyncpa [#allocation13], 0
    %24 = vsyncpa [#allocation16], 0
    %25 = vsyncpa [#allocation19], 0
    %26 = vsyncpa [#allocation5], 0
    // Predicated region
    $region2: #{tpu_custom_call.1} parent=1 // pred_check
      _
    $region3: #{tpu_custom_call.1} parent=1 // pred_check_branch
      %28 = sbr.rel (0) target = $region5
    $region4: #{tpu_custom_call.1} parent=1 // pred_region
      %s30 = ssub.s32 256, 256
      %31 = vsyncadd [#allocation4], %s30
      %s32 = sshll.u32 [#allocation3], 4
      %s33 = int_to_ptr.vmem [resolvable:$true] %s32
      %38 = dma.hbm_to_vmem [thread:$0]  %s0, 256, %s33, [#allocation4], 128, 128, 8
    $region5: #{tpu_custom_call.1} parent=1 // pred_fallthru
      _
    // Predicated region
    $region6: #{tpu_custom_call.1} parent=1 // pred_check
      _
    $region7: #{tpu_custom_call.1} parent=1 // pred_check_branch
      %40 = sbr.rel (0) target = $region9
    $region8: #{tpu_custom_call.1} parent=1 // pred_region
      %s42 = ssub.s32 64, 64
      %43 = vsyncadd [#allocation7], %s42
      %s44 = sshll.u32 [#allocation6], 4
      %s45 = int_to_ptr.vmem [resolvable:$true] %s44
      %50 = dma.hbm_to_vmem [thread:$0]  %s1, 64, %s45, [#allocation7], 32, 32, 2
    $region9: #{tpu_custom_call.1} parent=1 // pred_fallthru
      _
    // Predicated region
    $region10: #{tpu_custom_call.1} parent=1 // pred_check
      _
    $region11: #{tpu_custom_call.1} parent=1 // pred_check_branch
      %52 = sbr.rel (0) target = $region13
    $region12: #{tpu_custom_call.1} parent=1 // pred_region
      %s54 = ssub.s32 64, 64
      %55 = vsyncadd [#allocation7], %s54
      %s56 = sshll.u32 [#allocation8], 4
      %s57 = int_to_ptr.vmem [resolvable:$true] %s56
      %62 = dma.hbm_to_vmem [thread:$0]  %s2, 64, %s57, [#allocation7], 32, 32, 2
    $region13: #{tpu_custom_call.1} parent=1 // pred_fallthru
      _
    // Predicated region
    $region14: #{tpu_custom_call.1} parent=1 // pred_check
      _
    $region15: #{tpu_custom_call.1} parent=1 // pred_check_branch
      %64 = sbr.rel (0) target = $region17
    $region16: #{tpu_custom_call.1} parent=1 // pred_region
      %s66 = ssub.s32 9216, 9216
      %67 = vsyncadd [#allocation10], %s66
      %s68 = sshll.u32 [#allocation9], 4
      %s69 = int_to_ptr.vmem [resolvable:$true] %s68
      %74 = dma.hbm_to_vmem [thread:$0]  %s3, 9216, %s69, [#allocation10], 384, 384, 24
    $region17: #{tpu_custom_call.1} parent=1 // pred_fallthru
      _
    // Predicated region
    $region18: #{tpu_custom_call.1} parent=1 // pred_check
      _
    $region19: #{tpu_custom_call.1} parent=1 // pred_check_branch
      %76 = sbr.rel (0) target = $region21
    $region20: #{tpu_custom_call.1} parent=1 // pred_region
      %s78 = ssub.s32 9216, 9216
      %79 = vsyncadd [#allocation10], %s78
      %s80 = sshll.u32 [#allocation11], 4
      %s81 = int_to_ptr.vmem [resolvable:$true] %s80
      %86 = dma.hbm_to_vmem [thread:$0]  %s4, 9216, %s81, [#allocation10], 384, 384, 24
    $region21: #{tpu_custom_call.1} parent=1 // pred_fallthru
      _
    // Predicated region
    $region22: #{tpu_custom_call.1} parent=1 // pred_check
      _
    $region23: #{tpu_custom_call.1} parent=1 // pred_check_branch
      %88 = sbr.rel (0) target = $region25
    $region24: #{tpu_custom_call.1} parent=1 // pred_region
      %s90 = ssub.s32 96, 96
      %91 = vsyncadd [#allocation13], %s90
      %s92 = sshll.u32 [#allocation12], 4
      %s93 = int_to_ptr.vmem [resolvable:$true] %s92
      %98 = dma.hbm_to_vmem [thread:$0]  %s5, 96, %s93, [#allocation13], 48, 48, 3
    $region25: #{tpu_custom_call.1} parent=1 // pred_fallthru
      _
    // Predicated region
    $region26: #{tpu_custom_call.1} parent=1 // pred_check
      _
    $region27: #{tpu_custom_call.1} parent=1 // pred_check_branch
      %100 = sbr.rel (0) target = $region29
    $region28: #{tpu_custom_call.1} parent=1 // pred_region
      %s102 = ssub.s32 512, 512
      %103 = vsyncadd [#allocation13], %s102
      %s104 = sshll.u32 [#allocation14], 4
      %s105 = int_to_ptr.vmem [resolvable:$true] %s104
      %110 = dma.hbm_to_vmem [thread:$0]  %s6, 512, %s105, [#allocation13], 128, 128, 8
    $region29: #{tpu_custom_call.1} parent=1 // pred_fallthru
      _
    // Predicated region
    $region30: #{tpu_custom_call.1} parent=1 // pred_check
      _
    $region31: #{tpu_custom_call.1} parent=1 // pred_check_branch
      %112 = sbr.rel (0) target = $region33
    $region32: #{tpu_custom_call.1} parent=1 // pred_region
      %s114 = ssub.s32 512, 512
      %115 = vsyncadd [#allocation16], %s114
      %s116 = sshll.u32 [#allocation15], 4
      %s117 = int_to_ptr.vmem [resolvable:$true] %s116
      %122 = dma.hbm_to_vmem [thread:$0]  %s7, 512, %s117, [#allocation16], 128, 128, 8
    $region33: #{tpu_custom_call.1} parent=1 // pred_fallthru
      _
    // Predicated region
    $region34: #{tpu_custom_call.1} parent=1 // pred_check
      _
    $region35: #{tpu_custom_call.1} parent=1 // pred_check_branch
      %124 = sbr.rel (0) target = $region37
    $region36: #{tpu_custom_call.1} parent=1 // pred_region
      %s126 = ssub.s32 512, 512
      %127 = vsyncadd [#allocation16], %s126
      %s128 = sshll.u32 [#allocation17], 4
      %s129 = int_to_ptr.vmem [resolvable:$true] %s128
      %134 = dma.hbm_to_vmem [thread:$0]  %s8, 512, %s129, [#allocation16], 128, 128, 8
    $region37: #{tpu_custom_call.1} parent=1 // pred_fallthru
      _
    // Predicated region
    $region38: #{tpu_custom_call.1} parent=1 // pred_check
      _
    $region39: #{tpu_custom_call.1} parent=1 // pred_check_branch
      %136 = sbr.rel (0) target = $region41
    $region40: #{tpu_custom_call.1} parent=1 // pred_region
      _
    $region41: #{tpu_custom_call.1} parent=1 // pred_fallthru
      _
    // Predicated region
    $region42: #{tpu_custom_call.1} parent=1 // pred_check
      _
    $region43: #{tpu_custom_call.1} parent=1 // pred_check_branch
      %138 = sbr.rel (0) target = $region45
    $region44: #{tpu_custom_call.1} parent=1 // pred_region
      _
    $region45: #{tpu_custom_call.1} parent=1 // pred_fallthru
      _
    // Predicated region
    $region46: #{tpu_custom_call.1} parent=1 // pred_check
      _
    $region47: #{tpu_custom_call.1} parent=1 // pred_check_branch
      %140 = sbr.rel (0) target = $region49
    $region48: #{tpu_custom_call.1} parent=1 // pred_region
      _
    $region49: #{tpu_custom_call.1} parent=1 // pred_fallthru
      _
    // Predicated region
    $region50: #{tpu_custom_call.1} parent=1 // pred_check
      _
    $region51: #{tpu_custom_call.1} parent=1 // pred_check_branch
      %142 = sbr.rel (0) target = $region53
    $region52: #{tpu_custom_call.1} parent=1 // pred_region
      _
    $region53: #{tpu_custom_call.1} parent=1 // pred_fallthru
      _
    // Predicated region
    $region54: #{tpu_custom_call.1} parent=1 // pred_check
      _
    $region55: #{tpu_custom_call.1} parent=1 // pred_check_branch
      %144 = sbr.rel (0) target = $region57
    $region56: #{tpu_custom_call.1} parent=1 // pred_region
      _
    $region57: #{tpu_custom_call.1} parent=1 // pred_fallthru
      _
    // Predicated region
    $region58: #{tpu_custom_call.1} parent=1 // pred_check
      _
    $region59: #{tpu_custom_call.1} parent=1 // pred_check_branch
      %146 = sbr.rel (0) target = $region61
    $region60: #{tpu_custom_call.1} parent=1 // pred_region
      %s148 = ssub.s32 1024, 1024
      %149 = vsyncadd [#allocation19], %s148
      %s150 = sshll.u32 [#allocation18], 4
      %s151 = int_to_ptr.vmem [resolvable:$true] %s150
      %156 = dma.hbm_to_vmem [thread:$0]  %s14, 1024, %s151, [#allocation19], 128, 128, 8
    $region61: #{tpu_custom_call.1} parent=1 // pred_fallthru
      _
    // Predicated region
    $region62: #{tpu_custom_call.1} parent=1 // pred_check
      _
    $region63: #{tpu_custom_call.1} parent=1 // pred_check_branch
      %158 = sbr.rel (0) target = $region65
    $region64: #{tpu_custom_call.1} parent=1 // pred_region
      %159 = dma.done [#allocation4], 256
    $region65: #{tpu_custom_call.1} parent=1 // pred_fallthru
      _
    // Predicated region
    $region66: #{tpu_custom_call.1} parent=1 // pred_check
      _
    $region67: #{tpu_custom_call.1} parent=1 // pred_check_branch
      %161 = sbr.rel (0) target = $region69
    $region68: #{tpu_custom_call.1} parent=1 // pred_region
      %162 = dma.done [#allocation7], 64
    $region69: #{tpu_custom_call.1} parent=1 // pred_fallthru
      _
    // Predicated region
    $region70: #{tpu_custom_call.1} parent=1 // pred_check
      _
    $region71: #{tpu_custom_call.1} parent=1 // pred_check_branch
      %164 = sbr.rel (0) target = $region73
    $region72: #{tpu_custom_call.1} parent=1 // pred_region
      %165 = dma.done [#allocation7], 64
    $region73: #{tpu_custom_call.1} parent=1 // pred_fallthru
      _
    // Predicated region
    $region74: #{tpu_custom_call.1} parent=1 // pred_check
      _
    $region75: #{tpu_custom_call.1} parent=1 // pred_check_branch
      %167 = sbr.rel (0) target = $region77
    $region76: #{tpu_custom_call.1} parent=1 // pred_region
      %168 = dma.done [#allocation10], 9216
    $region77: #{tpu_custom_call.1} parent=1 // pred_fallthru
      _
    // Predicated region
    $region78: #{tpu_custom_call.1} parent=1 // pred_check
      _
    $region79: #{tpu_custom_call.1} parent=1 // pred_check_branch
      %170 = sbr.rel (0) target = $region81
    $region80: #{tpu_custom_call.1} parent=1 // pred_region
      %171 = dma.done [#allocation10], 9216
    $region81: #{tpu_custom_call.1} parent=1 // pred_fallthru
      _
    // Predicated region
    $region82: #{tpu_custom_call.1} parent=1 // pred_check
      _
    $region83: #{tpu_custom_call.1} parent=1 // pred_check_branch
      %173 = sbr.rel (0) target = $region85
    $region84: #{tpu_custom_call.1} parent=1 // pred_region
      %174 = dma.done [#allocation13], 96
    $region85: #{tpu_custom_call.1} parent=1 // pred_fallthru
      _
    // Predicated region
    $region86: #{tpu_custom_call.1} parent=1 // pred_check
      _
    $region87: #{tpu_custom_call.1} parent=1 // pred_check_branch
      %176 = sbr.rel (0) target = $region89
    $region88: #{tpu_custom_call.1} parent=1 // pred_region
      %177 = dma.done [#allocation13], 512
    $region89: #{tpu_custom_call.1} parent=1 // pred_fallthru
      _
    // Predicated region
    $region90: #{tpu_custom_call.1} parent=1 // pred_check
      _
    $region91: #{tpu_custom_call.1} parent=1 // pred_check_branch
      %179 = sbr.rel (0) target = $region93
    $region92: #{tpu_custom_call.1} parent=1 // pred_region
      %180 = dma.done [#allocation16], 512
    $region93: #{tpu_custom_call.1} parent=1 // pred_fallthru
      _
    // Predicated region
    $region94: #{tpu_custom_call.1} parent=1 // pred_check
      _
    $region95: #{tpu_custom_call.1} parent=1 // pred_check_branch
      %182 = sbr.rel (0) target = $region97
    $region96: #{tpu_custom_call.1} parent=1 // pred_region
      %183 = dma.done [#allocation16], 512
    $region97: #{tpu_custom_call.1} parent=1 // pred_fallthru
      _
    // Predicated region
    $region98: #{tpu_custom_call.1} parent=1 // pred_check
      _
    $region99: #{tpu_custom_call.1} parent=1 // pred_check_branch
      %185 = sbr.rel (0) target = $region101
    $region100: #{tpu_custom_call.1} parent=1 // pred_region
      %186 = dma.done [#allocation19], 1024
    $region101: #{tpu_custom_call.1} parent=1 // pred_fallthru
      _
    %v187 = vld [vmem:[#allocation3] sm:$0xff]
    %v188 = vld [vmem:[#allocation3 + $0x8] sm:$0xff]
    %v189 = vld [vmem:[#allocation9] sm:$0xff]
    %v190 = vld [vmem:[#allocation9 + $0x8] sm:$0xff]
    %v191 = vld [vmem:[#allocation9 + $0x10] sm:$0xff]
    %v192 = vld [vmem:[#allocation9 + $0x18] sm:$0xff]
    %v193 = vld [vmem:[#allocation9 + $0x20] sm:$0xff]
    %v194 = vld [vmem:[#allocation9 + $0x28] sm:$0xff]
    %v195 = vld [vmem:[#allocation9 + $0x30] sm:$0xff]
    %v196 = vld [vmem:[#allocation9 + $0x38] sm:$0xff]
    %v197 = vld [vmem:[#allocation9 + $0x40] sm:$0xff]
    %v198 = vld [vmem:[#allocation9 + $0x48] sm:$0xff]
    %v199 = vld [vmem:[#allocation9 + $0x50] sm:$0xff]
    %v200 = vld [vmem:[#allocation9 + $0x58] sm:$0xff]
    %v201 = vld [vmem:[#allocation9 + $0x60] sm:$0xff]
    %v202 = vld [vmem:[#allocation9 + $0x68] sm:$0xff]
    %v203 = vld [vmem:[#allocation9 + $0x70] sm:$0xff]
    %v204 = vld [vmem:[#allocation9 + $0x78] sm:$0xff]
    %v205 = vld [vmem:[#allocation9 + $0x80] sm:$0xff]
    %v206 = vld [vmem:[#allocation9 + $0x88] sm:$0xff]
    %v207 = vld [vmem:[#allocation9 + $0x90] sm:$0xff]
    %v208 = vld [vmem:[#allocation9 + $0x98] sm:$0xff]
    %v209 = vld [vmem:[#allocation9 + $0xa0] sm:$0xff]
    %v210 = vld [vmem:[#allocation9 + $0xa8] sm:$0xff]
    %v211 = vld [vmem:[#allocation9 + $0xb0] sm:$0xff]
    %v212 = vld [vmem:[#allocation9 + $0xb8] sm:$0xff]
    %v213 = vld [vmem:[#allocation9 + $0xc0] sm:$0xff]
    %v214 = vld [vmem:[#allocation9 + $0xc8] sm:$0xff]
    %v215 = vld [vmem:[#allocation9 + $0xd0] sm:$0xff]
    %v216 = vld [vmem:[#allocation9 + $0xd8] sm:$0xff]
    %v217 = vld [vmem:[#allocation9 + $0xe0] sm:$0xff]
    %v218 = vld [vmem:[#allocation9 + $0xe8] sm:$0xff]
    %v219 = vld [vmem:[#allocation9 + $0xf0] sm:$0xff]
    %v220 = vld [vmem:[#allocation9 + $0xf8] sm:$0xff]
    %v221 = vld [vmem:[#allocation9 + $0x100] sm:$0xff]
    %v222 = vld [vmem:[#allocation9 + $0x108] sm:$0xff]
    %v223 = vld [vmem:[#allocation9 + $0x110] sm:$0xff]
    %v224 = vld [vmem:[#allocation9 + $0x118] sm:$0xff]
    %v225 = vld [vmem:[#allocation11] sm:$0xff]
    %v226 = vld [vmem:[#allocation11 + $0x8] sm:$0xff]
    %v227 = vld [vmem:[#allocation11 + $0x10] sm:$0xff]
    %v228 = vld [vmem:[#allocation11 + $0x18] sm:$0xff]
    %v229 = vld [vmem:[#allocation11 + $0x20] sm:$0xff]
    %v230 = vld [vmem:[#allocation11 + $0x28] sm:$0xff]
    %v231 = vld [vmem:[#allocation11 + $0x30] sm:$0xff]
    %v232 = vld [vmem:[#allocation11 + $0x38] sm:$0xff]
    %v233 = vld [vmem:[#allocation11 + $0x40] sm:$0xff]
    %v234 = vld [vmem:[#allocation11 + $0x48] sm:$0xff]
    %v235 = vld [vmem:[#allocation11 + $0x50] sm:$0xff]
    %v236 = vld [vmem:[#allocation11 + $0x58] sm:$0xff]
    %v237 = vld [vmem:[#allocation11 + $0x60] sm:$0xff]
    %v238 = vld [vmem:[#allocation11 + $0x68] sm:$0xff]
    %v239 = vld [vmem:[#allocation11 + $0x70] sm:$0xff]
    %v240 = vld [vmem:[#allocation11 + $0x78] sm:$0xff]
    %v241 = vld [vmem:[#allocation11 + $0x80] sm:$0xff]
    %v242 = vld [vmem:[#allocation11 + $0x88] sm:$0xff]
    %v243 = vld [vmem:[#allocation11 + $0x90] sm:$0xff]
    %v244 = vld [vmem:[#allocation11 + $0x98] sm:$0xff]
    %v245 = vld [vmem:[#allocation11 + $0xa0] sm:$0xff]
    %v246 = vld [vmem:[#allocation11 + $0xa8] sm:$0xff]
    %v247 = vld [vmem:[#allocation11 + $0xb0] sm:$0xff]
    %v248 = vld [vmem:[#allocation11 + $0xb8] sm:$0xff]
    %v249 = vld [vmem:[#allocation11 + $0xc0] sm:$0xff]
    %v250 = vld [vmem:[#allocation11 + $0xc8] sm:$0xff]
    %v251 = vld [vmem:[#allocation11 + $0xd0] sm:$0xff]
    %v252 = vld [vmem:[#allocation11 + $0xd8] sm:$0xff]
    %v253 = vld [vmem:[#allocation11 + $0xe0] sm:$0xff]
    %v254 = vld [vmem:[#allocation11 + $0xe8] sm:$0xff]
    %v255 = vld [vmem:[#allocation11 + $0xf0] sm:$0xff]
    %v256 = vld [vmem:[#allocation11 + $0xf8] sm:$0xff]
    %v257 = vld [vmem:[#allocation11 + $0x100] sm:$0xff]
    %v258 = vld [vmem:[#allocation11 + $0x108] sm:$0xff]
    %v259 = vld [vmem:[#allocation11 + $0x110] sm:$0xff]
    %v260 = vld [vmem:[#allocation11 + $0x118] sm:$0xff]
    %v261 = vld [vmem:[#allocation12] sm:$0x7]
    %v263 = vlaneseq
    %v264 = vshrl.u32 %v263, 7
    %v265 = vsub.s32 0, %v264
    %v266 = vrot.slane %v261, %v265
    %v267 = vlaneseq
    %v268 = vshrl.u32 %v267, 7
    %v269 = vsub.s32 1, %v268
    %v270 = vrot.slane %v261, %v269
    %v271 = vlaneseq
    %v272 = vshrl.u32 %v271, 7
    %v273 = vsub.s32 2, %v272
    %v274 = vrot.slane %v261, %v273
    %vm278 = vcmask 785408
    %v280 = vsel %vm278, %v187, 0
    %v283 = vsel %vm278, %v188, 0
    %285 = vmatprep.subr.mxu0 %v190
    %286 = vmatpush1.msra.mxu0 %v189
    %287 = vmatprep.subr.mxu0 %v193
    %288 = vmatpush1.msra.mxu0 %v192
    %289 = vmatprep.subr.mxu0 %v196
    %290 = vmatpush1.msra.mxu0 %v195
    %291 = vmatprep.subr.mxu0 %v199
    %292 = vmatpush1.msra.mxu0 %v198
    %293 = vmatprep.subr.mxu0 %v202
    %294 = vmatpush1.msra.mxu0 %v201
    %295 = vmatprep.subr.mxu0 %v205
    %296 = vmatpush1.msra.mxu0 %v204
    %297 = vmatprep.subr.mxu0 %v208
    %298 = vmatpush1.msra.mxu0 %v207
    %299 = vmatprep.subr.mxu0 %v211
    %300 = vmatpush1.msra.mxu0 %v210
    %301 = vmatprep.subr.mxu0 %v214
    %302 = vmatpush1.msra.mxu0 %v213
    %303 = vmatprep.subr.mxu0 %v217
    %304 = vmatpush1.msra.mxu0 %v216
    %305 = vmatprep.subr.mxu0 %v220
    %306 = vmatpush1.msra.mxu0 %v219
    %307 = vmatprep.subr.mxu0 %v223
    %308 = vmatpush1.msra.mxu0 %v222
    %309 = vmatprep.subr.mxu0 0.0
    %310 = vmatpush1.msra.mxu0 0.0
    %311 = vmatprep.subr.mxu0 0.0
    %312 = vmatpush1.msra.mxu0 0.0
    %313 = vmatprep.subr.mxu0 0.0
    %314 = vmatpush1.msra.mxu0 0.0
    %315 = vmatprep.subr.mxu0 0.0
    %316 = vmatpush1.msra.mxu0 0.0
    %317 = vmatprep.subr.mxu0 0.0
    %318 = vmatpush1.msra.mxu0 0.0
    %319 = vmatprep.subr.mxu0 0.0
    %320 = vmatpush1.msra.mxu0 0.0
    %321 = vmatprep.subr.mxu0 0.0
    %322 = vmatpush1.msra.mxu0 0.0
    %323 = vmatprep.subr.mxu0 0.0
    %324 = vmatpush1.msra.mxu0 0.0
    %325 = vmatprep.subr.mxu0 0.0
    %326 = vmatpush1.msra.mxu0 0.0
    %327 = vmatprep.subr.mxu0 0.0
    %328 = vmatpush1.msra.mxu0 0.0
    %329 = vmatprep.subr.mxu0 0.0
    %330 = vmatpush1.msra.mxu0 0.0
    %331 = vmatprep.subr.mxu0 0.0
    %332 = vmatpush1.msra.mxu0 0.0
    %333 = vmatprep.subr.mxu0 0.0
    %334 = vmatpush1.msra.mxu0 0.0
    %335 = vmatprep.subr.mxu0 0.0
    %336 = vmatpush1.msra.mxu0 0.0
    %337 = vmatprep.subr.mxu0 0.0
    %338 = vmatpush1.msra.mxu0 0.0
    %339 = vmatprep.subr.mxu0 0.0
    %340 = vmatpush1.msra.mxu0 0.0
    %341 = vmatprep.subr.mxu0 0.0
    %342 = vmatpush1.msra.mxu0 0.0
    %343 = vmatprep.subr.mxu0 0.0
    %344 = vmatpush1.msra.mxu0 0.0
    %345 = vmatprep.subr.mxu0 0.0
    %346 = vmatpush1.msra.mxu0 0.0
    %347 = vmatprep.subr.mxu0 0.0
    %348 = vmatpush1.msra.mxu0 0.0
    %349 = vmatprep.mubr.f32.mxu0 0.0
    %350 = vmatmul.mubr.f32.gmra.mrb[0].mxu0 %v280
    %v351 = vpop.f32.mrb[0].mxu0
    %v352 = vadd.f32 %v266, %v351
    %v353 = vpop.f32.mrb[0].mxu0
    %v354 = vadd.f32 %v270, %v353
    %355 = vmatprep.mubr.f32.mxu0 0.0
    %356 = vmatmul.mubr.f32.gmra.mrb[0].mxu0 %v283
    %v357 = vpop.f32.mrb[0].mxu0
    %v358 = vadd.f32 %v266, %v357
    %v359 = vpop.f32.mrb[0].mxu0
    %v360 = vadd.f32 %v270, %v359
    %361 = vdwg.mxu0
    %362 = vmatprep.subr.mxu0 0.0
    %363 = vmatpush1.msra.mxu0 %v191
    %364 = vmatprep.subr.mxu0 0.0
    %365 = vmatpush1.msra.mxu0 %v194
    %366 = vmatprep.subr.mxu0 0.0
    %367 = vmatpush1.msra.mxu0 %v197
    %368 = vmatprep.subr.mxu0 0.0
    %369 = vmatpush1.msra.mxu0 %v200
    %370 = vmatprep.subr.mxu0 0.0
    %371 = vmatpush1.msra.mxu0 %v203
    %372 = vmatprep.subr.mxu0 0.0
    %373 = vmatpush1.msra.mxu0 %v206
    %374 = vmatprep.subr.mxu0 0.0
    %375 = vmatpush1.msra.mxu0 %v209
    %376 = vmatprep.subr.mxu0 0.0
    %377 = vmatpush1.msra.mxu0 %v212
    %378 = vmatprep.subr.mxu0 0.0
    %379 = vmatpush1.msra.mxu0 %v215
    %380 = vmatprep.subr.mxu0 0.0
    %381 = vmatpush1.msra.mxu0 %v218
    %382 = vmatprep.subr.mxu0 0.0
    %383 = vmatpush1.msra.mxu0 %v221
    %384 = vmatprep.subr.mxu0 0.0
    %385 = vmatpush1.msra.mxu0 %v224
    %386 = vmatprep.subr.mxu0 0.0
    %387 = vmatpush1.msra.mxu0 0.0
    %388 = vmatprep.subr.mxu0 0.0
    %389 = vmatpush1.msra.mxu0 0.0
    %390 = vmatprep.subr.mxu0 0.0
    %391 = vmatpush1.msra.mxu0 0.0
    %392 = vmatprep.subr.mxu0 0.0
    %393 = vmatpush1.msra.mxu0 0.0
    %394 = vmatprep.subr.mxu0 0.0
    %395 = vmatpush1.msra.mxu0 0.0
    %396 = vmatprep.subr.mxu0 0.0
    %397 = vmatpush1.msra.mxu0 0.0
    %398 = vmatprep.subr.mxu0 0.0
    %399 = vmatpush1.msra.mxu0 0.0
    %400 = vmatprep.subr.mxu0 0.0
    %401 = vmatpush1.msra.mxu0 0.0
    %402 = vmatprep.subr.mxu0 0.0
    %403 = vmatpush1.msra.mxu0 0.0
    %404 = vmatprep.subr.mxu0 0.0
    %405 = vmatpush1.msra.mxu0 0.0
    %406 = vmatprep.subr.mxu0 0.0
    %407 = vmatpush1.msra.mxu0 0.0
    %408 = vmatprep.subr.mxu0 0.0
    %409 = vmatpush1.msra.mxu0 0.0
    %410 = vmatprep.subr.mxu0 0.0
    %411 = vmatpush1.msra.mxu0 0.0
    %412 = vmatprep.subr.mxu0 0.0
    %413 = vmatpush1.msra.mxu0 0.0
    %414 = vmatprep.subr.mxu0 0.0
    %415 = vmatpush1.msra.mxu0 0.0
    %416 = vmatprep.subr.mxu0 0.0
    %417 = vmatpush1.msra.mxu0 0.0
    %418 = vmatprep.subr.mxu0 0.0
    %419 = vmatpush1.msra.mxu0 0.0
    %420 = vmatprep.subr.mxu0 0.0
    %421 = vmatpush1.msra.mxu0 0.0
    %422 = vmatprep.subr.mxu0 0.0
    %423 = vmatpush1.msra.mxu0 0.0
    %424 = vmatprep.subr.mxu0 0.0
    %425 = vmatpush1.msra.mxu0 0.0
    %426 = vmatprep.mubr.f32.mxu0 0.0
    %427 = vmatmul.mubr.f32.gmra.mrb[0].mxu0 %v280
    %v428 = vpop.f32.mrb[0].mxu0
    %v429 = vadd.f32 %v274, %v428
    %v430 = vpop.f32.mrb[0].mxu0
    %431 = vmatprep.mubr.f32.mxu0 0.0
    %432 = vmatmul.mubr.f32.gmra.mrb[0].mxu0 %v283
    %v433 = vpop.f32.mrb[0].mxu0
    %v434 = vadd.f32 %v274, %v433
    %v435 = vpop.f32.mrb[0].mxu0
    %436 = vdwg.mxu0
    %v437 = vld [vmem:[#allocation6] sm:$0x3]
    %v438 = vld [vmem:[#allocation8] sm:$0x3]
    %v440 = vsel %vm278, %v437, 0
    %442 = vmatprep.subr.mxu0 %v226
    %443 = vmatpush1.msra.mxu0 %v225
    %444 = vmatprep.subr.mxu0 %v229
    %445 = vmatpush1.msra.mxu0 %v228
    %446 = vmatprep.subr.mxu0 %v232
    %447 = vmatpush1.msra.mxu0 %v231
    %448 = vmatprep.subr.mxu0 %v235
    %449 = vmatpush1.msra.mxu0 %v234
    %450 = vmatprep.subr.mxu0 %v238
    %451 = vmatpush1.msra.mxu0 %v237
    %452 = vmatprep.subr.mxu0 %v241
    %453 = vmatpush1.msra.mxu0 %v240
    %454 = vmatprep.subr.mxu0 %v244
    %455 = vmatpush1.msra.mxu0 %v243
    %456 = vmatprep.subr.mxu0 %v247
    %457 = vmatpush1.msra.mxu0 %v246
    %458 = vmatprep.subr.mxu0 %v250
    %459 = vmatpush1.msra.mxu0 %v249
    %460 = vmatprep.subr.mxu0 %v253
    %461 = vmatpush1.msra.mxu0 %v252
    %462 = vmatprep.subr.mxu0 %v256
    %463 = vmatpush1.msra.mxu0 %v255
    %464 = vmatprep.subr.mxu0 %v259
    %465 = vmatpush1.msra.mxu0 %v258
    %466 = vmatprep.subr.mxu0 0.0
    %467 = vmatpush1.msra.mxu0 0.0
    %468 = vmatprep.subr.mxu0 0.0
    %469 = vmatpush1.msra.mxu0 0.0
    %470 = vmatprep.subr.mxu0 0.0
    %471 = vmatpush1.msra.mxu0 0.0
    %472 = vmatprep.subr.mxu0 0.0
    %473 = vmatpush1.msra.mxu0 0.0
    %474 = vmatprep.subr.mxu0 0.0
    %475 = vmatpush1.msra.mxu0 0.0
    %476 = vmatprep.subr.mxu0 0.0
    %477 = vmatpush1.msra.mxu0 0.0
    %478 = vmatprep.subr.mxu0 0.0
    %479 = vmatpush1.msra.mxu0 0.0
    %480 = vmatprep.subr.mxu0 0.0
    %481 = vmatpush1.msra.mxu0 0.0
    %482 = vmatprep.subr.mxu0 0.0
    %483 = vmatpush1.msra.mxu0 0.0
    %484 = vmatprep.subr.mxu0 0.0
    %485 = vmatpush1.msra.mxu0 0.0
    %486 = vmatprep.subr.mxu0 0.0
    %487 = vmatpush1.msra.mxu0 0.0
    %488 = vmatprep.subr.mxu0 0.0
    %489 = vmatpush1.msra.mxu0 0.0
    %490 = vmatprep.subr.mxu0 0.0
    %491 = vmatpush1.msra.mxu0 0.0
    %492 = vmatprep.subr.mxu0 0.0
    %493 = vmatpush1.msra.mxu0 0.0
    %494 = vmatprep.subr.mxu0 0.0
    %495 = vmatpush1.msra.mxu0 0.0
    %496 = vmatprep.subr.mxu0 0.0
    %497 = vmatpush1.msra.mxu0 0.0
    %498 = vmatprep.subr.mxu0 0.0
    %499 = vmatpush1.msra.mxu0 0.0
    %500 = vmatprep.subr.mxu0 0.0
    %501 = vmatpush1.msra.mxu0 0.0
    %502 = vmatprep.subr.mxu0 0.0
    %503 = vmatpush1.msra.mxu0 0.0
    %504 = vmatprep.subr.mxu0 0.0
    %505 = vmatpush1.msra.mxu0 0.0
    %506 = vmatprep.mubr.f32.mxu0 0.0
    %507 = vmatmul.mubr.f32.gmra.mrb[0].mxu0 %v440
    %v508 = vpop.f32.mrb[0].mxu0
    %v509 = vadd.f32 0.0, %v508
    %v510 = vpop.f32.mrb[0].mxu0
    %v511 = vadd.f32 0.0, %v510
    %512 = vdwg.mxu0
    %513 = vmatprep.subr.mxu0 0.0
    %514 = vmatpush1.msra.mxu0 %v227
    %515 = vmatprep.subr.mxu0 0.0
    %516 = vmatpush1.msra.mxu0 %v230
    %517 = vmatprep.subr.mxu0 0.0
    %518 = vmatpush1.msra.mxu0 %v233
    %519 = vmatprep.subr.mxu0 0.0
    %520 = vmatpush1.msra.mxu0 %v236
    %521 = vmatprep.subr.mxu0 0.0
    %522 = vmatpush1.msra.mxu0 %v239
    %523 = vmatprep.subr.mxu0 0.0
    %524 = vmatpush1.msra.mxu0 %v242
    %525 = vmatprep.subr.mxu0 0.0
    %526 = vmatpush1.msra.mxu0 %v245
    %527 = vmatprep.subr.mxu0 0.0
    %528 = vmatpush1.msra.mxu0 %v248
    %529 = vmatprep.subr.mxu0 0.0
    %530 = vmatpush1.msra.mxu0 %v251
    %531 = vmatprep.subr.mxu0 0.0
    %532 = vmatpush1.msra.mxu0 %v254
    %533 = vmatprep.subr.mxu0 0.0
    %534 = vmatpush1.msra.mxu0 %v257
    %535 = vmatprep.subr.mxu0 0.0
    %536 = vmatpush1.msra.mxu0 %v260
    %537 = vmatprep.subr.mxu0 0.0
    %538 = vmatpush1.msra.mxu0 0.0
    %539 = vmatprep.subr.mxu0 0.0
    %540 = vmatpush1.msra.mxu0 0.0
    %541 = vmatprep.subr.mxu0 0.0
    %542 = vmatpush1.msra.mxu0 0.0
    %543 = vmatprep.subr.mxu0 0.0
    %544 = vmatpush1.msra.mxu0 0.0
    %545 = vmatprep.subr.mxu0 0.0
    %546 = vmatpush1.msra.mxu0 0.0
    %547 = vmatprep.subr.mxu0 0.0
    %548 = vmatpush1.msra.mxu0 0.0
    %549 = vmatprep.subr.mxu0 0.0
    %550 = vmatpush1.msra.mxu0 0.0
    %551 = vmatprep.subr.mxu0 0.0
    %552 = vmatpush1.msra.mxu0 0.0
    %553 = vmatprep.subr.mxu0 0.0
    %554 = vmatpush1.msra.mxu0 0.0
    %555 = vmatprep.subr.mxu0 0.0
    %556 = vmatpush1.msra.mxu0 0.0
    %557 = vmatprep.subr.mxu0 0.0
    %558 = vmatpush1.msra.mxu0 0.0
    %559 = vmatprep.subr.mxu0 0.0
    %560 = vmatpush1.msra.mxu0 0.0
    %561 = vmatprep.subr.mxu0 0.0
    %562 = vmatpush1.msra.mxu0 0.0
    %563 = vmatprep.subr.mxu0 0.0
    %564 = vmatpush1.msra.mxu0 0.0
    %565 = vmatprep.subr.mxu0 0.0
    %566 = vmatpush1.msra.mxu0 0.0
    %567 = vmatprep.subr.mxu0 0.0
    %568 = vmatpush1.msra.mxu0 0.0
    %569 = vmatprep.subr.mxu0 0.0
    %570 = vmatpush1.msra.mxu0 0.0
    %571 = vmatprep.subr.mxu0 0.0
    %572 = vmatpush1.msra.mxu0 0.0
    %573 = vmatprep.subr.mxu0 0.0
    %574 = vmatpush1.msra.mxu0 0.0
    %575 = vmatprep.subr.mxu0 0.0
    %576 = vmatpush1.msra.mxu0 0.0
    %577 = vmatprep.mubr.f32.mxu0 0.0
    %578 = vmatmul.mubr.f32.gmra.mrb[0].mxu0 %v440
    %v579 = vpop.f32.mrb[0].mxu0
    %v580 = vadd.f32 0.0, %v579
    %v581 = vpop.f32.mrb[0].mxu0
    %582 = vdwg.mxu0
    %v583 = vadd.f32 %v352, %v509
    %v584 = vadd.f32 %v354, %v511
    %v585 = vadd.f32 %v429, %v580
    %v586 = vxor.u32 %v583, 2147483648
    %v587 = vmul.f32 %v586, 1.442695
    %v588 = vpow.pop %v587
    %v589 = vadd.f32 %v588, 1.0
    %v590 = vrcp.pop %v589
    %v591 = vmul.f32 1.0, %v590
    %v592 = vxor.u32 %v584, 2147483648
    %v593 = vmul.f32 %v592, 1.442695
    %v594 = vpow.pop %v593
    %v595 = vadd.f32 %v594, 1.0
    %v596 = vrcp.pop %v595
    %v597 = vmul.f32 1.0, %v596
    %v598 = vtanh.pop %v584
    %v599 = vtanh.pop %v585
    %v600 = vxor.u32 %v585, 2147483648
    %v601 = vmul.f32 %v600, 1.442695
    %v602 = vpow.pop %v601
    %v603 = vadd.f32 %v602, 1.0
    %v604 = vrcp.pop %v603
    %v605 = vmul.f32 1.0, %v604
    %607 = vrot.lane.b32.xlu0 %v438, 96
    %v608 = vpop.permute.xlu0 %607
    %v610 = vmul.f32 %v591, %v608
    %v611 = vmul.f32 %v597, %v608
    %614 = vrot.lane.b32.xlu0 %v598, 64
    %v615 = vpop.permute.xlu0 %614
    %616 = vrot.lane.b32.xlu0 %v599, 64
    %v617 = vpop.permute.xlu0 %616
    %vm618 = vcmask 523264
    %v619 = vsel %vm618, %v615, %v617
    %v621 = vmul.f32 %v591, %v619
    %623 = vrot.lane.b32.xlu0 %v621, 96
    %v624 = vpop.permute.xlu0 %623
    %v626 = vadd.f32 %v610, %v624
    %v627 = vadd.f32 %v611, %v624
    %v628 = vtanh.pop %v626
    %v629 = vtanh.pop %v627
    %632 = vrot.lane.b32.xlu0 %v628, 64
    %v633 = vpop.permute.xlu0 %632
    %634 = vrot.lane.b32.xlu0 %v629, 64
    %v635 = vpop.permute.xlu0 %634
    %v636 = vsel %vm618, %v633, %v635
    %v638 = vmul.f32 %v605, %v636
    %640 = vrot.lane.b32.xlu0 %v638, 96
    %v641 = vpop.permute.xlu0 %640
    %vm643 = vcmask 779264
    %644 = vst.msk [vmem:[#allocation2] sm:$0x3] %vm643, %v641
    %v645 = vsel %vm278, %v641, 0
    %647 = vmatprep.subr.mxu0 %v226
    %648 = vmatpush1.msra.mxu0 %v225
    %649 = vmatprep.subr.mxu0 %v229
    %650 = vmatpush1.msra.mxu0 %v228
    %651 = vmatprep.subr.mxu0 %v232
    %652 = vmatpush1.msra.mxu0 %v231
    %653 = vmatprep.subr.mxu0 %v235
    %654 = vmatpush1.msra.mxu0 %v234
    %655 = vmatprep.subr.mxu0 %v238
    %656 = vmatpush1.msra.mxu0 %v237
    %657 = vmatprep.subr.mxu0 %v241
    %658 = vmatpush1.msra.mxu0 %v240
    %659 = vmatprep.subr.mxu0 %v244
    %660 = vmatpush1.msra.mxu0 %v243
    %661 = vmatprep.subr.mxu0 %v247
    %662 = vmatpush1.msra.mxu0 %v246
    %663 = vmatprep.subr.mxu0 %v250
    %664 = vmatpush1.msra.mxu0 %v249
    %665 = vmatprep.subr.mxu0 %v253
    %666 = vmatpush1.msra.mxu0 %v252
    %667 = vmatprep.subr.mxu0 %v256
    %668 = vmatpush1.msra.mxu0 %v255
    %669 = vmatprep.subr.mxu0 %v259
    %670 = vmatpush1.msra.mxu0 %v258
    %671 = vmatprep.subr.mxu0 0.0
    %672 = vmatpush1.msra.mxu0 0.0
    %673 = vmatprep.subr.mxu0 0.0
    %674 = vmatpush1.msra.mxu0 0.0
    %675 = vmatprep.subr.mxu0 0.0
    %676 = vmatpush1.msra.mxu0 0.0
    %677 = vmatprep.subr.mxu0 0.0
    %678 = vmatpush1.msra.mxu0 0.0
    %679 = vmatprep.subr.mxu0 0.0
    %680 = vmatpush1.msra.mxu0 0.0
    %681 = vmatprep.subr.mxu0 0.0
    %682 = vmatpush1.msra.mxu0 0.0
    %683 = vmatprep.subr.mxu0 0.0
    %684 = vmatpush1.msra.mxu0 0.0
    %685 = vmatprep.subr.mxu0 0.0
    %686 = vmatpush1.msra.mxu0 0.0
    %687 = vmatprep.subr.mxu0 0.0
    %688 = vmatpush1.msra.mxu0 0.0
    %689 = vmatprep.subr.mxu0 0.0
    %690 = vmatpush1.msra.mxu0 0.0
    %691 = vmatprep.subr.mxu0 0.0
    %692 = vmatpush1.msra.mxu0 0.0
    %693 = vmatprep.subr.mxu0 0.0
    %694 = vmatpush1.msra.mxu0 0.0
    %695 = vmatprep.subr.mxu0 0.0
    %696 = vmatpush1.msra.mxu0 0.0
    %697 = vmatprep.subr.mxu0 0.0
    %698 = vmatpush1.msra.mxu0 0.0
    %699 = vmatprep.subr.mxu0 0.0
    %700 = vmatpush1.msra.mxu0 0.0
    %701 = vmatprep.subr.mxu0 0.0
    %702 = vmatpush1.msra.mxu0 0.0
    %703 = vmatprep.subr.mxu0 0.0
    %704 = vmatpush1.msra.mxu0 0.0
    %705 = vmatprep.subr.mxu0 0.0
    %706 = vmatpush1.msra.mxu0 0.0
    %707 = vmatprep.subr.mxu0 0.0
    %708 = vmatpush1.msra.mxu0 0.0
    %709 = vmatprep.subr.mxu0 0.0
    %710 = vmatpush1.msra.mxu0 0.0
    %711 = vmatprep.mubr.f32.mxu0 0.0
    %712 = vmatmul.mubr.f32.gmra.mrb[0].mxu0 %v645
    %v713 = vpop.f32.mrb[0].mxu0
    %v714 = vadd.f32 0.0, %v713
    %v715 = vpop.f32.mrb[0].mxu0
    %v716 = vadd.f32 0.0, %v715
    %717 = vdwg.mxu0
    %718 = vmatprep.subr.mxu0 0.0
    %719 = vmatpush1.msra.mxu0 %v227
    %720 = vmatprep.subr.mxu0 0.0
    %721 = vmatpush1.msra.mxu0 %v230
    %722 = vmatprep.subr.mxu0 0.0
    %723 = vmatpush1.msra.mxu0 %v233
    %724 = vmatprep.subr.mxu0 0.0
    %725 = vmatpush1.msra.mxu0 %v236
    %726 = vmatprep.subr.mxu0 0.0
    %727 = vmatpush1.msra.mxu0 %v239
    %728 = vmatprep.subr.mxu0 0.0
    %729 = vmatpush1.msra.mxu0 %v242
    %730 = vmatprep.subr.mxu0 0.0
    %731 = vmatpush1.msra.mxu0 %v245
    %732 = vmatprep.subr.mxu0 0.0
    %733 = vmatpush1.msra.mxu0 %v248
    %734 = vmatprep.subr.mxu0 0.0
    %735 = vmatpush1.msra.mxu0 %v251
    %736 = vmatprep.subr.mxu0 0.0
    %737 = vmatpush1.msra.mxu0 %v254
    %738 = vmatprep.subr.mxu0 0.0
    %739 = vmatpush1.msra.mxu0 %v257
    %740 = vmatprep.subr.mxu0 0.0
    %741 = vmatpush1.msra.mxu0 %v260
    %742 = vmatprep.subr.mxu0 0.0
    %743 = vmatpush1.msra.mxu0 0.0
    %744 = vmatprep.subr.mxu0 0.0
    %745 = vmatpush1.msra.mxu0 0.0
    %746 = vmatprep.subr.mxu0 0.0
    %747 = vmatpush1.msra.mxu0 0.0
    %748 = vmatprep.subr.mxu0 0.0
    %749 = vmatpush1.msra.mxu0 0.0
    %750 = vmatprep.subr.mxu0 0.0
    %751 = vmatpush1.msra.mxu0 0.0
    %752 = vmatprep.subr.mxu0 0.0
    %753 = vmatpush1.msra.mxu0 0.0
    %754 = vmatprep.subr.mxu0 0.0
    %755 = vmatpush1.msra.mxu0 0.0
    %756 = vmatprep.subr.mxu0 0.0
    %757 = vmatpush1.msra.mxu0 0.0
    %758 = vmatprep.subr.mxu0 0.0
    %759 = vmatpush1.msra.mxu0 0.0
    %760 = vmatprep.subr.mxu0 0.0
    %761 = vmatpush1.msra.mxu0 0.0
    %762 = vmatprep.subr.mxu0 0.0
    %763 = vmatpush1.msra.mxu0 0.0
    %764 = vmatprep.subr.mxu0 0.0
    %765 = vmatpush1.msra.mxu0 0.0
    %766 = vmatprep.subr.mxu0 0.0
    %767 = vmatpush1.msra.mxu0 0.0
    %768 = vmatprep.subr.mxu0 0.0
    %769 = vmatpush1.msra.mxu0 0.0
    %770 = vmatprep.subr.mxu0 0.0
    %771 = vmatpush1.msra.mxu0 0.0
    %772 = vmatprep.subr.mxu0 0.0
    %773 = vmatpush1.msra.mxu0 0.0
    %774 = vmatprep.subr.mxu0 0.0
    %775 = vmatpush1.msra.mxu0 0.0
    %776 = vmatprep.subr.mxu0 0.0
    %777 = vmatpush1.msra.mxu0 0.0
    %778 = vmatprep.subr.mxu0 0.0
    %779 = vmatpush1.msra.mxu0 0.0
    %780 = vmatprep.subr.mxu0 0.0
    %781 = vmatpush1.msra.mxu0 0.0
    %782 = vmatprep.mubr.f32.mxu0 0.0
    %783 = vmatmul.mubr.f32.gmra.mrb[0].mxu0 %v645
    %v784 = vpop.f32.mrb[0].mxu0
    %v785 = vadd.f32 0.0, %v784
    %v786 = vpop.f32.mrb[0].mxu0
    %787 = vdwg.mxu0
    %v791 = vrot.slane %v714, 6
    %v792 = vrot.slane %v716, 6
    %v793 = vrot.slane %v785, 6
    %v797 = vadd.f32 %v352, %v791
    %v798 = vadd.f32 %v354, %v792
    %v799 = vadd.f32 %v429, %v793
    %v800 = vxor.u32 %v797, 2147483648
    %v801 = vmul.f32 %v800, 1.442695
    %v802 = vpow.pop %v801
    %v803 = vadd.f32 %v802, 1.0
    %v804 = vrcp.pop %v803
    %v805 = vmul.f32 1.0, %v804
    %v806 = vxor.u32 %v798, 2147483648
    %v807 = vmul.f32 %v806, 1.442695
    %v808 = vpow.pop %v807
    %v809 = vadd.f32 %v808, 1.0
    %v810 = vrcp.pop %v809
    %v811 = vmul.f32 1.0, %v810
    %v812 = vtanh.pop %v798
    %v813 = vtanh.pop %v799
    %v814 = vxor.u32 %v799, 2147483648
    %v815 = vmul.f32 %v814, 1.442695
    %v816 = vpow.pop %v815
    %v817 = vadd.f32 %v816, 1.0
    %v818 = vrcp.pop %v817
    %v819 = vmul.f32 1.0, %v818
    %v822 = vrot.slane %v626, 6
    %v823 = vrot.slane %v627, 6
    %v826 = vmul.f32 %v805, %v822
    %v827 = vmul.f32 %v811, %v823
    %830 = vrot.lane.b32.xlu0 %v812, 64
    %v831 = vpop.permute.xlu0 %830
    %832 = vrot.lane.b32.xlu0 %v813, 64
    %v833 = vpop.permute.xlu0 %832
    %v834 = vsel %vm618, %v831, %v833
    %v836 = vmul.f32 %v805, %v834
    %838 = vrot.lane.b32.xlu0 %v836, 96
    %v839 = vpop.permute.xlu0 %838
    %v841 = vadd.f32 %v826, %v839
    %v842 = vadd.f32 %v827, %v839
    %v843 = vtanh.pop %v841
    %v844 = vtanh.pop %v842
    %847 = vrot.lane.b32.xlu0 %v843, 64
    %v848 = vpop.permute.xlu0 %847
    %849 = vrot.lane.b32.xlu0 %v844, 64
    %v850 = vpop.permute.xlu0 %849
    %v851 = vsel %vm618, %v848, %v850
    %v853 = vmul.f32 %v819, %v851
    %855 = vrot.lane.b32.xlu0 %v853, 96
    %v856 = vpop.permute.xlu0 %855
    %vm858 = vcmask 781314
    %859 = vst.msk [vmem:[#allocation2] sm:$0xc] %vm858, %v856
    %v860 = vrot.slane %v853, 2
    %861 = vrot.lane.b32.xlu0 %v860, 96
    %v862 = vpop.permute.xlu0 %861
    %v863 = vsel %vm278, %v862, 0
    %865 = vmatprep.subr.mxu0 %v226
    %866 = vmatpush1.msra.mxu0 %v225
    %867 = vmatprep.subr.mxu0 %v229
    %868 = vmatpush1.msra.mxu0 %v228
    %869 = vmatprep.subr.mxu0 %v232
    %870 = vmatpush1.msra.mxu0 %v231
    %871 = vmatprep.subr.mxu0 %v235
    %872 = vmatpush1.msra.mxu0 %v234
    %873 = vmatprep.subr.mxu0 %v238
    %874 = vmatpush1.msra.mxu0 %v237
    %875 = vmatprep.subr.mxu0 %v241
    %876 = vmatpush1.msra.mxu0 %v240
    %877 = vmatprep.subr.mxu0 %v244
    %878 = vmatpush1.msra.mxu0 %v243
    %879 = vmatprep.subr.mxu0 %v247
    %880 = vmatpush1.msra.mxu0 %v246
    %881 = vmatprep.subr.mxu0 %v250
    %882 = vmatpush1.msra.mxu0 %v249
    %883 = vmatprep.subr.mxu0 %v253
    %884 = vmatpush1.msra.mxu0 %v252
    %885 = vmatprep.subr.mxu0 %v256
    %886 = vmatpush1.msra.mxu0 %v255
    %887 = vmatprep.subr.mxu0 %v259
    %888 = vmatpush1.msra.mxu0 %v258
    %889 = vmatprep.subr.mxu0 0.0
    %890 = vmatpush1.msra.mxu0 0.0
    %891 = vmatprep.subr.mxu0 0.0
    %892 = vmatpush1.msra.mxu0 0.0
    %893 = vmatprep.subr.mxu0 0.0
    %894 = vmatpush1.msra.mxu0 0.0
    %895 = vmatprep.subr.mxu0 0.0
    %896 = vmatpush1.msra.mxu0 0.0
    %897 = vmatprep.subr.mxu0 0.0
    %898 = vmatpush1.msra.mxu0 0.0
    %899 = vmatprep.subr.mxu0 0.0
    %900 = vmatpush1.msra.mxu0 0.0
    %901 = vmatprep.subr.mxu0 0.0
    %902 = vmatpush1.msra.mxu0 0.0
    %903 = vmatprep.subr.mxu0 0.0
    %904 = vmatpush1.msra.mxu0 0.0
    %905 = vmatprep.subr.mxu0 0.0
    %906 = vmatpush1.msra.mxu0 0.0
    %907 = vmatprep.subr.mxu0 0.0
    %908 = vmatpush1.msra.mxu0 0.0
    %909 = vmatprep.subr.mxu0 0.0
    %910 = vmatpush1.msra.mxu0 0.0
    %911 = vmatprep.subr.mxu0 0.0
    %912 = vmatpush1.msra.mxu0 0.0
    %913 = vmatprep.subr.mxu0 0.0
    %914 = vmatpush1.msra.mxu0 0.0
    %915 = vmatprep.subr.mxu0 0.0
    %916 = vmatpush1.msra.mxu0 0.0
    %917 = vmatprep.subr.mxu0 0.0
    %918 = vmatpush1.msra.mxu0 0.0
    %919 = vmatprep.subr.mxu0 0.0
    %920 = vmatpush1.msra.mxu0 0.0
    %921 = vmatprep.subr.mxu0 0.0
    %922 = vmatpush1.msra.mxu0 0.0
    %923 = vmatprep.subr.mxu0 0.0
    %924 = vmatpush1.msra.mxu0 0.0
    %925 = vmatprep.subr.mxu0 0.0
    %926 = vmatpush1.msra.mxu0 0.0
    %927 = vmatprep.subr.mxu0 0.0
    %928 = vmatpush1.msra.mxu0 0.0
    %929 = vmatprep.mubr.f32.mxu0 0.0
    %930 = vmatmul.mubr.f32.gmra.mrb[0].mxu0 %v863
    %v931 = vpop.f32.mrb[0].mxu0
    %v932 = vadd.f32 0.0, %v931
    %v933 = vpop.f32.mrb[0].mxu0
    %v934 = vadd.f32 0.0, %v933
    %935 = vdwg.mxu0
    %936 = vmatprep.subr.mxu0 0.0
    %937 = vmatpush1.msra.mxu0 %v227
    %938 = vmatprep.subr.mxu0 0.0
    %939 = vmatpush1.msra.mxu0 %v230
    %940 = vmatprep.subr.mxu0 0.0
    %941 = vmatpush1.msra.mxu0 %v233
    %942 = vmatprep.subr.mxu0 0.0
    %943 = vmatpush1.msra.mxu0 %v236
    %944 = vmatprep.subr.mxu0 0.0
    %945 = vmatpush1.msra.mxu0 %v239
    %946 = vmatprep.subr.mxu0 0.0
    %947 = vmatpush1.msra.mxu0 %v242
    %948 = vmatprep.subr.mxu0 0.0
    %949 = vmatpush1.msra.mxu0 %v245
    %950 = vmatprep.subr.mxu0 0.0
    %951 = vmatpush1.msra.mxu0 %v248
    %952 = vmatprep.subr.mxu0 0.0
    %953 = vmatpush1.msra.mxu0 %v251
    %954 = vmatprep.subr.mxu0 0.0
    %955 = vmatpush1.msra.mxu0 %v254
    %956 = vmatprep.subr.mxu0 0.0
    %957 = vmatpush1.msra.mxu0 %v257
    %958 = vmatprep.subr.mxu0 0.0
    %959 = vmatpush1.msra.mxu0 %v260
    %960 = vmatprep.subr.mxu0 0.0
    %961 = vmatpush1.msra.mxu0 0.0
    %962 = vmatprep.subr.mxu0 0.0
    %963 = vmatpush1.msra.mxu0 0.0
    %964 = vmatprep.subr.mxu0 0.0
    %965 = vmatpush1.msra.mxu0 0.0
    %966 = vmatprep.subr.mxu0 0.0
    %967 = vmatpush1.msra.mxu0 0.0
    %968 = vmatprep.subr.mxu0 0.0
    %969 = vmatpush1.msra.mxu0 0.0
    %970 = vmatprep.subr.mxu0 0.0
    %971 = vmatpush1.msra.mxu0 0.0
    %972 = vmatprep.subr.mxu0 0.0
    %973 = vmatpush1.msra.mxu0 0.0
    %974 = vmatprep.subr.mxu0 0.0
    %975 = vmatpush1.msra.mxu0 0.0
    %976 = vmatprep.subr.mxu0 0.0
    %977 = vmatpush1.msra.mxu0 0.0
    %978 = vmatprep.subr.mxu0 0.0
    %979 = vmatpush1.msra.mxu0 0.0
    %980 = vmatprep.subr.mxu0 0.0
    %981 = vmatpush1.msra.mxu0 0.0
    %982 = vmatprep.subr.mxu0 0.0
    %983 = vmatpush1.msra.mxu0 0.0
    %984 = vmatprep.subr.mxu0 0.0
    %985 = vmatpush1.msra.mxu0 0.0
    %986 = vmatprep.subr.mxu0 0.0
    %987 = vmatpush1.msra.mxu0 0.0
    %988 = vmatprep.subr.mxu0 0.0
    %989 = vmatpush1.msra.mxu0 0.0
    %990 = vmatprep.subr.mxu0 0.0
    %991 = vmatpush1.msra.mxu0 0.0
    %992 = vmatprep.subr.mxu0 0.0
    %993 = vmatpush1.msra.mxu0 0.0
    %994 = vmatprep.subr.mxu0 0.0
    %995 = vmatpush1.msra.mxu0 0.0
    %996 = vmatprep.subr.mxu0 0.0
    %997 = vmatpush1.msra.mxu0 0.0
    %998 = vmatprep.subr.mxu0 0.0
    %999 = vmatpush1.msra.mxu0 0.0
    %1000 = vmatprep.mubr.f32.mxu0 0.0
    %1001 = vmatmul.mubr.f32.gmra.mrb[0].mxu0 %v863
    %v1002 = vpop.f32.mrb[0].mxu0
    %v1003 = vadd.f32 0.0, %v1002
    %v1004 = vpop.f32.mrb[0].mxu0
    %1005 = vdwg.mxu0
    %v1009 = vrot.slane %v932, 4
    %v1010 = vrot.slane %v934, 4
    %v1011 = vrot.slane %v1003, 4
    %v1015 = vadd.f32 %v352, %v1009
    %v1016 = vadd.f32 %v354, %v1010
    %v1017 = vadd.f32 %v429, %v1011
    %v1018 = vxor.u32 %v1015, 2147483648
    %v1019 = vmul.f32 %v1018, 1.442695
    %v1020 = vpow.pop %v1019
    %v1021 = vadd.f32 %v1020, 1.0
    %v1022 = vrcp.pop %v1021
    %v1023 = vmul.f32 1.0, %v1022
    %v1024 = vxor.u32 %v1016, 2147483648
    %v1025 = vmul.f32 %v1024, 1.442695
    %v1026 = vpow.pop %v1025
    %v1027 = vadd.f32 %v1026, 1.0
    %v1028 = vrcp.pop %v1027
    %v1029 = vmul.f32 1.0, %v1028
    %v1030 = vtanh.pop %v1016
    %v1031 = vtanh.pop %v1017
    %v1032 = vxor.u32 %v1017, 2147483648
    %v1033 = vmul.f32 %v1032, 1.442695
    %v1034 = vpow.pop %v1033
    %v1035 = vadd.f32 %v1034, 1.0
    %v1036 = vrcp.pop %v1035
    %v1037 = vmul.f32 1.0, %v1036
    %v1040 = vrot.slane %v841, 6
    %v1041 = vrot.slane %v842, 6
    %v1044 = vmul.f32 %v1023, %v1040
    %v1045 = vmul.f32 %v1029, %v1041
    %1048 = vrot.lane.b32.xlu0 %v1030, 64
    %v1049 = vpop.permute.xlu0 %1048
    %1050 = vrot.lane.b32.xlu0 %v1031, 64
    %v1051 = vpop.permute.xlu0 %1050
    %v1052 = vsel %vm618, %v1049, %v1051
    %v1054 = vmul.f32 %v1023, %v1052
    %1056 = vrot.lane.b32.xlu0 %v1054, 96
    %v1057 = vpop.permute.xlu0 %1056
    %v1059 = vadd.f32 %v1044, %v1057
    %v1060 = vadd.f32 %v1045, %v1057
    %v1061 = vtanh.pop %v1059
    %v1062 = vtanh.pop %v1060
    %1065 = vrot.lane.b32.xlu0 %v1061, 64
    %v1066 = vpop.permute.xlu0 %1065
    %1067 = vrot.lane.b32.xlu0 %v1062, 64
    %v1068 = vpop.permute.xlu0 %1067
    %v1069 = vsel %vm618, %v1066, %v1068
    %v1071 = vmul.f32 %v1037, %v1069
    %1073 = vrot.lane.b32.xlu0 %v1071, 96
    %v1074 = vpop.permute.xlu0 %1073
    %vm1076 = vcmask 783364
    %1077 = vst.msk [vmem:[#allocation2] sm:$0x30] %vm1076, %v1074
    %v1078 = vrot.slane %v1071, 4
    %1079 = vrot.lane.b32.xlu0 %v1078, 96
    %v1080 = vpop.permute.xlu0 %1079
    %v1081 = vsel %vm278, %v1080, 0
    %1083 = vmatprep.subr.mxu0 %v226
    %1084 = vmatpush1.msra.mxu0 %v225
    %1085 = vmatprep.subr.mxu0 %v229
    %1086 = vmatpush1.msra.mxu0 %v228
    %1087 = vmatprep.subr.mxu0 %v232
    %1088 = vmatpush1.msra.mxu0 %v231
    %1089 = vmatprep.subr.mxu0 %v235
    %1090 = vmatpush1.msra.mxu0 %v234
    %1091 = vmatprep.subr.mxu0 %v238
    %1092 = vmatpush1.msra.mxu0 %v237
    %1093 = vmatprep.subr.mxu0 %v241
    %1094 = vmatpush1.msra.mxu0 %v240
    %1095 = vmatprep.subr.mxu0 %v244
    %1096 = vmatpush1.msra.mxu0 %v243
    %1097 = vmatprep.subr.mxu0 %v247
    %1098 = vmatpush1.msra.mxu0 %v246
    %1099 = vmatprep.subr.mxu0 %v250
    %1100 = vmatpush1.msra.mxu0 %v249
    %1101 = vmatprep.subr.mxu0 %v253
    %1102 = vmatpush1.msra.mxu0 %v252
    %1103 = vmatprep.subr.mxu0 %v256
    %1104 = vmatpush1.msra.mxu0 %v255
    %1105 = vmatprep.subr.mxu0 %v259
    %1106 = vmatpush1.msra.mxu0 %v258
    %1107 = vmatprep.subr.mxu0 0.0
    %1108 = vmatpush1.msra.mxu0 0.0
    %1109 = vmatprep.subr.mxu0 0.0
    %1110 = vmatpush1.msra.mxu0 0.0
    %1111 = vmatprep.subr.mxu0 0.0
    %1112 = vmatpush1.msra.mxu0 0.0
    %1113 = vmatprep.subr.mxu0 0.0
    %1114 = vmatpush1.msra.mxu0 0.0
    %1115 = vmatprep.subr.mxu0 0.0
    %1116 = vmatpush1.msra.mxu0 0.0
    %1117 = vmatprep.subr.mxu0 0.0
    %1118 = vmatpush1.msra.mxu0 0.0
    %1119 = vmatprep.subr.mxu0 0.0
    %1120 = vmatpush1.msra.mxu0 0.0
    %1121 = vmatprep.subr.mxu0 0.0
    %1122 = vmatpush1.msra.mxu0 0.0
    %1123 = vmatprep.subr.mxu0 0.0
    %1124 = vmatpush1.msra.mxu0 0.0
    %1125 = vmatprep.subr.mxu0 0.0
    %1126 = vmatpush1.msra.mxu0 0.0
    %1127 = vmatprep.subr.mxu0 0.0
    %1128 = vmatpush1.msra.mxu0 0.0
    %1129 = vmatprep.subr.mxu0 0.0
    %1130 = vmatpush1.msra.mxu0 0.0
    %1131 = vmatprep.subr.mxu0 0.0
    %1132 = vmatpush1.msra.mxu0 0.0
    %1133 = vmatprep.subr.mxu0 0.0
    %1134 = vmatpush1.msra.mxu0 0.0
    %1135 = vmatprep.subr.mxu0 0.0
    %1136 = vmatpush1.msra.mxu0 0.0
    %1137 = vmatprep.subr.mxu0 0.0
    %1138 = vmatpush1.msra.mxu0 0.0
    %1139 = vmatprep.subr.mxu0 0.0
    %1140 = vmatpush1.msra.mxu0 0.0
    %1141 = vmatprep.subr.mxu0 0.0
    %1142 = vmatpush1.msra.mxu0 0.0
    %1143 = vmatprep.subr.mxu0 0.0
    %1144 = vmatpush1.msra.mxu0 0.0
    %1145 = vmatprep.subr.mxu0 0.0
    %1146 = vmatpush1.msra.mxu0 0.0
    %1147 = vmatprep.mubr.f32.mxu0 0.0
    %1148 = vmatmul.mubr.f32.gmra.mrb[0].mxu0 %v1081
    %v1149 = vpop.f32.mrb[0].mxu0
    %v1150 = vadd.f32 0.0, %v1149
    %v1151 = vpop.f32.mrb[0].mxu0
    %v1152 = vadd.f32 0.0, %v1151
    %1153 = vdwg.mxu0
    %1154 = vmatprep.subr.mxu0 0.0
    %1155 = vmatpush1.msra.mxu0 %v227
    %1156 = vmatprep.subr.mxu0 0.0
    %1157 = vmatpush1.msra.mxu0 %v230
    %1158 = vmatprep.subr.mxu0 0.0
    %1159 = vmatpush1.msra.mxu0 %v233
    %1160 = vmatprep.subr.mxu0 0.0
    %1161 = vmatpush1.msra.mxu0 %v236
    %1162 = vmatprep.subr.mxu0 0.0
    %1163 = vmatpush1.msra.mxu0 %v239
    %1164 = vmatprep.subr.mxu0 0.0
    %1165 = vmatpush1.msra.mxu0 %v242
    %1166 = vmatprep.subr.mxu0 0.0
    %1167 = vmatpush1.msra.mxu0 %v245
    %1168 = vmatprep.subr.mxu0 0.0
    %1169 = vmatpush1.msra.mxu0 %v248
    %1170 = vmatprep.subr.mxu0 0.0
    %1171 = vmatpush1.msra.mxu0 %v251
    %1172 = vmatprep.subr.mxu0 0.0
    %1173 = vmatpush1.msra.mxu0 %v254
    %1174 = vmatprep.subr.mxu0 0.0
    %1175 = vmatpush1.msra.mxu0 %v257
    %1176 = vmatprep.subr.mxu0 0.0
    %1177 = vmatpush1.msra.mxu0 %v260
    %1178 = vmatprep.subr.mxu0 0.0
    %1179 = vmatpush1.msra.mxu0 0.0
    %1180 = vmatprep.subr.mxu0 0.0
    %1181 = vmatpush1.msra.mxu0 0.0
    %1182 = vmatprep.subr.mxu0 0.0
    %1183 = vmatpush1.msra.mxu0 0.0
    %1184 = vmatprep.subr.mxu0 0.0
    %1185 = vmatpush1.msra.mxu0 0.0
    %1186 = vmatprep.subr.mxu0 0.0
    %1187 = vmatpush1.msra.mxu0 0.0
    %1188 = vmatprep.subr.mxu0 0.0
    %1189 = vmatpush1.msra.mxu0 0.0
    %1190 = vmatprep.subr.mxu0 0.0
    %1191 = vmatpush1.msra.mxu0 0.0
    %1192 = vmatprep.subr.mxu0 0.0
    %1193 = vmatpush1.msra.mxu0 0.0
    %1194 = vmatprep.subr.mxu0 0.0
    %1195 = vmatpush1.msra.mxu0 0.0
    %1196 = vmatprep.subr.mxu0 0.0
    %1197 = vmatpush1.msra.mxu0 0.0
    %1198 = vmatprep.subr.mxu0 0.0
    %1199 = vmatpush1.msra.mxu0 0.0
    %1200 = vmatprep.subr.mxu0 0.0
    %1201 = vmatpush1.msra.mxu0 0.0
    %1202 = vmatprep.subr.mxu0 0.0
    %1203 = vmatpush1.msra.mxu0 0.0
    %1204 = vmatprep.subr.mxu0 0.0
    %1205 = vmatpush1.msra.mxu0 0.0
    %1206 = vmatprep.subr.mxu0 0.0
    %1207 = vmatpush1.msra.mxu0 0.0
    %1208 = vmatprep.subr.mxu0 0.0
    %1209 = vmatpush1.msra.mxu0 0.0
    %1210 = vmatprep.subr.mxu0 0.0
    %1211 = vmatpush1.msra.mxu0 0.0
    %1212 = vmatprep.subr.mxu0 0.0
    %1213 = vmatpush1.msra.mxu0 0.0
    %1214 = vmatprep.subr.mxu0 0.0
    %1215 = vmatpush1.msra.mxu0 0.0
    %1216 = vmatprep.subr.mxu0 0.0
    %1217 = vmatpush1.msra.mxu0 0.0
    %1218 = vmatprep.mubr.f32.mxu0 0.0
    %1219 = vmatmul.mubr.f32.gmra.mrb[0].mxu0 %v1081
    %v1220 = vpop.f32.mrb[0].mxu0
    %v1221 = vadd.f32 0.0, %v1220
    %v1222 = vpop.f32.mrb[0].mxu0
    %1223 = vdwg.mxu0
    %v1227 = vrot.slane %v1150, 2
    %v1228 = vrot.slane %v1152, 2
    %v1229 = vrot.slane %v1221, 2
    %v1233 = vadd.f32 %v352, %v1227
    %v1234 = vadd.f32 %v354, %v1228
    %v1235 = vadd.f32 %v429, %v1229
    %v1236 = vxor.u32 %v1233, 2147483648
    %v1237 = vmul.f32 %v1236, 1.442695
    %v1238 = vpow.pop %v1237
    %v1239 = vadd.f32 %v1238, 1.0
    %v1240 = vrcp.pop %v1239
    %v1241 = vmul.f32 1.0, %v1240
    %v1242 = vxor.u32 %v1234, 2147483648
    %v1243 = vmul.f32 %v1242, 1.442695
    %v1244 = vpow.pop %v1243
    %v1245 = vadd.f32 %v1244, 1.0
    %v1246 = vrcp.pop %v1245
    %v1247 = vmul.f32 1.0, %v1246
    %v1248 = vtanh.pop %v1234
    %v1249 = vtanh.pop %v1235
    %v1250 = vxor.u32 %v1235, 2147483648
    %v1251 = vmul.f32 %v1250, 1.442695
    %v1252 = vpow.pop %v1251
    %v1253 = vadd.f32 %v1252, 1.0
    %v1254 = vrcp.pop %v1253
    %v1255 = vmul.f32 1.0, %v1254
    %v1258 = vrot.slane %v1059, 6
    %v1259 = vrot.slane %v1060, 6
    %v1262 = vmul.f32 %v1241, %v1258
    %v1263 = vmul.f32 %v1247, %v1259
    %1266 = vrot.lane.b32.xlu0 %v1248, 64
    %v1267 = vpop.permute.xlu0 %1266
    %1268 = vrot.lane.b32.xlu0 %v1249, 64
    %v1269 = vpop.permute.xlu0 %1268
    %v1270 = vsel %vm618, %v1267, %v1269
    %v1272 = vmul.f32 %v1241, %v1270
    %1274 = vrot.lane.b32.xlu0 %v1272, 96
    %v1275 = vpop.permute.xlu0 %1274
    %v1277 = vadd.f32 %v1262, %v1275
    %v1278 = vadd.f32 %v1263, %v1275
    %v1279 = vtanh.pop %v1277
    %v1280 = vtanh.pop %v1278
    %1283 = vrot.lane.b32.xlu0 %v1279, 64
    %v1284 = vpop.permute.xlu0 %1283
    %1285 = vrot.lane.b32.xlu0 %v1280, 64
    %v1286 = vpop.permute.xlu0 %1285
    %v1287 = vsel %vm618, %v1284, %v1286
    %v1289 = vmul.f32 %v1255, %v1287
    %1291 = vrot.lane.b32.xlu0 %v1289, 96
    %v1292 = vpop.permute.xlu0 %1291
    %vm1294 = vcmask 785414
    %1295 = vst.msk [vmem:[#allocation2] sm:$0xc0] %vm1294, %v1292
    %v1296 = vrot.slane %v1289, 6
    %1297 = vrot.lane.b32.xlu0 %v1296, 96
    %v1298 = vpop.permute.xlu0 %1297
    %v1299 = vsel %vm278, %v1298, 0
    %1301 = vmatprep.subr.mxu0 %v226
    %1302 = vmatpush1.msra.mxu0 %v225
    %1303 = vmatprep.subr.mxu0 %v229
    %1304 = vmatpush1.msra.mxu0 %v228
    %1305 = vmatprep.subr.mxu0 %v232
    %1306 = vmatpush1.msra.mxu0 %v231
    %1307 = vmatprep.subr.mxu0 %v235
    %1308 = vmatpush1.msra.mxu0 %v234
    %1309 = vmatprep.subr.mxu0 %v238
    %1310 = vmatpush1.msra.mxu0 %v237
    %1311 = vmatprep.subr.mxu0 %v241
    %1312 = vmatpush1.msra.mxu0 %v240
    %1313 = vmatprep.subr.mxu0 %v244
    %1314 = vmatpush1.msra.mxu0 %v243
    %1315 = vmatprep.subr.mxu0 %v247
    %1316 = vmatpush1.msra.mxu0 %v246
    %1317 = vmatprep.subr.mxu0 %v250
    %1318 = vmatpush1.msra.mxu0 %v249
    %1319 = vmatprep.subr.mxu0 %v253
    %1320 = vmatpush1.msra.mxu0 %v252
    %1321 = vmatprep.subr.mxu0 %v256
    %1322 = vmatpush1.msra.mxu0 %v255
    %1323 = vmatprep.subr.mxu0 %v259
    %1324 = vmatpush1.msra.mxu0 %v258
    %1325 = vmatprep.subr.mxu0 0.0
    %1326 = vmatpush1.msra.mxu0 0.0
    %1327 = vmatprep.subr.mxu0 0.0
    %1328 = vmatpush1.msra.mxu0 0.0
    %1329 = vmatprep.subr.mxu0 0.0
    %1330 = vmatpush1.msra.mxu0 0.0
    %1331 = vmatprep.subr.mxu0 0.0
    %1332 = vmatpush1.msra.mxu0 0.0
    %1333 = vmatprep.subr.mxu0 0.0
    %1334 = vmatpush1.msra.mxu0 0.0
    %1335 = vmatprep.subr.mxu0 0.0
    %1336 = vmatpush1.msra.mxu0 0.0
    %1337 = vmatprep.subr.mxu0 0.0
    %1338 = vmatpush1.msra.mxu0 0.0
    %1339 = vmatprep.subr.mxu0 0.0
    %1340 = vmatpush1.msra.mxu0 0.0
    %1341 = vmatprep.subr.mxu0 0.0
    %1342 = vmatpush1.msra.mxu0 0.0
    %1343 = vmatprep.subr.mxu0 0.0
    %1344 = vmatpush1.msra.mxu0 0.0
    %1345 = vmatprep.subr.mxu0 0.0
    %1346 = vmatpush1.msra.mxu0 0.0
    %1347 = vmatprep.subr.mxu0 0.0
    %1348 = vmatpush1.msra.mxu0 0.0
    %1349 = vmatprep.subr.mxu0 0.0
    %1350 = vmatpush1.msra.mxu0 0.0
    %1351 = vmatprep.subr.mxu0 0.0
    %1352 = vmatpush1.msra.mxu0 0.0
    %1353 = vmatprep.subr.mxu0 0.0
    %1354 = vmatpush1.msra.mxu0 0.0
    %1355 = vmatprep.subr.mxu0 0.0
    %1356 = vmatpush1.msra.mxu0 0.0
    %1357 = vmatprep.subr.mxu0 0.0
    %1358 = vmatpush1.msra.mxu0 0.0
    %1359 = vmatprep.subr.mxu0 0.0
    %1360 = vmatpush1.msra.mxu0 0.0
    %1361 = vmatprep.subr.mxu0 0.0
    %1362 = vmatpush1.msra.mxu0 0.0
    %1363 = vmatprep.subr.mxu0 0.0
    %1364 = vmatpush1.msra.mxu0 0.0
    %1365 = vmatprep.mubr.f32.mxu0 0.0
    %1366 = vmatmul.mubr.f32.gmra.mrb[0].mxu0 %v1299
    %v1367 = vpop.f32.mrb[0].mxu0
    %v1368 = vadd.f32 0.0, %v1367
    %v1369 = vpop.f32.mrb[0].mxu0
    %v1370 = vadd.f32 0.0, %v1369
    %1371 = vdwg.mxu0
    %1372 = vmatprep.subr.mxu0 0.0
    %1373 = vmatpush1.msra.mxu0 %v227
    %1374 = vmatprep.subr.mxu0 0.0
    %1375 = vmatpush1.msra.mxu0 %v230
    %1376 = vmatprep.subr.mxu0 0.0
    %1377 = vmatpush1.msra.mxu0 %v233
    %1378 = vmatprep.subr.mxu0 0.0
    %1379 = vmatpush1.msra.mxu0 %v236
    %1380 = vmatprep.subr.mxu0 0.0
    %1381 = vmatpush1.msra.mxu0 %v239
    %1382 = vmatprep.subr.mxu0 0.0
    %1383 = vmatpush1.msra.mxu0 %v242
    %1384 = vmatprep.subr.mxu0 0.0
    %1385 = vmatpush1.msra.mxu0 %v245
    %1386 = vmatprep.subr.mxu0 0.0
    %1387 = vmatpush1.msra.mxu0 %v248
    %1388 = vmatprep.subr.mxu0 0.0
    %1389 = vmatpush1.msra.mxu0 %v251
    %1390 = vmatprep.subr.mxu0 0.0
    %1391 = vmatpush1.msra.mxu0 %v254
    %1392 = vmatprep.subr.mxu0 0.0
    %1393 = vmatpush1.msra.mxu0 %v257
    %1394 = vmatprep.subr.mxu0 0.0
    %1395 = vmatpush1.msra.mxu0 %v260
    %1396 = vmatprep.subr.mxu0 0.0
    %1397 = vmatpush1.msra.mxu0 0.0
    %1398 = vmatprep.subr.mxu0 0.0
    %1399 = vmatpush1.msra.mxu0 0.0
    %1400 = vmatprep.subr.mxu0 0.0
    %1401 = vmatpush1.msra.mxu0 0.0
    %1402 = vmatprep.subr.mxu0 0.0
    %1403 = vmatpush1.msra.mxu0 0.0
    %1404 = vmatprep.subr.mxu0 0.0
    %1405 = vmatpush1.msra.mxu0 0.0
    %1406 = vmatprep.subr.mxu0 0.0
    %1407 = vmatpush1.msra.mxu0 0.0
    %1408 = vmatprep.subr.mxu0 0.0
    %1409 = vmatpush1.msra.mxu0 0.0
    %1410 = vmatprep.subr.mxu0 0.0
    %1411 = vmatpush1.msra.mxu0 0.0
    %1412 = vmatprep.subr.mxu0 0.0
    %1413 = vmatpush1.msra.mxu0 0.0
    %1414 = vmatprep.subr.mxu0 0.0
    %1415 = vmatpush1.msra.mxu0 0.0
    %1416 = vmatprep.subr.mxu0 0.0
    %1417 = vmatpush1.msra.mxu0 0.0
    %1418 = vmatprep.subr.mxu0 0.0
    %1419 = vmatpush1.msra.mxu0 0.0
    %1420 = vmatprep.subr.mxu0 0.0
    %1421 = vmatpush1.msra.mxu0 0.0
    %1422 = vmatprep.subr.mxu0 0.0
    %1423 = vmatpush1.msra.mxu0 0.0
    %1424 = vmatprep.subr.mxu0 0.0
    %1425 = vmatpush1.msra.mxu0 0.0
    %1426 = vmatprep.subr.mxu0 0.0
    %1427 = vmatpush1.msra.mxu0 0.0
    %1428 = vmatprep.subr.mxu0 0.0
    %1429 = vmatpush1.msra.mxu0 0.0
    %1430 = vmatprep.subr.mxu0 0.0
    %1431 = vmatpush1.msra.mxu0 0.0
    %1432 = vmatprep.subr.mxu0 0.0
    %1433 = vmatpush1.msra.mxu0 0.0
    %1434 = vmatprep.subr.mxu0 0.0
    %1435 = vmatpush1.msra.mxu0 0.0
    %1436 = vmatprep.mubr.f32.mxu0 0.0
    %1437 = vmatmul.mubr.f32.gmra.mrb[0].mxu0 %v1299
    %v1438 = vpop.f32.mrb[0].mxu0
    %v1439 = vadd.f32 0.0, %v1438
    %v1440 = vpop.f32.mrb[0].mxu0
    %1441 = vdwg.mxu0
    %v1442 = vadd.f32 %v358, %v1368
    %v1443 = vadd.f32 %v360, %v1370
    %v1444 = vadd.f32 %v434, %v1439
    %v1445 = vxor.u32 %v1442, 2147483648
    %v1446 = vmul.f32 %v1445, 1.442695
    %v1447 = vpow.pop %v1446
    %v1448 = vadd.f32 %v1447, 1.0
    %v1449 = vrcp.pop %v1448
    %v1450 = vmul.f32 1.0, %v1449
    %v1451 = vxor.u32 %v1443, 2147483648
    %v1452 = vmul.f32 %v1451, 1.442695
    %v1453 = vpow.pop %v1452
    %v1454 = vadd.f32 %v1453, 1.0
    %v1455 = vrcp.pop %v1454
    %v1456 = vmul.f32 1.0, %v1455
    %v1457 = vtanh.pop %v1443
    %v1458 = vtanh.pop %v1444
    %v1459 = vxor.u32 %v1444, 2147483648
    %v1460 = vmul.f32 %v1459, 1.442695
    %v1461 = vpow.pop %v1460
    %v1462 = vadd.f32 %v1461, 1.0
    %v1463 = vrcp.pop %v1462
    %v1464 = vmul.f32 1.0, %v1463
    %v1467 = vrot.slane %v1277, 6
    %v1468 = vrot.slane %v1278, 6
    %v1471 = vmul.f32 %v1450, %v1467
    %v1472 = vmul.f32 %v1456, %v1468
    %1475 = vrot.lane.b32.xlu0 %v1457, 64
    %v1476 = vpop.permute.xlu0 %1475
    %1477 = vrot.lane.b32.xlu0 %v1458, 64
    %v1478 = vpop.permute.xlu0 %1477
    %v1479 = vsel %vm618, %v1476, %v1478
    %v1481 = vmul.f32 %v1450, %v1479
    %1483 = vrot.lane.b32.xlu0 %v1481, 96
    %v1484 = vpop.permute.xlu0 %1483
    %v1486 = vadd.f32 %v1471, %v1484
    %v1487 = vadd.f32 %v1472, %v1484
    %v1488 = vtanh.pop %v1486
    %v1489 = vtanh.pop %v1487
    %1492 = vrot.lane.b32.xlu0 %v1488, 64
    %v1493 = vpop.permute.xlu0 %1492
    %1494 = vrot.lane.b32.xlu0 %v1489, 64
    %v1495 = vpop.permute.xlu0 %1494
    %v1496 = vsel %vm618, %v1493, %v1495
    %v1498 = vmul.f32 %v1464, %v1496
    %1500 = vrot.lane.b32.xlu0 %v1498, 96
    %v1501 = vpop.permute.xlu0 %1500
    %1503 = vst.msk [vmem:[#allocation2 + $0x8] sm:$0x3] %vm643, %v1501
    %v1504 = vsel %vm278, %v1501, 0
    %1506 = vmatprep.subr.mxu0 %v226
    %1507 = vmatpush1.msra.mxu0 %v225
    %1508 = vmatprep.subr.mxu0 %v229
    %1509 = vmatpush1.msra.mxu0 %v228
    %1510 = vmatprep.subr.mxu0 %v232
    %1511 = vmatpush1.msra.mxu0 %v231
    %1512 = vmatprep.subr.mxu0 %v235
    %1513 = vmatpush1.msra.mxu0 %v234
    %1514 = vmatprep.subr.mxu0 %v238
    %1515 = vmatpush1.msra.mxu0 %v237
    %1516 = vmatprep.subr.mxu0 %v241
    %1517 = vmatpush1.msra.mxu0 %v240
    %1518 = vmatprep.subr.mxu0 %v244
    %1519 = vmatpush1.msra.mxu0 %v243
    %1520 = vmatprep.subr.mxu0 %v247
    %1521 = vmatpush1.msra.mxu0 %v246
    %1522 = vmatprep.subr.mxu0 %v250
    %1523 = vmatpush1.msra.mxu0 %v249
    %1524 = vmatprep.subr.mxu0 %v253
    %1525 = vmatpush1.msra.mxu0 %v252
    %1526 = vmatprep.subr.mxu0 %v256
    %1527 = vmatpush1.msra.mxu0 %v255
    %1528 = vmatprep.subr.mxu0 %v259
    %1529 = vmatpush1.msra.mxu0 %v258
    %1530 = vmatprep.subr.mxu0 0.0
    %1531 = vmatpush1.msra.mxu0 0.0
    %1532 = vmatprep.subr.mxu0 0.0
    %1533 = vmatpush1.msra.mxu0 0.0
    %1534 = vmatprep.subr.mxu0 0.0
    %1535 = vmatpush1.msra.mxu0 0.0
    %1536 = vmatprep.subr.mxu0 0.0
    %1537 = vmatpush1.msra.mxu0 0.0
    %1538 = vmatprep.subr.mxu0 0.0
    %1539 = vmatpush1.msra.mxu0 0.0
    %1540 = vmatprep.subr.mxu0 0.0
    %1541 = vmatpush1.msra.mxu0 0.0
    %1542 = vmatprep.subr.mxu0 0.0
    %1543 = vmatpush1.msra.mxu0 0.0
    %1544 = vmatprep.subr.mxu0 0.0
    %1545 = vmatpush1.msra.mxu0 0.0
    %1546 = vmatprep.subr.mxu0 0.0
    %1547 = vmatpush1.msra.mxu0 0.0
    %1548 = vmatprep.subr.mxu0 0.0
    %1549 = vmatpush1.msra.mxu0 0.0
    %1550 = vmatprep.subr.mxu0 0.0
    %1551 = vmatpush1.msra.mxu0 0.0
    %1552 = vmatprep.subr.mxu0 0.0
    %1553 = vmatpush1.msra.mxu0 0.0
    %1554 = vmatprep.subr.mxu0 0.0
    %1555 = vmatpush1.msra.mxu0 0.0
    %1556 = vmatprep.subr.mxu0 0.0
    %1557 = vmatpush1.msra.mxu0 0.0
    %1558 = vmatprep.subr.mxu0 0.0
    %1559 = vmatpush1.msra.mxu0 0.0
    %1560 = vmatprep.subr.mxu0 0.0
    %1561 = vmatpush1.msra.mxu0 0.0
    %1562 = vmatprep.subr.mxu0 0.0
    %1563 = vmatpush1.msra.mxu0 0.0
    %1564 = vmatprep.subr.mxu0 0.0
    %1565 = vmatpush1.msra.mxu0 0.0
    %1566 = vmatprep.subr.mxu0 0.0
    %1567 = vmatpush1.msra.mxu0 0.0
    %1568 = vmatprep.subr.mxu0 0.0
    %1569 = vmatpush1.msra.mxu0 0.0
    %1570 = vmatprep.mubr.f32.mxu0 0.0
    %1571 = vmatmul.mubr.f32.gmra.mrb[0].mxu0 %v1504
    %v1572 = vpop.f32.mrb[0].mxu0
    %v1573 = vadd.f32 0.0, %v1572
    %v1574 = vpop.f32.mrb[0].mxu0
    %v1575 = vadd.f32 0.0, %v1574
    %1576 = vdwg.mxu0
    %1577 = vmatprep.subr.mxu0 0.0
    %1578 = vmatpush1.msra.mxu0 %v227
    %1579 = vmatprep.subr.mxu0 0.0
    %1580 = vmatpush1.msra.mxu0 %v230
    %1581 = vmatprep.subr.mxu0 0.0
    %1582 = vmatpush1.msra.mxu0 %v233
    %1583 = vmatprep.subr.mxu0 0.0
    %1584 = vmatpush1.msra.mxu0 %v236
    %1585 = vmatprep.subr.mxu0 0.0
    %1586 = vmatpush1.msra.mxu0 %v239
    %1587 = vmatprep.subr.mxu0 0.0
    %1588 = vmatpush1.msra.mxu0 %v242
    %1589 = vmatprep.subr.mxu0 0.0
    %1590 = vmatpush1.msra.mxu0 %v245
    %1591 = vmatprep.subr.mxu0 0.0
    %1592 = vmatpush1.msra.mxu0 %v248
    %1593 = vmatprep.subr.mxu0 0.0
    %1594 = vmatpush1.msra.mxu0 %v251
    %1595 = vmatprep.subr.mxu0 0.0
    %1596 = vmatpush1.msra.mxu0 %v254
    %1597 = vmatprep.subr.mxu0 0.0
    %1598 = vmatpush1.msra.mxu0 %v257
    %1599 = vmatprep.subr.mxu0 0.0
    %1600 = vmatpush1.msra.mxu0 %v260
    %1601 = vmatprep.subr.mxu0 0.0
    %1602 = vmatpush1.msra.mxu0 0.0
    %1603 = vmatprep.subr.mxu0 0.0
    %1604 = vmatpush1.msra.mxu0 0.0
    %1605 = vmatprep.subr.mxu0 0.0
    %1606 = vmatpush1.msra.mxu0 0.0
    %1607 = vmatprep.subr.mxu0 0.0
    %1608 = vmatpush1.msra.mxu0 0.0
    %1609 = vmatprep.subr.mxu0 0.0
    %1610 = vmatpush1.msra.mxu0 0.0
    %1611 = vmatprep.subr.mxu0 0.0
    %1612 = vmatpush1.msra.mxu0 0.0
    %1613 = vmatprep.subr.mxu0 0.0
    %1614 = vmatpush1.msra.mxu0 0.0
    %1615 = vmatprep.subr.mxu0 0.0
    %1616 = vmatpush1.msra.mxu0 0.0
    %1617 = vmatprep.subr.mxu0 0.0
    %1618 = vmatpush1.msra.mxu0 0.0
    %1619 = vmatprep.subr.mxu0 0.0
    %1620 = vmatpush1.msra.mxu0 0.0
    %1621 = vmatprep.subr.mxu0 0.0
    %1622 = vmatpush1.msra.mxu0 0.0
    %1623 = vmatprep.subr.mxu0 0.0
    %1624 = vmatpush1.msra.mxu0 0.0
    %1625 = vmatprep.subr.mxu0 0.0
    %1626 = vmatpush1.msra.mxu0 0.0
    %1627 = vmatprep.subr.mxu0 0.0
    %1628 = vmatpush1.msra.mxu0 0.0
    %1629 = vmatprep.subr.mxu0 0.0
    %1630 = vmatpush1.msra.mxu0 0.0
    %1631 = vmatprep.subr.mxu0 0.0
    %1632 = vmatpush1.msra.mxu0 0.0
    %1633 = vmatprep.subr.mxu0 0.0
    %1634 = vmatpush1.msra.mxu0 0.0
    %1635 = vmatprep.subr.mxu0 0.0
    %1636 = vmatpush1.msra.mxu0 0.0
    %1637 = vmatprep.subr.mxu0 0.0
    %1638 = vmatpush1.msra.mxu0 0.0
    %1639 = vmatprep.subr.mxu0 0.0
    %1640 = vmatpush1.msra.mxu0 0.0
    %1641 = vmatprep.mubr.f32.mxu0 0.0
    %1642 = vmatmul.mubr.f32.gmra.mrb[0].mxu0 %v1504
    %v1643 = vpop.f32.mrb[0].mxu0
    %v1644 = vadd.f32 0.0, %v1643
    %v1645 = vpop.f32.mrb[0].mxu0
    %1646 = vdwg.mxu0
    %v1650 = vrot.slane %v1573, 6
    %v1651 = vrot.slane %v1575, 6
    %v1652 = vrot.slane %v1644, 6
    %v1656 = vadd.f32 %v358, %v1650
    %v1657 = vadd.f32 %v360, %v1651
    %v1658 = vadd.f32 %v434, %v1652
    %v1659 = vxor.u32 %v1656, 2147483648
    %v1660 = vmul.f32 %v1659, 1.442695
    %v1661 = vpow.pop %v1660
    %v1662 = vadd.f32 %v1661, 1.0
    %v1663 = vrcp.pop %v1662
    %v1664 = vmul.f32 1.0, %v1663
    %v1665 = vxor.u32 %v1657, 2147483648
    %v1666 = vmul.f32 %v1665, 1.442695
    %v1667 = vpow.pop %v1666
    %v1668 = vadd.f32 %v1667, 1.0
    %v1669 = vrcp.pop %v1668
    %v1670 = vmul.f32 1.0, %v1669
    %v1671 = vtanh.pop %v1657
    %v1672 = vtanh.pop %v1658
    %v1673 = vxor.u32 %v1658, 2147483648
    %v1674 = vmul.f32 %v1673, 1.442695
    %v1675 = vpow.pop %v1674
    %v1676 = vadd.f32 %v1675, 1.0
    %v1677 = vrcp.pop %v1676
    %v1678 = vmul.f32 1.0, %v1677
    %v1681 = vrot.slane %v1486, 6
    %v1682 = vrot.slane %v1487, 6
    %v1685 = vmul.f32 %v1664, %v1681
    %v1686 = vmul.f32 %v1670, %v1682
    %1689 = vrot.lane.b32.xlu0 %v1671, 64
    %v1690 = vpop.permute.xlu0 %1689
    %1691 = vrot.lane.b32.xlu0 %v1672, 64
    %v1692 = vpop.permute.xlu0 %1691
    %v1693 = vsel %vm618, %v1690, %v1692
    %v1695 = vmul.f32 %v1664, %v1693
    %1697 = vrot.lane.b32.xlu0 %v1695, 96
    %v1698 = vpop.permute.xlu0 %1697
    %v1700 = vadd.f32 %v1685, %v1698
    %v1701 = vadd.f32 %v1686, %v1698
    %v1702 = vtanh.pop %v1700
    %v1703 = vtanh.pop %v1701
    %1706 = vrot.lane.b32.xlu0 %v1702, 64
    %v1707 = vpop.permute.xlu0 %1706
    %1708 = vrot.lane.b32.xlu0 %v1703, 64
    %v1709 = vpop.permute.xlu0 %1708
    %v1710 = vsel %vm618, %v1707, %v1709
    %v1712 = vmul.f32 %v1678, %v1710
    %1714 = vrot.lane.b32.xlu0 %v1712, 96
    %v1715 = vpop.permute.xlu0 %1714
    %1717 = vst.msk [vmem:[#allocation2 + $0x8] sm:$0xc] %vm858, %v1715
    %v1718 = vrot.slane %v1712, 2
    %1719 = vrot.lane.b32.xlu0 %v1718, 96
    %v1720 = vpop.permute.xlu0 %1719
    %v1721 = vsel %vm278, %v1720, 0
    %1723 = vmatprep.subr.mxu0 %v226
    %1724 = vmatpush1.msra.mxu0 %v225
    %1725 = vmatprep.subr.mxu0 %v229
    %1726 = vmatpush1.msra.mxu0 %v228
    %1727 = vmatprep.subr.mxu0 %v232
    %1728 = vmatpush1.msra.mxu0 %v231
    %1729 = vmatprep.subr.mxu0 %v235
    %1730 = vmatpush1.msra.mxu0 %v234
    %1731 = vmatprep.subr.mxu0 %v238
    %1732 = vmatpush1.msra.mxu0 %v237
    %1733 = vmatprep.subr.mxu0 %v241
    %1734 = vmatpush1.msra.mxu0 %v240
    %1735 = vmatprep.subr.mxu0 %v244
    %1736 = vmatpush1.msra.mxu0 %v243
    %1737 = vmatprep.subr.mxu0 %v247
    %1738 = vmatpush1.msra.mxu0 %v246
    %1739 = vmatprep.subr.mxu0 %v250
    %1740 = vmatpush1.msra.mxu0 %v249
    %1741 = vmatprep.subr.mxu0 %v253
    %1742 = vmatpush1.msra.mxu0 %v252
    %1743 = vmatprep.subr.mxu0 %v256
    %1744 = vmatpush1.msra.mxu0 %v255
    %1745 = vmatprep.subr.mxu0 %v259
    %1746 = vmatpush1.msra.mxu0 %v258
    %1747 = vmatprep.subr.mxu0 0.0
    %1748 = vmatpush1.msra.mxu0 0.0
    %1749 = vmatprep.subr.mxu0 0.0
    %1750 = vmatpush1.msra.mxu0 0.0
    %1751 = vmatprep.subr.mxu0 0.0
    %1752 = vmatpush1.msra.mxu0 0.0
    %1753 = vmatprep.subr.mxu0 0.0
    %1754 = vmatpush1.msra.mxu0 0.0
    %1755 = vmatprep.subr.mxu0 0.0
    %1756 = vmatpush1.msra.mxu0 0.0
    %1757 = vmatprep.subr.mxu0 0.0
    %1758 = vmatpush1.msra.mxu0 0.0
    %1759 = vmatprep.subr.mxu0 0.0
    %1760 = vmatpush1.msra.mxu0 0.0
    %1761 = vmatprep.subr.mxu0 0.0
    %1762 = vmatpush1.msra.mxu0 0.0
    %1763 = vmatprep.subr.mxu0 0.0
    %1764 = vmatpush1.msra.mxu0 0.0
    %1765 = vmatprep.subr.mxu0 0.0
    %1766 = vmatpush1.msra.mxu0 0.0
    %1767 = vmatprep.subr.mxu0 0.0
    %1768 = vmatpush1.msra.mxu0 0.0
    %1769 = vmatprep.subr.mxu0 0.0
    %1770 = vmatpush1.msra.mxu0 0.0
    %1771 = vmatprep.subr.mxu0 0.0
    %1772 = vmatpush1.msra.mxu0 0.0
    %1773 = vmatprep.subr.mxu0 0.0
    %1774 = vmatpush1.msra.mxu0 0.0
    %1775 = vmatprep.subr.mxu0 0.0
    %1776 = vmatpush1.msra.mxu0 0.0
    %1777 = vmatprep.subr.mxu0 0.0
    %1778 = vmatpush1.msra.mxu0 0.0
    %1779 = vmatprep.subr.mxu0 0.0
    %1780 = vmatpush1.msra.mxu0 0.0
    %1781 = vmatprep.subr.mxu0 0.0
    %1782 = vmatpush1.msra.mxu0 0.0
    %1783 = vmatprep.subr.mxu0 0.0
    %1784 = vmatpush1.msra.mxu0 0.0
    %1785 = vmatprep.subr.mxu0 0.0
    %1786 = vmatpush1.msra.mxu0 0.0
    %1787 = vmatprep.mubr.f32.mxu0 0.0
    %1788 = vmatmul.mubr.f32.gmra.mrb[0].mxu0 %v1721
    %v1789 = vpop.f32.mrb[0].mxu0
    %v1790 = vadd.f32 0.0, %v1789
    %v1791 = vpop.f32.mrb[0].mxu0
    %v1792 = vadd.f32 0.0, %v1791
    %1793 = vdwg.mxu0
    %1794 = vmatprep.subr.mxu0 0.0
    %1795 = vmatpush1.msra.mxu0 %v227
    %1796 = vmatprep.subr.mxu0 0.0
    %1797 = vmatpush1.msra.mxu0 %v230
    %1798 = vmatprep.subr.mxu0 0.0
    %1799 = vmatpush1.msra.mxu0 %v233
    %1800 = vmatprep.subr.mxu0 0.0
    %1801 = vmatpush1.msra.mxu0 %v236
    %1802 = vmatprep.subr.mxu0 0.0
    %1803 = vmatpush1.msra.mxu0 %v239
    %1804 = vmatprep.subr.mxu0 0.0
    %1805 = vmatpush1.msra.mxu0 %v242
    %1806 = vmatprep.subr.mxu0 0.0
    %1807 = vmatpush1.msra.mxu0 %v245
    %1808 = vmatprep.subr.mxu0 0.0
    %1809 = vmatpush1.msra.mxu0 %v248
    %1810 = vmatprep.subr.mxu0 0.0
    %1811 = vmatpush1.msra.mxu0 %v251
    %1812 = vmatprep.subr.mxu0 0.0
    %1813 = vmatpush1.msra.mxu0 %v254
    %1814 = vmatprep.subr.mxu0 0.0
    %1815 = vmatpush1.msra.mxu0 %v257
    %1816 = vmatprep.subr.mxu0 0.0
    %1817 = vmatpush1.msra.mxu0 %v260
    %1818 = vmatprep.subr.mxu0 0.0
    %1819 = vmatpush1.msra.mxu0 0.0
    %1820 = vmatprep.subr.mxu0 0.0
    %1821 = vmatpush1.msra.mxu0 0.0
    %1822 = vmatprep.subr.mxu0 0.0
    %1823 = vmatpush1.msra.mxu0 0.0
    %1824 = vmatprep.subr.mxu0 0.0
    %1825 = vmatpush1.msra.mxu0 0.0
    %1826 = vmatprep.subr.mxu0 0.0
    %1827 = vmatpush1.msra.mxu0 0.0
    %1828 = vmatprep.subr.mxu0 0.0
    %1829 = vmatpush1.msra.mxu0 0.0
    %1830 = vmatprep.subr.mxu0 0.0
    %1831 = vmatpush1.msra.mxu0 0.0
    %1832 = vmatprep.subr.mxu0 0.0
    %1833 = vmatpush1.msra.mxu0 0.0
    %1834 = vmatprep.subr.mxu0 0.0
    %1835 = vmatpush1.msra.mxu0 0.0
    %1836 = vmatprep.subr.mxu0 0.0
    %1837 = vmatpush1.msra.mxu0 0.0
    %1838 = vmatprep.subr.mxu0 0.0
    %1839 = vmatpush1.msra.mxu0 0.0
    %1840 = vmatprep.subr.mxu0 0.0
    %1841 = vmatpush1.msra.mxu0 0.0
    %1842 = vmatprep.subr.mxu0 0.0
    %1843 = vmatpush1.msra.mxu0 0.0
    %1844 = vmatprep.subr.mxu0 0.0
    %1845 = vmatpush1.msra.mxu0 0.0
    %1846 = vmatprep.subr.mxu0 0.0
    %1847 = vmatpush1.msra.mxu0 0.0
    %1848 = vmatprep.subr.mxu0 0.0
    %1849 = vmatpush1.msra.mxu0 0.0
    %1850 = vmatprep.subr.mxu0 0.0
    %1851 = vmatpush1.msra.mxu0 0.0
    %1852 = vmatprep.subr.mxu0 0.0
    %1853 = vmatpush1.msra.mxu0 0.0
    %1854 = vmatprep.subr.mxu0 0.0
    %1855 = vmatpush1.msra.mxu0 0.0
    %1856 = vmatprep.subr.mxu0 0.0
    %1857 = vmatpush1.msra.mxu0 0.0
    %1858 = vmatprep.mubr.f32.mxu0 0.0
    %1859 = vmatmul.mubr.f32.gmra.mrb[0].mxu0 %v1721
    %v1860 = vpop.f32.mrb[0].mxu0
    %v1861 = vadd.f32 0.0, %v1860
    %v1862 = vpop.f32.mrb[0].mxu0
    %1863 = vdwg.mxu0
    %v1867 = vrot.slane %v1790, 4
    %v1868 = vrot.slane %v1792, 4
    %v1869 = vrot.slane %v1861, 4
    %v1873 = vadd.f32 %v358, %v1867
    %v1874 = vadd.f32 %v360, %v1868
    %v1875 = vadd.f32 %v434, %v1869
    %v1876 = vxor.u32 %v1873, 2147483648
    %v1877 = vmul.f32 %v1876, 1.442695
    %v1878 = vpow.pop %v1877
    %v1879 = vadd.f32 %v1878, 1.0
    %v1880 = vrcp.pop %v1879
    %v1881 = vmul.f32 1.0, %v1880
    %v1882 = vxor.u32 %v1874, 2147483648
    %v1883 = vmul.f32 %v1882, 1.442695
    %v1884 = vpow.pop %v1883
    %v1885 = vadd.f32 %v1884, 1.0
    %v1886 = vrcp.pop %v1885
    %v1887 = vmul.f32 1.0, %v1886
    %v1888 = vtanh.pop %v1874
    %v1889 = vtanh.pop %v1875
    %v1890 = vxor.u32 %v1875, 2147483648
    %v1891 = vmul.f32 %v1890, 1.442695
    %v1892 = vpow.pop %v1891
    %v1893 = vadd.f32 %v1892, 1.0
    %v1894 = vrcp.pop %v1893
    %v1895 = vmul.f32 1.0, %v1894
    %v1898 = vrot.slane %v1700, 6
    %v1899 = vrot.slane %v1701, 6
    %v1902 = vmul.f32 %v1881, %v1898
    %v1903 = vmul.f32 %v1887, %v1899
    %1906 = vrot.lane.b32.xlu0 %v1888, 64
    %v1907 = vpop.permute.xlu0 %1906
    %1908 = vrot.lane.b32.xlu0 %v1889, 64
    %v1909 = vpop.permute.xlu0 %1908
    %v1910 = vsel %vm618, %v1907, %v1909
    %v1912 = vmul.f32 %v1881, %v1910
    %1914 = vrot.lane.b32.xlu0 %v1912, 96
    %v1915 = vpop.permute.xlu0 %1914
    %v1917 = vadd.f32 %v1902, %v1915
    %v1918 = vadd.f32 %v1903, %v1915
    %v1919 = vtanh.pop %v1917
    %v1920 = vtanh.pop %v1918
    %1923 = vrot.lane.b32.xlu0 %v1919, 64
    %v1924 = vpop.permute.xlu0 %1923
    %1925 = vrot.lane.b32.xlu0 %v1920, 64
    %v1926 = vpop.permute.xlu0 %1925
    %v1927 = vsel %vm618, %v1924, %v1926
    %v1929 = vmul.f32 %v1895, %v1927
    %1931 = vrot.lane.b32.xlu0 %v1929, 96
    %v1932 = vpop.permute.xlu0 %1931
    %1934 = vst.msk [vmem:[#allocation2 + $0x8] sm:$0x30] %vm1076, %v1932
    %v1935 = vrot.slane %v1929, 4
    %1936 = vrot.lane.b32.xlu0 %v1935, 96
    %v1937 = vpop.permute.xlu0 %1936
    %v1938 = vsel %vm278, %v1937, 0
    %1940 = vmatprep.subr.mxu0 %v226
    %1941 = vmatpush1.msra.mxu0 %v225
    %1942 = vmatprep.subr.mxu0 %v229
    %1943 = vmatpush1.msra.mxu0 %v228
    %1944 = vmatprep.subr.mxu0 %v232
    %1945 = vmatpush1.msra.mxu0 %v231
    %1946 = vmatprep.subr.mxu0 %v235
    %1947 = vmatpush1.msra.mxu0 %v234
    %1948 = vmatprep.subr.mxu0 %v238
    %1949 = vmatpush1.msra.mxu0 %v237
    %1950 = vmatprep.subr.mxu0 %v241
    %1951 = vmatpush1.msra.mxu0 %v240
    %1952 = vmatprep.subr.mxu0 %v244
    %1953 = vmatpush1.msra.mxu0 %v243
    %1954 = vmatprep.subr.mxu0 %v247
    %1955 = vmatpush1.msra.mxu0 %v246
    %1956 = vmatprep.subr.mxu0 %v250
    %1957 = vmatpush1.msra.mxu0 %v249
    %1958 = vmatprep.subr.mxu0 %v253
    %1959 = vmatpush1.msra.mxu0 %v252
    %1960 = vmatprep.subr.mxu0 %v256
    %1961 = vmatpush1.msra.mxu0 %v255
    %1962 = vmatprep.subr.mxu0 %v259
    %1963 = vmatpush1.msra.mxu0 %v258
    %1964 = vmatprep.subr.mxu0 0.0
    %1965 = vmatpush1.msra.mxu0 0.0
    %1966 = vmatprep.subr.mxu0 0.0
    %1967 = vmatpush1.msra.mxu0 0.0
    %1968 = vmatprep.subr.mxu0 0.0
    %1969 = vmatpush1.msra.mxu0 0.0
    %1970 = vmatprep.subr.mxu0 0.0
    %1971 = vmatpush1.msra.mxu0 0.0
    %1972 = vmatprep.subr.mxu0 0.0
    %1973 = vmatpush1.msra.mxu0 0.0
    %1974 = vmatprep.subr.mxu0 0.0
    %1975 = vmatpush1.msra.mxu0 0.0
    %1976 = vmatprep.subr.mxu0 0.0
    %1977 = vmatpush1.msra.mxu0 0.0
    %1978 = vmatprep.subr.mxu0 0.0
    %1979 = vmatpush1.msra.mxu0 0.0
    %1980 = vmatprep.subr.mxu0 0.0
    %1981 = vmatpush1.msra.mxu0 0.0
    %1982 = vmatprep.subr.mxu0 0.0
    %1983 = vmatpush1.msra.mxu0 0.0
    %1984 = vmatprep.subr.mxu0 0.0
    %1985 = vmatpush1.msra.mxu0 0.0
    %1986 = vmatprep.subr.mxu0 0.0
    %1987 = vmatpush1.msra.mxu0 0.0
    %1988 = vmatprep.subr.mxu0 0.0
    %1989 = vmatpush1.msra.mxu0 0.0
    %1990 = vmatprep.subr.mxu0 0.0
    %1991 = vmatpush1.msra.mxu0 0.0
    %1992 = vmatprep.subr.mxu0 0.0
    %1993 = vmatpush1.msra.mxu0 0.0
    %1994 = vmatprep.subr.mxu0 0.0
    %1995 = vmatpush1.msra.mxu0 0.0
    %1996 = vmatprep.subr.mxu0 0.0
    %1997 = vmatpush1.msra.mxu0 0.0
    %1998 = vmatprep.subr.mxu0 0.0
    %1999 = vmatpush1.msra.mxu0 0.0
    %2000 = vmatprep.subr.mxu0 0.0
    %2001 = vmatpush1.msra.mxu0 0.0
    %2002 = vmatprep.subr.mxu0 0.0
    %2003 = vmatpush1.msra.mxu0 0.0
    %2004 = vmatprep.mubr.f32.mxu0 0.0
    %2005 = vmatmul.mubr.f32.gmra.mrb[0].mxu0 %v1938
    %v2006 = vpop.f32.mrb[0].mxu0
    %v2007 = vadd.f32 0.0, %v2006
    %v2008 = vpop.f32.mrb[0].mxu0
    %v2009 = vadd.f32 0.0, %v2008
    %2010 = vdwg.mxu0
    %2011 = vmatprep.subr.mxu0 0.0
    %2012 = vmatpush1.msra.mxu0 %v227
    %2013 = vmatprep.subr.mxu0 0.0
    %2014 = vmatpush1.msra.mxu0 %v230
    %2015 = vmatprep.subr.mxu0 0.0
    %2016 = vmatpush1.msra.mxu0 %v233
    %2017 = vmatprep.subr.mxu0 0.0
    %2018 = vmatpush1.msra.mxu0 %v236
    %2019 = vmatprep.subr.mxu0 0.0
    %2020 = vmatpush1.msra.mxu0 %v239
    %2021 = vmatprep.subr.mxu0 0.0
    %2022 = vmatpush1.msra.mxu0 %v242
    %2023 = vmatprep.subr.mxu0 0.0
    %2024 = vmatpush1.msra.mxu0 %v245
    %2025 = vmatprep.subr.mxu0 0.0
    %2026 = vmatpush1.msra.mxu0 %v248
    %2027 = vmatprep.subr.mxu0 0.0
    %2028 = vmatpush1.msra.mxu0 %v251
    %2029 = vmatprep.subr.mxu0 0.0
    %2030 = vmatpush1.msra.mxu0 %v254
    %2031 = vmatprep.subr.mxu0 0.0
    %2032 = vmatpush1.msra.mxu0 %v257
    %2033 = vmatprep.subr.mxu0 0.0
    %2034 = vmatpush1.msra.mxu0 %v260
    %2035 = vmatprep.subr.mxu0 0.0
    %2036 = vmatpush1.msra.mxu0 0.0
    %2037 = vmatprep.subr.mxu0 0.0
    %2038 = vmatpush1.msra.mxu0 0.0
    %2039 = vmatprep.subr.mxu0 0.0
    %2040 = vmatpush1.msra.mxu0 0.0
    %2041 = vmatprep.subr.mxu0 0.0
    %2042 = vmatpush1.msra.mxu0 0.0
    %2043 = vmatprep.subr.mxu0 0.0
    %2044 = vmatpush1.msra.mxu0 0.0
    %2045 = vmatprep.subr.mxu0 0.0
    %2046 = vmatpush1.msra.mxu0 0.0
    %2047 = vmatprep.subr.mxu0 0.0
    %2048 = vmatpush1.msra.mxu0 0.0
    %2049 = vmatprep.subr.mxu0 0.0
    %2050 = vmatpush1.msra.mxu0 0.0
    %2051 = vmatprep.subr.mxu0 0.0
    %2052 = vmatpush1.msra.mxu0 0.0
    %2053 = vmatprep.subr.mxu0 0.0
    %2054 = vmatpush1.msra.mxu0 0.0
    %2055 = vmatprep.subr.mxu0 0.0
    %2056 = vmatpush1.msra.mxu0 0.0
    %2057 = vmatprep.subr.mxu0 0.0
    %2058 = vmatpush1.msra.mxu0 0.0
    %2059 = vmatprep.subr.mxu0 0.0
    %2060 = vmatpush1.msra.mxu0 0.0
    %2061 = vmatprep.subr.mxu0 0.0
    %2062 = vmatpush1.msra.mxu0 0.0
    %2063 = vmatprep.subr.mxu0 0.0
    %2064 = vmatpush1.msra.mxu0 0.0
    %2065 = vmatprep.subr.mxu0 0.0
    %2066 = vmatpush1.msra.mxu0 0.0
    %2067 = vmatprep.subr.mxu0 0.0
    %2068 = vmatpush1.msra.mxu0 0.0
    %2069 = vmatprep.subr.mxu0 0.0
    %2070 = vmatpush1.msra.mxu0 0.0
    %2071 = vmatprep.subr.mxu0 0.0
    %2072 = vmatpush1.msra.mxu0 0.0
    %2073 = vmatprep.subr.mxu0 0.0
    %2074 = vmatpush1.msra.mxu0 0.0
    %2075 = vmatprep.mubr.f32.mxu0 0.0
    %2076 = vmatmul.mubr.f32.gmra.mrb[0].mxu0 %v1938
    %v2077 = vpop.f32.mrb[0].mxu0
    %v2078 = vadd.f32 0.0, %v2077
    %v2079 = vpop.f32.mrb[0].mxu0
    %2080 = vdwg.mxu0
    %v2084 = vrot.slane %v2007, 2
    %v2085 = vrot.slane %v2009, 2
    %v2086 = vrot.slane %v2078, 2
    %v2090 = vadd.f32 %v358, %v2084
    %v2091 = vadd.f32 %v360, %v2085
    %v2092 = vadd.f32 %v434, %v2086
    %v2093 = vxor.u32 %v2090, 2147483648
    %v2094 = vmul.f32 %v2093, 1.442695
    %v2095 = vpow.pop %v2094
    %v2096 = vadd.f32 %v2095, 1.0
    %v2097 = vrcp.pop %v2096
    %v2098 = vmul.f32 1.0, %v2097
    %v2099 = vxor.u32 %v2091, 2147483648
    %v2100 = vmul.f32 %v2099, 1.442695
    %v2101 = vpow.pop %v2100
    %v2102 = vadd.f32 %v2101, 1.0
    %v2103 = vrcp.pop %v2102
    %v2104 = vmul.f32 1.0, %v2103
    %v2105 = vtanh.pop %v2091
    %v2106 = vtanh.pop %v2092
    %v2107 = vxor.u32 %v2092, 2147483648
    %v2108 = vmul.f32 %v2107, 1.442695
    %v2109 = vpow.pop %v2108
    %v2110 = vadd.f32 %v2109, 1.0
    %v2111 = vrcp.pop %v2110
    %v2112 = vmul.f32 1.0, %v2111
    %v2115 = vrot.slane %v1917, 6
    %v2116 = vrot.slane %v1918, 6
    %v2119 = vmul.f32 %v2098, %v2115
    %v2120 = vmul.f32 %v2104, %v2116
    %2123 = vrot.lane.b32.xlu0 %v2105, 64
    %v2124 = vpop.permute.xlu0 %2123
    %2125 = vrot.lane.b32.xlu0 %v2106, 64
    %v2126 = vpop.permute.xlu0 %2125
    %v2127 = vsel %vm618, %v2124, %v2126
    %v2129 = vmul.f32 %v2098, %v2127
    %2131 = vrot.lane.b32.xlu0 %v2129, 96
    %v2132 = vpop.permute.xlu0 %2131
    %v2134 = vadd.f32 %v2119, %v2132
    %v2135 = vadd.f32 %v2120, %v2132
    %v2136 = vtanh.pop %v2134
    %v2137 = vtanh.pop %v2135
    %2140 = vrot.lane.b32.xlu0 %v2136, 64
    %v2141 = vpop.permute.xlu0 %2140
    %2142 = vrot.lane.b32.xlu0 %v2137, 64
    %v2143 = vpop.permute.xlu0 %2142
    %v2144 = vsel %vm618, %v2141, %v2143
    %v2146 = vmul.f32 %v2112, %v2144
    %2148 = vrot.lane.b32.xlu0 %v2146, 96
    %v2149 = vpop.permute.xlu0 %2148
    %2151 = vst.msk [vmem:[#allocation2 + $0x8] sm:$0xc0] %vm1294, %v2149
    %v2152 = vld [vmem:[#allocation2] sm:$0xff]
    %v2153 = vld [vmem:[#allocation2 + $0x8] sm:$0xff]
    %s2154 = scalar_lea.vmem [#allocation9], 288
    %v2155 = vld [vmem:[%s2154] sm:$0xff]
    %v2156 = vld [vmem:[%s2154 + $0x8] sm:$0xff]
    %v2157 = vld [vmem:[%s2154 + $0x10] sm:$0xff]
    %v2158 = vld [vmem:[%s2154 + $0x18] sm:$0xff]
    %v2159 = vld [vmem:[%s2154 + $0x20] sm:$0xff]
    %v2160 = vld [vmem:[%s2154 + $0x28] sm:$0xff]
    %v2161 = vld [vmem:[%s2154 + $0x30] sm:$0xff]
    %v2162 = vld [vmem:[%s2154 + $0x38] sm:$0xff]
    %v2163 = vld [vmem:[%s2154 + $0x40] sm:$0xff]
    %v2164 = vld [vmem:[%s2154 + $0x48] sm:$0xff]
    %v2165 = vld [vmem:[%s2154 + $0x50] sm:$0xff]
    %v2166 = vld [vmem:[%s2154 + $0x58] sm:$0xff]
    %v2167 = vld [vmem:[%s2154 + $0x60] sm:$0xff]
    %v2168 = vld [vmem:[%s2154 + $0x68] sm:$0xff]
    %v2169 = vld [vmem:[%s2154 + $0x70] sm:$0xff]
    %v2170 = vld [vmem:[%s2154 + $0x78] sm:$0xff]
    %v2171 = vld [vmem:[%s2154 + $0x80] sm:$0xff]
    %v2172 = vld [vmem:[%s2154 + $0x88] sm:$0xff]
    %v2173 = vld [vmem:[%s2154 + $0x90] sm:$0xff]
    %v2174 = vld [vmem:[%s2154 + $0x98] sm:$0xff]
    %v2175 = vld [vmem:[%s2154 + $0xa0] sm:$0xff]
    %v2176 = vld [vmem:[%s2154 + $0xa8] sm:$0xff]
    %v2177 = vld [vmem:[%s2154 + $0xb0] sm:$0xff]
    %v2178 = vld [vmem:[%s2154 + $0xb8] sm:$0xff]
    %v2179 = vld [vmem:[%s2154 + $0xc0] sm:$0xff]
    %v2180 = vld [vmem:[%s2154 + $0xc8] sm:$0xff]
    %v2181 = vld [vmem:[%s2154 + $0xd0] sm:$0xff]
    %v2182 = vld [vmem:[%s2154 + $0xd8] sm:$0xff]
    %v2183 = vld [vmem:[%s2154 + $0xe0] sm:$0xff]
    %v2184 = vld [vmem:[%s2154 + $0xe8] sm:$0xff]
    %v2185 = vld [vmem:[%s2154 + $0xf0] sm:$0xff]
    %v2186 = vld [vmem:[%s2154 + $0xf8] sm:$0xff]
    %v2187 = vld [vmem:[%s2154 + $0x100] sm:$0xff]
    %v2188 = vld [vmem:[%s2154 + $0x108] sm:$0xff]
    %v2189 = vld [vmem:[%s2154 + $0x110] sm:$0xff]
    %v2190 = vld [vmem:[%s2154 + $0x118] sm:$0xff]
    %s2191 = scalar_lea.vmem [#allocation11], 288
    %v2192 = vld [vmem:[%s2191] sm:$0xff]
    %v2193 = vld [vmem:[%s2191 + $0x8] sm:$0xff]
    %v2194 = vld [vmem:[%s2191 + $0x10] sm:$0xff]
    %v2195 = vld [vmem:[%s2191 + $0x18] sm:$0xff]
    %v2196 = vld [vmem:[%s2191 + $0x20] sm:$0xff]
    %v2197 = vld [vmem:[%s2191 + $0x28] sm:$0xff]
    %v2198 = vld [vmem:[%s2191 + $0x30] sm:$0xff]
    %v2199 = vld [vmem:[%s2191 + $0x38] sm:$0xff]
    %v2200 = vld [vmem:[%s2191 + $0x40] sm:$0xff]
    %v2201 = vld [vmem:[%s2191 + $0x48] sm:$0xff]
    %v2202 = vld [vmem:[%s2191 + $0x50] sm:$0xff]
    %v2203 = vld [vmem:[%s2191 + $0x58] sm:$0xff]
    %v2204 = vld [vmem:[%s2191 + $0x60] sm:$0xff]
    %v2205 = vld [vmem:[%s2191 + $0x68] sm:$0xff]
    %v2206 = vld [vmem:[%s2191 + $0x70] sm:$0xff]
    %v2207 = vld [vmem:[%s2191 + $0x78] sm:$0xff]
    %v2208 = vld [vmem:[%s2191 + $0x80] sm:$0xff]
    %v2209 = vld [vmem:[%s2191 + $0x88] sm:$0xff]
    %v2210 = vld [vmem:[%s2191 + $0x90] sm:$0xff]
    %v2211 = vld [vmem:[%s2191 + $0x98] sm:$0xff]
    %v2212 = vld [vmem:[%s2191 + $0xa0] sm:$0xff]
    %v2213 = vld [vmem:[%s2191 + $0xa8] sm:$0xff]
    %v2214 = vld [vmem:[%s2191 + $0xb0] sm:$0xff]
    %v2215 = vld [vmem:[%s2191 + $0xb8] sm:$0xff]
    %v2216 = vld [vmem:[%s2191 + $0xc0] sm:$0xff]
    %v2217 = vld [vmem:[%s2191 + $0xc8] sm:$0xff]
    %v2218 = vld [vmem:[%s2191 + $0xd0] sm:$0xff]
    %v2219 = vld [vmem:[%s2191 + $0xd8] sm:$0xff]
    %v2220 = vld [vmem:[%s2191 + $0xe0] sm:$0xff]
    %v2221 = vld [vmem:[%s2191 + $0xe8] sm:$0xff]
    %v2222 = vld [vmem:[%s2191 + $0xf0] sm:$0xff]
    %v2223 = vld [vmem:[%s2191 + $0xf8] sm:$0xff]
    %v2224 = vld [vmem:[%s2191 + $0x100] sm:$0xff]
    %v2225 = vld [vmem:[%s2191 + $0x108] sm:$0xff]
    %v2226 = vld [vmem:[%s2191 + $0x110] sm:$0xff]
    %v2227 = vld [vmem:[%s2191 + $0x118] sm:$0xff]
    %s2228 = scalar_lea.vmem [#allocation12], 3
    %v2229 = vld [vmem:[%s2228] sm:$0x7]
    %v2231 = vlaneseq
    %v2232 = vshrl.u32 %v2231, 7
    %v2233 = vsub.s32 0, %v2232
    %v2234 = vrot.slane %v2229, %v2233
    %v2235 = vlaneseq
    %v2236 = vshrl.u32 %v2235, 7
    %v2237 = vsub.s32 1, %v2236
    %v2238 = vrot.slane %v2229, %v2237
    %v2239 = vlaneseq
    %v2240 = vshrl.u32 %v2239, 7
    %v2241 = vsub.s32 2, %v2240
    %v2242 = vrot.slane %v2229, %v2241
    %v2247 = vsel %vm278, %v2152, 0
    %v2250 = vsel %vm278, %v2153, 0
    %2252 = vmatprep.subr.mxu0 %v2156
    %2253 = vmatpush1.msra.mxu0 %v2155
    %2254 = vmatprep.subr.mxu0 %v2159
    %2255 = vmatpush1.msra.mxu0 %v2158
    %2256 = vmatprep.subr.mxu0 %v2162
    %2257 = vmatpush1.msra.mxu0 %v2161
    %2258 = vmatprep.subr.mxu0 %v2165
    %2259 = vmatpush1.msra.mxu0 %v2164
    %2260 = vmatprep.subr.mxu0 %v2168
    %2261 = vmatpush1.msra.mxu0 %v2167
    %2262 = vmatprep.subr.mxu0 %v2171
    %2263 = vmatpush1.msra.mxu0 %v2170
    %2264 = vmatprep.subr.mxu0 %v2174
    %2265 = vmatpush1.msra.mxu0 %v2173
    %2266 = vmatprep.subr.mxu0 %v2177
    %2267 = vmatpush1.msra.mxu0 %v2176
    %2268 = vmatprep.subr.mxu0 %v2180
    %2269 = vmatpush1.msra.mxu0 %v2179
    %2270 = vmatprep.subr.mxu0 %v2183
    %2271 = vmatpush1.msra.mxu0 %v2182
    %2272 = vmatprep.subr.mxu0 %v2186
    %2273 = vmatpush1.msra.mxu0 %v2185
    %2274 = vmatprep.subr.mxu0 %v2189
    %2275 = vmatpush1.msra.mxu0 %v2188
    %2276 = vmatprep.subr.mxu0 0.0
    %2277 = vmatpush1.msra.mxu0 0.0
    %2278 = vmatprep.subr.mxu0 0.0
    %2279 = vmatpush1.msra.mxu0 0.0
    %2280 = vmatprep.subr.mxu0 0.0
    %2281 = vmatpush1.msra.mxu0 0.0
    %2282 = vmatprep.subr.mxu0 0.0
    %2283 = vmatpush1.msra.mxu0 0.0
    %2284 = vmatprep.subr.mxu0 0.0
    %2285 = vmatpush1.msra.mxu0 0.0
    %2286 = vmatprep.subr.mxu0 0.0
    %2287 = vmatpush1.msra.mxu0 0.0
    %2288 = vmatprep.subr.mxu0 0.0
    %2289 = vmatpush1.msra.mxu0 0.0
    %2290 = vmatprep.subr.mxu0 0.0
    %2291 = vmatpush1.msra.mxu0 0.0
    %2292 = vmatprep.subr.mxu0 0.0
    %2293 = vmatpush1.msra.mxu0 0.0
    %2294 = vmatprep.subr.mxu0 0.0
    %2295 = vmatpush1.msra.mxu0 0.0
    %2296 = vmatprep.subr.mxu0 0.0
    %2297 = vmatpush1.msra.mxu0 0.0
    %2298 = vmatprep.subr.mxu0 0.0
    %2299 = vmatpush1.msra.mxu0 0.0
    %2300 = vmatprep.subr.mxu0 0.0
    %2301 = vmatpush1.msra.mxu0 0.0
    %2302 = vmatprep.subr.mxu0 0.0
    %2303 = vmatpush1.msra.mxu0 0.0
    %2304 = vmatprep.subr.mxu0 0.0
    %2305 = vmatpush1.msra.mxu0 0.0
    %2306 = vmatprep.subr.mxu0 0.0
    %2307 = vmatpush1.msra.mxu0 0.0
    %2308 = vmatprep.subr.mxu0 0.0
    %2309 = vmatpush1.msra.mxu0 0.0
    %2310 = vmatprep.subr.mxu0 0.0
    %2311 = vmatpush1.msra.mxu0 0.0
    %2312 = vmatprep.subr.mxu0 0.0
    %2313 = vmatpush1.msra.mxu0 0.0
    %2314 = vmatprep.subr.mxu0 0.0
    %2315 = vmatpush1.msra.mxu0 0.0
    %2316 = vmatprep.mubr.f32.mxu0 0.0
    %2317 = vmatmul.mubr.f32.gmra.mrb[0].mxu0 %v2247
    %v2318 = vpop.f32.mrb[0].mxu0
    %v2319 = vadd.f32 %v2234, %v2318
    %v2320 = vpop.f32.mrb[0].mxu0
    %v2321 = vadd.f32 %v2238, %v2320
    %2322 = vmatprep.mubr.f32.mxu0 0.0
    %2323 = vmatmul.mubr.f32.gmra.mrb[0].mxu0 %v2250
    %v2324 = vpop.f32.mrb[0].mxu0
    %v2325 = vadd.f32 %v2234, %v2324
    %v2326 = vpop.f32.mrb[0].mxu0
    %v2327 = vadd.f32 %v2238, %v2326
    %2328 = vdwg.mxu0
    %2329 = vmatprep.subr.mxu0 0.0
    %2330 = vmatpush1.msra.mxu0 %v2157
    %2331 = vmatprep.subr.mxu0 0.0
    %2332 = vmatpush1.msra.mxu0 %v2160
    %2333 = vmatprep.subr.mxu0 0.0
    %2334 = vmatpush1.msra.mxu0 %v2163
    %2335 = vmatprep.subr.mxu0 0.0
    %2336 = vmatpush1.msra.mxu0 %v2166
    %2337 = vmatprep.subr.mxu0 0.0
    %2338 = vmatpush1.msra.mxu0 %v2169
    %2339 = vmatprep.subr.mxu0 0.0
    %2340 = vmatpush1.msra.mxu0 %v2172
    %2341 = vmatprep.subr.mxu0 0.0
    %2342 = vmatpush1.msra.mxu0 %v2175
    %2343 = vmatprep.subr.mxu0 0.0
    %2344 = vmatpush1.msra.mxu0 %v2178
    %2345 = vmatprep.subr.mxu0 0.0
    %2346 = vmatpush1.msra.mxu0 %v2181
    %2347 = vmatprep.subr.mxu0 0.0
    %2348 = vmatpush1.msra.mxu0 %v2184
    %2349 = vmatprep.subr.mxu0 0.0
    %2350 = vmatpush1.msra.mxu0 %v2187
    %2351 = vmatprep.subr.mxu0 0.0
    %2352 = vmatpush1.msra.mxu0 %v2190
    %2353 = vmatprep.subr.mxu0 0.0
    %2354 = vmatpush1.msra.mxu0 0.0
    %2355 = vmatprep.subr.mxu0 0.0
    %2356 = vmatpush1.msra.mxu0 0.0
    %2357 = vmatprep.subr.mxu0 0.0
    %2358 = vmatpush1.msra.mxu0 0.0
    %2359 = vmatprep.subr.mxu0 0.0
    %2360 = vmatpush1.msra.mxu0 0.0
    %2361 = vmatprep.subr.mxu0 0.0
    %2362 = vmatpush1.msra.mxu0 0.0
    %2363 = vmatprep.subr.mxu0 0.0
    %2364 = vmatpush1.msra.mxu0 0.0
    %2365 = vmatprep.subr.mxu0 0.0
    %2366 = vmatpush1.msra.mxu0 0.0
    %2367 = vmatprep.subr.mxu0 0.0
    %2368 = vmatpush1.msra.mxu0 0.0
    %2369 = vmatprep.subr.mxu0 0.0
    %2370 = vmatpush1.msra.mxu0 0.0
    %2371 = vmatprep.subr.mxu0 0.0
    %2372 = vmatpush1.msra.mxu0 0.0
    %2373 = vmatprep.subr.mxu0 0.0
    %2374 = vmatpush1.msra.mxu0 0.0
    %2375 = vmatprep.subr.mxu0 0.0
    %2376 = vmatpush1.msra.mxu0 0.0
    %2377 = vmatprep.subr.mxu0 0.0
    %2378 = vmatpush1.msra.mxu0 0.0
    %2379 = vmatprep.subr.mxu0 0.0
    %2380 = vmatpush1.msra.mxu0 0.0
    %2381 = vmatprep.subr.mxu0 0.0
    %2382 = vmatpush1.msra.mxu0 0.0
    %2383 = vmatprep.subr.mxu0 0.0
    %2384 = vmatpush1.msra.mxu0 0.0
    %2385 = vmatprep.subr.mxu0 0.0
    %2386 = vmatpush1.msra.mxu0 0.0
    %2387 = vmatprep.subr.mxu0 0.0
    %2388 = vmatpush1.msra.mxu0 0.0
    %2389 = vmatprep.subr.mxu0 0.0
    %2390 = vmatpush1.msra.mxu0 0.0
    %2391 = vmatprep.subr.mxu0 0.0
    %2392 = vmatpush1.msra.mxu0 0.0
    %2393 = vmatprep.mubr.f32.mxu0 0.0
    %2394 = vmatmul.mubr.f32.gmra.mrb[0].mxu0 %v2247
    %v2395 = vpop.f32.mrb[0].mxu0
    %v2396 = vadd.f32 %v2242, %v2395
    %v2397 = vpop.f32.mrb[0].mxu0
    %2398 = vmatprep.mubr.f32.mxu0 0.0
    %2399 = vmatmul.mubr.f32.gmra.mrb[0].mxu0 %v2250
    %v2400 = vpop.f32.mrb[0].mxu0
    %v2401 = vadd.f32 %v2242, %v2400
    %v2402 = vpop.f32.mrb[0].mxu0
    %2403 = vdwg.mxu0
    %s2404 = scalar_lea.vmem [#allocation6], 2
    %v2405 = vld [vmem:[%s2404] sm:$0x3]
    %s2406 = scalar_lea.vmem [#allocation8], 2
    %v2407 = vld [vmem:[%s2406] sm:$0x3]
    %v2409 = vsel %vm278, %v2405, 0
    %2411 = vmatprep.subr.mxu0 %v2193
    %2412 = vmatpush1.msra.mxu0 %v2192
    %2413 = vmatprep.subr.mxu0 %v2196
    %2414 = vmatpush1.msra.mxu0 %v2195
    %2415 = vmatprep.subr.mxu0 %v2199
    %2416 = vmatpush1.msra.mxu0 %v2198
    %2417 = vmatprep.subr.mxu0 %v2202
    %2418 = vmatpush1.msra.mxu0 %v2201
    %2419 = vmatprep.subr.mxu0 %v2205
    %2420 = vmatpush1.msra.mxu0 %v2204
    %2421 = vmatprep.subr.mxu0 %v2208
    %2422 = vmatpush1.msra.mxu0 %v2207
    %2423 = vmatprep.subr.mxu0 %v2211
    %2424 = vmatpush1.msra.mxu0 %v2210
    %2425 = vmatprep.subr.mxu0 %v2214
    %2426 = vmatpush1.msra.mxu0 %v2213
    %2427 = vmatprep.subr.mxu0 %v2217
    %2428 = vmatpush1.msra.mxu0 %v2216
    %2429 = vmatprep.subr.mxu0 %v2220
    %2430 = vmatpush1.msra.mxu0 %v2219
    %2431 = vmatprep.subr.mxu0 %v2223
    %2432 = vmatpush1.msra.mxu0 %v2222
    %2433 = vmatprep.subr.mxu0 %v2226
    %2434 = vmatpush1.msra.mxu0 %v2225
    %2435 = vmatprep.subr.mxu0 0.0
    %2436 = vmatpush1.msra.mxu0 0.0
    %2437 = vmatprep.subr.mxu0 0.0
    %2438 = vmatpush1.msra.mxu0 0.0
    %2439 = vmatprep.subr.mxu0 0.0
    %2440 = vmatpush1.msra.mxu0 0.0
    %2441 = vmatprep.subr.mxu0 0.0
    %2442 = vmatpush1.msra.mxu0 0.0
    %2443 = vmatprep.subr.mxu0 0.0
    %2444 = vmatpush1.msra.mxu0 0.0
    %2445 = vmatprep.subr.mxu0 0.0
    %2446 = vmatpush1.msra.mxu0 0.0
    %2447 = vmatprep.subr.mxu0 0.0
    %2448 = vmatpush1.msra.mxu0 0.0
    %2449 = vmatprep.subr.mxu0 0.0
    %2450 = vmatpush1.msra.mxu0 0.0
    %2451 = vmatprep.subr.mxu0 0.0
    %2452 = vmatpush1.msra.mxu0 0.0
    %2453 = vmatprep.subr.mxu0 0.0
    %2454 = vmatpush1.msra.mxu0 0.0
    %2455 = vmatprep.subr.mxu0 0.0
    %2456 = vmatpush1.msra.mxu0 0.0
    %2457 = vmatprep.subr.mxu0 0.0
    %2458 = vmatpush1.msra.mxu0 0.0
    %2459 = vmatprep.subr.mxu0 0.0
    %2460 = vmatpush1.msra.mxu0 0.0
    %2461 = vmatprep.subr.mxu0 0.0
    %2462 = vmatpush1.msra.mxu0 0.0
    %2463 = vmatprep.subr.mxu0 0.0
    %2464 = vmatpush1.msra.mxu0 0.0
    %2465 = vmatprep.subr.mxu0 0.0
    %2466 = vmatpush1.msra.mxu0 0.0
    %2467 = vmatprep.subr.mxu0 0.0
    %2468 = vmatpush1.msra.mxu0 0.0
    %2469 = vmatprep.subr.mxu0 0.0
    %2470 = vmatpush1.msra.mxu0 0.0
    %2471 = vmatprep.subr.mxu0 0.0
    %2472 = vmatpush1.msra.mxu0 0.0
    %2473 = vmatprep.subr.mxu0 0.0
    %2474 = vmatpush1.msra.mxu0 0.0
    %2475 = vmatprep.mubr.f32.mxu0 0.0
    %2476 = vmatmul.mubr.f32.gmra.mrb[0].mxu0 %v2409
    %v2477 = vpop.f32.mrb[0].mxu0
    %v2478 = vadd.f32 0.0, %v2477
    %v2479 = vpop.f32.mrb[0].mxu0
    %v2480 = vadd.f32 0.0, %v2479
    %2481 = vdwg.mxu0
    %2482 = vmatprep.subr.mxu0 0.0
    %2483 = vmatpush1.msra.mxu0 %v2194
    %2484 = vmatprep.subr.mxu0 0.0
    %2485 = vmatpush1.msra.mxu0 %v2197
    %2486 = vmatprep.subr.mxu0 0.0
    %2487 = vmatpush1.msra.mxu0 %v2200
    %2488 = vmatprep.subr.mxu0 0.0
    %2489 = vmatpush1.msra.mxu0 %v2203
    %2490 = vmatprep.subr.mxu0 0.0
    %2491 = vmatpush1.msra.mxu0 %v2206
    %2492 = vmatprep.subr.mxu0 0.0
    %2493 = vmatpush1.msra.mxu0 %v2209
    %2494 = vmatprep.subr.mxu0 0.0
    %2495 = vmatpush1.msra.mxu0 %v2212
    %2496 = vmatprep.subr.mxu0 0.0
    %2497 = vmatpush1.msra.mxu0 %v2215
    %2498 = vmatprep.subr.mxu0 0.0
    %2499 = vmatpush1.msra.mxu0 %v2218
    %2500 = vmatprep.subr.mxu0 0.0
    %2501 = vmatpush1.msra.mxu0 %v2221
    %2502 = vmatprep.subr.mxu0 0.0
    %2503 = vmatpush1.msra.mxu0 %v2224
    %2504 = vmatprep.subr.mxu0 0.0
    %2505 = vmatpush1.msra.mxu0 %v2227
    %2506 = vmatprep.subr.mxu0 0.0
    %2507 = vmatpush1.msra.mxu0 0.0
    %2508 = vmatprep.subr.mxu0 0.0
    %2509 = vmatpush1.msra.mxu0 0.0
    %2510 = vmatprep.subr.mxu0 0.0
    %2511 = vmatpush1.msra.mxu0 0.0
    %2512 = vmatprep.subr.mxu0 0.0
    %2513 = vmatpush1.msra.mxu0 0.0
    %2514 = vmatprep.subr.mxu0 0.0
    %2515 = vmatpush1.msra.mxu0 0.0
    %2516 = vmatprep.subr.mxu0 0.0
    %2517 = vmatpush1.msra.mxu0 0.0
    %2518 = vmatprep.subr.mxu0 0.0
    %2519 = vmatpush1.msra.mxu0 0.0
    %2520 = vmatprep.subr.mxu0 0.0
    %2521 = vmatpush1.msra.mxu0 0.0
    %2522 = vmatprep.subr.mxu0 0.0
    %2523 = vmatpush1.msra.mxu0 0.0
    %2524 = vmatprep.subr.mxu0 0.0
    %2525 = vmatpush1.msra.mxu0 0.0
    %2526 = vmatprep.subr.mxu0 0.0
    %2527 = vmatpush1.msra.mxu0 0.0
    %2528 = vmatprep.subr.mxu0 0.0
    %2529 = vmatpush1.msra.mxu0 0.0
    %2530 = vmatprep.subr.mxu0 0.0
    %2531 = vmatpush1.msra.mxu0 0.0
    %2532 = vmatprep.subr.mxu0 0.0
    %2533 = vmatpush1.msra.mxu0 0.0
    %2534 = vmatprep.subr.mxu0 0.0
    %2535 = vmatpush1.msra.mxu0 0.0
    %2536 = vmatprep.subr.mxu0 0.0
    %2537 = vmatpush1.msra.mxu0 0.0
    %2538 = vmatprep.subr.mxu0 0.0
    %2539 = vmatpush1.msra.mxu0 0.0
    %2540 = vmatprep.subr.mxu0 0.0
    %2541 = vmatpush1.msra.mxu0 0.0
    %2542 = vmatprep.subr.mxu0 0.0
    %2543 = vmatpush1.msra.mxu0 0.0
    %2544 = vmatprep.subr.mxu0 0.0
    %2545 = vmatpush1.msra.mxu0 0.0
    %2546 = vmatprep.mubr.f32.mxu0 0.0
    %2547 = vmatmul.mubr.f32.gmra.mrb[0].mxu0 %v2409
    %v2548 = vpop.f32.mrb[0].mxu0
    %v2549 = vadd.f32 0.0, %v2548
    %v2550 = vpop.f32.mrb[0].mxu0
    %2551 = vdwg.mxu0
    %v2552 = vadd.f32 %v2319, %v2478
    %v2553 = vadd.f32 %v2321, %v2480
    %v2554 = vadd.f32 %v2396, %v2549
    %v2555 = vxor.u32 %v2552, 2147483648
    %v2556 = vmul.f32 %v2555, 1.442695
    %v2557 = vpow.pop %v2556
    %v2558 = vadd.f32 %v2557, 1.0
    %v2559 = vrcp.pop %v2558
    %v2560 = vmul.f32 1.0, %v2559
    %v2561 = vxor.u32 %v2553, 2147483648
    %v2562 = vmul.f32 %v2561, 1.442695
    %v2563 = vpow.pop %v2562
    %v2564 = vadd.f32 %v2563, 1.0
    %v2565 = vrcp.pop %v2564
    %v2566 = vmul.f32 1.0, %v2565
    %v2567 = vtanh.pop %v2553
    %v2568 = vtanh.pop %v2554
    %v2569 = vxor.u32 %v2554, 2147483648
    %v2570 = vmul.f32 %v2569, 1.442695
    %v2571 = vpow.pop %v2570
    %v2572 = vadd.f32 %v2571, 1.0
    %v2573 = vrcp.pop %v2572
    %v2574 = vmul.f32 1.0, %v2573
    %2576 = vrot.lane.b32.xlu0 %v2407, 96
    %v2577 = vpop.permute.xlu0 %2576
    %v2579 = vmul.f32 %v2560, %v2577
    %v2580 = vmul.f32 %v2566, %v2577
    %2583 = vrot.lane.b32.xlu0 %v2567, 64
    %v2584 = vpop.permute.xlu0 %2583
    %2585 = vrot.lane.b32.xlu0 %v2568, 64
    %v2586 = vpop.permute.xlu0 %2585
    %v2587 = vsel %vm618, %v2584, %v2586
    %v2589 = vmul.f32 %v2560, %v2587
    %2591 = vrot.lane.b32.xlu0 %v2589, 96
    %v2592 = vpop.permute.xlu0 %2591
    %v2594 = vadd.f32 %v2579, %v2592
    %v2595 = vadd.f32 %v2580, %v2592
    %v2596 = vtanh.pop %v2594
    %v2597 = vtanh.pop %v2595
    %2600 = vrot.lane.b32.xlu0 %v2596, 64
    %v2601 = vpop.permute.xlu0 %2600
    %2602 = vrot.lane.b32.xlu0 %v2597, 64
    %v2603 = vpop.permute.xlu0 %2602
    %v2604 = vsel %vm618, %v2601, %v2603
    %v2606 = vmul.f32 %v2574, %v2604
    %2608 = vrot.lane.b32.xlu0 %v2606, 96
    %v2609 = vpop.permute.xlu0 %2608
    %2611 = vst.msk [vmem:[#allocation2] sm:$0x3] %vm643, %v2609
    %v2612 = vsel %vm278, %v2609, 0
    %2614 = vmatprep.subr.mxu0 %v2193
    %2615 = vmatpush1.msra.mxu0 %v2192
    %2616 = vmatprep.subr.mxu0 %v2196
    %2617 = vmatpush1.msra.mxu0 %v2195
    %2618 = vmatprep.subr.mxu0 %v2199
    %2619 = vmatpush1.msra.mxu0 %v2198
    %2620 = vmatprep.subr.mxu0 %v2202
    %2621 = vmatpush1.msra.mxu0 %v2201
    %2622 = vmatprep.subr.mxu0 %v2205
    %2623 = vmatpush1.msra.mxu0 %v2204
    %2624 = vmatprep.subr.mxu0 %v2208
    %2625 = vmatpush1.msra.mxu0 %v2207
    %2626 = vmatprep.subr.mxu0 %v2211
    %2627 = vmatpush1.msra.mxu0 %v2210
    %2628 = vmatprep.subr.mxu0 %v2214
    %2629 = vmatpush1.msra.mxu0 %v2213
    %2630 = vmatprep.subr.mxu0 %v2217
    %2631 = vmatpush1.msra.mxu0 %v2216
    %2632 = vmatprep.subr.mxu0 %v2220
    %2633 = vmatpush1.msra.mxu0 %v2219
    %2634 = vmatprep.subr.mxu0 %v2223
    %2635 = vmatpush1.msra.mxu0 %v2222
    %2636 = vmatprep.subr.mxu0 %v2226
    %2637 = vmatpush1.msra.mxu0 %v2225
    %2638 = vmatprep.subr.mxu0 0.0
    %2639 = vmatpush1.msra.mxu0 0.0
    %2640 = vmatprep.subr.mxu0 0.0
    %2641 = vmatpush1.msra.mxu0 0.0
    %2642 = vmatprep.subr.mxu0 0.0
    %2643 = vmatpush1.msra.mxu0 0.0
    %2644 = vmatprep.subr.mxu0 0.0
    %2645 = vmatpush1.msra.mxu0 0.0
    %2646 = vmatprep.subr.mxu0 0.0
    %2647 = vmatpush1.msra.mxu0 0.0
    %2648 = vmatprep.subr.mxu0 0.0
    %2649 = vmatpush1.msra.mxu0 0.0
    %2650 = vmatprep.subr.mxu0 0.0
    %2651 = vmatpush1.msra.mxu0 0.0
    %2652 = vmatprep.subr.mxu0 0.0
    %2653 = vmatpush1.msra.mxu0 0.0
    %2654 = vmatprep.subr.mxu0 0.0
    %2655 = vmatpush1.msra.mxu0 0.0
    %2656 = vmatprep.subr.mxu0 0.0
    %2657 = vmatpush1.msra.mxu0 0.0
    %2658 = vmatprep.subr.mxu0 0.0
    %2659 = vmatpush1.msra.mxu0 0.0
    %2660 = vmatprep.subr.mxu0 0.0
    %2661 = vmatpush1.msra.mxu0 0.0
    %2662 = vmatprep.subr.mxu0 0.0
    %2663 = vmatpush1.msra.mxu0 0.0
    %2664 = vmatprep.subr.mxu0 0.0
    %2665 = vmatpush1.msra.mxu0 0.0
    %2666 = vmatprep.subr.mxu0 0.0
    %2667 = vmatpush1.msra.mxu0 0.0
    %2668 = vmatprep.subr.mxu0 0.0
    %2669 = vmatpush1.msra.mxu0 0.0
    %2670 = vmatprep.subr.mxu0 0.0
    %2671 = vmatpush1.msra.mxu0 0.0
    %2672 = vmatprep.subr.mxu0 0.0
    %2673 = vmatpush1.msra.mxu0 0.0
    %2674 = vmatprep.subr.mxu0 0.0
    %2675 = vmatpush1.msra.mxu0 0.0
    %2676 = vmatprep.subr.mxu0 0.0
    %2677 = vmatpush1.msra.mxu0 0.0
    %2678 = vmatprep.mubr.f32.mxu0 0.0
    %2679 = vmatmul.mubr.f32.gmra.mrb[0].mxu0 %v2612
    %v2680 = vpop.f32.mrb[0].mxu0
    %v2681 = vadd.f32 0.0, %v2680
    %v2682 = vpop.f32.mrb[0].mxu0
    %v2683 = vadd.f32 0.0, %v2682
    %2684 = vdwg.mxu0
    %2685 = vmatprep.subr.mxu0 0.0
    %2686 = vmatpush1.msra.mxu0 %v2194
    %2687 = vmatprep.subr.mxu0 0.0
    %2688 = vmatpush1.msra.mxu0 %v2197
    %2689 = vmatprep.subr.mxu0 0.0
    %2690 = vmatpush1.msra.mxu0 %v2200
    %2691 = vmatprep.subr.mxu0 0.0
    %2692 = vmatpush1.msra.mxu0 %v2203
    %2693 = vmatprep.subr.mxu0 0.0
    %2694 = vmatpush1.msra.mxu0 %v2206
    %2695 = vmatprep.subr.mxu0 0.0
    %2696 = vmatpush1.msra.mxu0 %v2209
    %2697 = vmatprep.subr.mxu0 0.0
    %2698 = vmatpush1.msra.mxu0 %v2212
    %2699 = vmatprep.subr.mxu0 0.0
    %2700 = vmatpush1.msra.mxu0 %v2215
    %2701 = vmatprep.subr.mxu0 0.0
    %2702 = vmatpush1.msra.mxu0 %v2218
    %2703 = vmatprep.subr.mxu0 0.0
    %2704 = vmatpush1.msra.mxu0 %v2221
    %2705 = vmatprep.subr.mxu0 0.0
    %2706 = vmatpush1.msra.mxu0 %v2224
    %2707 = vmatprep.subr.mxu0 0.0
    %2708 = vmatpush1.msra.mxu0 %v2227
    %2709 = vmatprep.subr.mxu0 0.0
    %2710 = vmatpush1.msra.mxu0 0.0
    %2711 = vmatprep.subr.mxu0 0.0
    %2712 = vmatpush1.msra.mxu0 0.0
    %2713 = vmatprep.subr.mxu0 0.0
    %2714 = vmatpush1.msra.mxu0 0.0
    %2715 = vmatprep.subr.mxu0 0.0
    %2716 = vmatpush1.msra.mxu0 0.0
    %2717 = vmatprep.subr.mxu0 0.0
    %2718 = vmatpush1.msra.mxu0 0.0
    %2719 = vmatprep.subr.mxu0 0.0
    %2720 = vmatpush1.msra.mxu0 0.0
    %2721 = vmatprep.subr.mxu0 0.0
    %2722 = vmatpush1.msra.mxu0 0.0
    %2723 = vmatprep.subr.mxu0 0.0
    %2724 = vmatpush1.msra.mxu0 0.0
    %2725 = vmatprep.subr.mxu0 0.0
    %2726 = vmatpush1.msra.mxu0 0.0
    %2727 = vmatprep.subr.mxu0 0.0
    %2728 = vmatpush1.msra.mxu0 0.0
    %2729 = vmatprep.subr.mxu0 0.0
    %2730 = vmatpush1.msra.mxu0 0.0
    %2731 = vmatprep.subr.mxu0 0.0
    %2732 = vmatpush1.msra.mxu0 0.0
    %2733 = vmatprep.subr.mxu0 0.0
    %2734 = vmatpush1.msra.mxu0 0.0
    %2735 = vmatprep.subr.mxu0 0.0
    %2736 = vmatpush1.msra.mxu0 0.0
    %2737 = vmatprep.subr.mxu0 0.0
    %2738 = vmatpush1.msra.mxu0 0.0
    %2739 = vmatprep.subr.mxu0 0.0
    %2740 = vmatpush1.msra.mxu0 0.0
    %2741 = vmatprep.subr.mxu0 0.0
    %2742 = vmatpush1.msra.mxu0 0.0
    %2743 = vmatprep.subr.mxu0 0.0
    %2744 = vmatpush1.msra.mxu0 0.0
    %2745 = vmatprep.subr.mxu0 0.0
    %2746 = vmatpush1.msra.mxu0 0.0
    %2747 = vmatprep.subr.mxu0 0.0
    %2748 = vmatpush1.msra.mxu0 0.0
    %2749 = vmatprep.mubr.f32.mxu0 0.0
    %2750 = vmatmul.mubr.f32.gmra.mrb[0].mxu0 %v2612
    %v2751 = vpop.f32.mrb[0].mxu0
    %v2752 = vadd.f32 0.0, %v2751
    %v2753 = vpop.f32.mrb[0].mxu0
    %2754 = vdwg.mxu0
    %v2758 = vrot.slane %v2681, 6
    %v2759 = vrot.slane %v2683, 6
    %v2760 = vrot.slane %v2752, 6
    %v2764 = vadd.f32 %v2319, %v2758
    %v2765 = vadd.f32 %v2321, %v2759
    %v2766 = vadd.f32 %v2396, %v2760
    %v2767 = vxor.u32 %v2764, 2147483648
    %v2768 = vmul.f32 %v2767, 1.442695
    %v2769 = vpow.pop %v2768
    %v2770 = vadd.f32 %v2769, 1.0
    %v2771 = vrcp.pop %v2770
    %v2772 = vmul.f32 1.0, %v2771
    %v2773 = vxor.u32 %v2765, 2147483648
    %v2774 = vmul.f32 %v2773, 1.442695
    %v2775 = vpow.pop %v2774
    %v2776 = vadd.f32 %v2775, 1.0
    %v2777 = vrcp.pop %v2776
    %v2778 = vmul.f32 1.0, %v2777
    %v2779 = vtanh.pop %v2765
    %v2780 = vtanh.pop %v2766
    %v2781 = vxor.u32 %v2766, 2147483648
    %v2782 = vmul.f32 %v2781, 1.442695
    %v2783 = vpow.pop %v2782
    %v2784 = vadd.f32 %v2783, 1.0
    %v2785 = vrcp.pop %v2784
    %v2786 = vmul.f32 1.0, %v2785
    %v2789 = vrot.slane %v2594, 6
    %v2790 = vrot.slane %v2595, 6
    %v2793 = vmul.f32 %v2772, %v2789
    %v2794 = vmul.f32 %v2778, %v2790
    %2797 = vrot.lane.b32.xlu0 %v2779, 64
    %v2798 = vpop.permute.xlu0 %2797
    %2799 = vrot.lane.b32.xlu0 %v2780, 64
    %v2800 = vpop.permute.xlu0 %2799
    %v2801 = vsel %vm618, %v2798, %v2800
    %v2803 = vmul.f32 %v2772, %v2801
    %2805 = vrot.lane.b32.xlu0 %v2803, 96
    %v2806 = vpop.permute.xlu0 %2805
    %v2808 = vadd.f32 %v2793, %v2806
    %v2809 = vadd.f32 %v2794, %v2806
    %v2810 = vtanh.pop %v2808
    %v2811 = vtanh.pop %v2809
    %2814 = vrot.lane.b32.xlu0 %v2810, 64
    %v2815 = vpop.permute.xlu0 %2814
    %2816 = vrot.lane.b32.xlu0 %v2811, 64
    %v2817 = vpop.permute.xlu0 %2816
    %v2818 = vsel %vm618, %v2815, %v2817
    %v2820 = vmul.f32 %v2786, %v2818
    %2822 = vrot.lane.b32.xlu0 %v2820, 96
    %v2823 = vpop.permute.xlu0 %2822
    %2825 = vst.msk [vmem:[#allocation2] sm:$0xc] %vm858, %v2823
    %v2826 = vrot.slane %v2820, 2
    %2827 = vrot.lane.b32.xlu0 %v2826, 96
    %v2828 = vpop.permute.xlu0 %2827
    %v2829 = vsel %vm278, %v2828, 0
    %2831 = vmatprep.subr.mxu0 %v2193
    %2832 = vmatpush1.msra.mxu0 %v2192
    %2833 = vmatprep.subr.mxu0 %v2196
    %2834 = vmatpush1.msra.mxu0 %v2195
    %2835 = vmatprep.subr.mxu0 %v2199
    %2836 = vmatpush1.msra.mxu0 %v2198
    %2837 = vmatprep.subr.mxu0 %v2202
    %2838 = vmatpush1.msra.mxu0 %v2201
    %2839 = vmatprep.subr.mxu0 %v2205
    %2840 = vmatpush1.msra.mxu0 %v2204
    %2841 = vmatprep.subr.mxu0 %v2208
    %2842 = vmatpush1.msra.mxu0 %v2207
    %2843 = vmatprep.subr.mxu0 %v2211
    %2844 = vmatpush1.msra.mxu0 %v2210
    %2845 = vmatprep.subr.mxu0 %v2214
    %2846 = vmatpush1.msra.mxu0 %v2213
    %2847 = vmatprep.subr.mxu0 %v2217
    %2848 = vmatpush1.msra.mxu0 %v2216
    %2849 = vmatprep.subr.mxu0 %v2220
    %2850 = vmatpush1.msra.mxu0 %v2219
    %2851 = vmatprep.subr.mxu0 %v2223
    %2852 = vmatpush1.msra.mxu0 %v2222
    %2853 = vmatprep.subr.mxu0 %v2226
    %2854 = vmatpush1.msra.mxu0 %v2225
    %2855 = vmatprep.subr.mxu0 0.0
    %2856 = vmatpush1.msra.mxu0 0.0
    %2857 = vmatprep.subr.mxu0 0.0
    %2858 = vmatpush1.msra.mxu0 0.0
    %2859 = vmatprep.subr.mxu0 0.0
    %2860 = vmatpush1.msra.mxu0 0.0
    %2861 = vmatprep.subr.mxu0 0.0
    %2862 = vmatpush1.msra.mxu0 0.0
    %2863 = vmatprep.subr.mxu0 0.0
    %2864 = vmatpush1.msra.mxu0 0.0
    %2865 = vmatprep.subr.mxu0 0.0
    %2866 = vmatpush1.msra.mxu0 0.0
    %2867 = vmatprep.subr.mxu0 0.0
    %2868 = vmatpush1.msra.mxu0 0.0
    %2869 = vmatprep.subr.mxu0 0.0
    %2870 = vmatpush1.msra.mxu0 0.0
    %2871 = vmatprep.subr.mxu0 0.0
    %2872 = vmatpush1.msra.mxu0 0.0
    %2873 = vmatprep.subr.mxu0 0.0
    %2874 = vmatpush1.msra.mxu0 0.0
    %2875 = vmatprep.subr.mxu0 0.0
    %2876 = vmatpush1.msra.mxu0 0.0
    %2877 = vmatprep.subr.mxu0 0.0
    %2878 = vmatpush1.msra.mxu0 0.0
    %2879 = vmatprep.subr.mxu0 0.0
    %2880 = vmatpush1.msra.mxu0 0.0
    %2881 = vmatprep.subr.mxu0 0.0
    %2882 = vmatpush1.msra.mxu0 0.0
    %2883 = vmatprep.subr.mxu0 0.0
    %2884 = vmatpush1.msra.mxu0 0.0
    %2885 = vmatprep.subr.mxu0 0.0
    %2886 = vmatpush1.msra.mxu0 0.0
    %2887 = vmatprep.subr.mxu0 0.0
    %2888 = vmatpush1.msra.mxu0 0.0
    %2889 = vmatprep.subr.mxu0 0.0
    %2890 = vmatpush1.msra.mxu0 0.0
    %2891 = vmatprep.subr.mxu0 0.0
    %2892 = vmatpush1.msra.mxu0 0.0
    %2893 = vmatprep.subr.mxu0 0.0
    %2894 = vmatpush1.msra.mxu0 0.0
    %2895 = vmatprep.mubr.f32.mxu0 0.0
    %2896 = vmatmul.mubr.f32.gmra.mrb[0].mxu0 %v2829
    %v2897 = vpop.f32.mrb[0].mxu0
    %v2898 = vadd.f32 0.0, %v2897
    %v2899 = vpop.f32.mrb[0].mxu0
    %v2900 = vadd.f32 0.0, %v2899
    %2901 = vdwg.mxu0
    %2902 = vmatprep.subr.mxu0 0.0
    %2903 = vmatpush1.msra.mxu0 %v2194
    %2904 = vmatprep.subr.mxu0 0.0
    %2905 = vmatpush1.msra.mxu0 %v2197
    %2906 = vmatprep.subr.mxu0 0.0
    %2907 = vmatpush1.msra.mxu0 %v2200
    %2908 = vmatprep.subr.mxu0 0.0
    %2909 = vmatpush1.msra.mxu0 %v2203
    %2910 = vmatprep.subr.mxu0 0.0
    %2911 = vmatpush1.msra.mxu0 %v2206
    %2912 = vmatprep.subr.mxu0 0.0
    %2913 = vmatpush1.msra.mxu0 %v2209
    %2914 = vmatprep.subr.mxu0 0.0
    %2915 = vmatpush1.msra.mxu0 %v2212
    %2916 = vmatprep.subr.mxu0 0.0
    %2917 = vmatpush1.msra.mxu0 %v2215
    %2918 = vmatprep.subr.mxu0 0.0
    %2919 = vmatpush1.msra.mxu0 %v2218
    %2920 = vmatprep.subr.mxu0 0.0
    %2921 = vmatpush1.msra.mxu0 %v2221
    %2922 = vmatprep.subr.mxu0 0.0
    %2923 = vmatpush1.msra.mxu0 %v2224
    %2924 = vmatprep.subr.mxu0 0.0
    %2925 = vmatpush1.msra.mxu0 %v2227
    %2926 = vmatprep.subr.mxu0 0.0
    %2927 = vmatpush1.msra.mxu0 0.0
    %2928 = vmatprep.subr.mxu0 0.0
    %2929 = vmatpush1.msra.mxu0 0.0
    %2930 = vmatprep.subr.mxu0 0.0
    %2931 = vmatpush1.msra.mxu0 0.0
    %2932 = vmatprep.subr.mxu0 0.0
    %2933 = vmatpush1.msra.mxu0 0.0
    %2934 = vmatprep.subr.mxu0 0.0
    %2935 = vmatpush1.msra.mxu0 0.0
    %2936 = vmatprep.subr.mxu0 0.0
    %2937 = vmatpush1.msra.mxu0 0.0
    %2938 = vmatprep.subr.mxu0 0.0
    %2939 = vmatpush1.msra.mxu0 0.0
    %2940 = vmatprep.subr.mxu0 0.0
    %2941 = vmatpush1.msra.mxu0 0.0
    %2942 = vmatprep.subr.mxu0 0.0
    %2943 = vmatpush1.msra.mxu0 0.0
    %2944 = vmatprep.subr.mxu0 0.0
    %2945 = vmatpush1.msra.mxu0 0.0
    %2946 = vmatprep.subr.mxu0 0.0
    %2947 = vmatpush1.msra.mxu0 0.0
    %2948 = vmatprep.subr.mxu0 0.0
    %2949 = vmatpush1.msra.mxu0 0.0
    %2950 = vmatprep.subr.mxu0 0.0
    %2951 = vmatpush1.msra.mxu0 0.0
    %2952 = vmatprep.subr.mxu0 0.0
    %2953 = vmatpush1.msra.mxu0 0.0
    %2954 = vmatprep.subr.mxu0 0.0
    %2955 = vmatpush1.msra.mxu0 0.0
    %2956 = vmatprep.subr.mxu0 0.0
    %2957 = vmatpush1.msra.mxu0 0.0
    %2958 = vmatprep.subr.mxu0 0.0
    %2959 = vmatpush1.msra.mxu0 0.0
    %2960 = vmatprep.subr.mxu0 0.0
    %2961 = vmatpush1.msra.mxu0 0.0
    %2962 = vmatprep.subr.mxu0 0.0
    %2963 = vmatpush1.msra.mxu0 0.0
    %2964 = vmatprep.subr.mxu0 0.0
    %2965 = vmatpush1.msra.mxu0 0.0
    %2966 = vmatprep.mubr.f32.mxu0 0.0
    %2967 = vmatmul.mubr.f32.gmra.mrb[0].mxu0 %v2829
    %v2968 = vpop.f32.mrb[0].mxu0
    %v2969 = vadd.f32 0.0, %v2968
    %v2970 = vpop.f32.mrb[0].mxu0
    %2971 = vdwg.mxu0
    %v2975 = vrot.slane %v2898, 4
    %v2976 = vrot.slane %v2900, 4
    %v2977 = vrot.slane %v2969, 4
    %v2981 = vadd.f32 %v2319, %v2975
    %v2982 = vadd.f32 %v2321, %v2976
    %v2983 = vadd.f32 %v2396, %v2977
    %v2984 = vxor.u32 %v2981, 2147483648
    %v2985 = vmul.f32 %v2984, 1.442695
    %v2986 = vpow.pop %v2985
    %v2987 = vadd.f32 %v2986, 1.0
    %v2988 = vrcp.pop %v2987
    %v2989 = vmul.f32 1.0, %v2988
    %v2990 = vxor.u32 %v2982, 2147483648
    %v2991 = vmul.f32 %v2990, 1.442695
    %v2992 = vpow.pop %v2991
    %v2993 = vadd.f32 %v2992, 1.0
    %v2994 = vrcp.pop %v2993
    %v2995 = vmul.f32 1.0, %v2994
    %v2996 = vtanh.pop %v2982
    %v2997 = vtanh.pop %v2983
    %v2998 = vxor.u32 %v2983, 2147483648
    %v2999 = vmul.f32 %v2998, 1.442695
    %v3000 = vpow.pop %v2999
    %v3001 = vadd.f32 %v3000, 1.0
    %v3002 = vrcp.pop %v3001
    %v3003 = vmul.f32 1.0, %v3002
    %v3006 = vrot.slane %v2808, 6
    %v3007 = vrot.slane %v2809, 6
    %v3010 = vmul.f32 %v2989, %v3006
    %v3011 = vmul.f32 %v2995, %v3007
    %3014 = vrot.lane.b32.xlu0 %v2996, 64
    %v3015 = vpop.permute.xlu0 %3014
    %3016 = vrot.lane.b32.xlu0 %v2997, 64
    %v3017 = vpop.permute.xlu0 %3016
    %v3018 = vsel %vm618, %v3015, %v3017
    %v3020 = vmul.f32 %v2989, %v3018
    %3022 = vrot.lane.b32.xlu0 %v3020, 96
    %v3023 = vpop.permute.xlu0 %3022
    %v3025 = vadd.f32 %v3010, %v3023
    %v3026 = vadd.f32 %v3011, %v3023
    %v3027 = vtanh.pop %v3025
    %v3028 = vtanh.pop %v3026
    %3031 = vrot.lane.b32.xlu0 %v3027, 64
    %v3032 = vpop.permute.xlu0 %3031
    %3033 = vrot.lane.b32.xlu0 %v3028, 64
    %v3034 = vpop.permute.xlu0 %3033
    %v3035 = vsel %vm618, %v3032, %v3034
    %v3037 = vmul.f32 %v3003, %v3035
    %3039 = vrot.lane.b32.xlu0 %v3037, 96
    %v3040 = vpop.permute.xlu0 %3039
    %3042 = vst.msk [vmem:[#allocation2] sm:$0x30] %vm1076, %v3040
    %v3043 = vrot.slane %v3037, 4
    %3044 = vrot.lane.b32.xlu0 %v3043, 96
    %v3045 = vpop.permute.xlu0 %3044
    %v3046 = vsel %vm278, %v3045, 0
    %3048 = vmatprep.subr.mxu0 %v2193
    %3049 = vmatpush1.msra.mxu0 %v2192
    %3050 = vmatprep.subr.mxu0 %v2196
    %3051 = vmatpush1.msra.mxu0 %v2195
    %3052 = vmatprep.subr.mxu0 %v2199
    %3053 = vmatpush1.msra.mxu0 %v2198
    %3054 = vmatprep.subr.mxu0 %v2202
    %3055 = vmatpush1.msra.mxu0 %v2201
    %3056 = vmatprep.subr.mxu0 %v2205
    %3057 = vmatpush1.msra.mxu0 %v2204
    %3058 = vmatprep.subr.mxu0 %v2208
    %3059 = vmatpush1.msra.mxu0 %v2207
    %3060 = vmatprep.subr.mxu0 %v2211
    %3061 = vmatpush1.msra.mxu0 %v2210
    %3062 = vmatprep.subr.mxu0 %v2214
    %3063 = vmatpush1.msra.mxu0 %v2213
    %3064 = vmatprep.subr.mxu0 %v2217
    %3065 = vmatpush1.msra.mxu0 %v2216
    %3066 = vmatprep.subr.mxu0 %v2220
    %3067 = vmatpush1.msra.mxu0 %v2219
    %3068 = vmatprep.subr.mxu0 %v2223
    %3069 = vmatpush1.msra.mxu0 %v2222
    %3070 = vmatprep.subr.mxu0 %v2226
    %3071 = vmatpush1.msra.mxu0 %v2225
    %3072 = vmatprep.subr.mxu0 0.0
    %3073 = vmatpush1.msra.mxu0 0.0
    %3074 = vmatprep.subr.mxu0 0.0
    %3075 = vmatpush1.msra.mxu0 0.0
    %3076 = vmatprep.subr.mxu0 0.0
    %3077 = vmatpush1.msra.mxu0 0.0
    %3078 = vmatprep.subr.mxu0 0.0
    %3079 = vmatpush1.msra.mxu0 0.0
    %3080 = vmatprep.subr.mxu0 0.0
    %3081 = vmatpush1.msra.mxu0 0.0
    %3082 = vmatprep.subr.mxu0 0.0
    %3083 = vmatpush1.msra.mxu0 0.0
    %3084 = vmatprep.subr.mxu0 0.0
    %3085 = vmatpush1.msra.mxu0 0.0
    %3086 = vmatprep.subr.mxu0 0.0
    %3087 = vmatpush1.msra.mxu0 0.0
    %3088 = vmatprep.subr.mxu0 0.0
    %3089 = vmatpush1.msra.mxu0 0.0
    %3090 = vmatprep.subr.mxu0 0.0
    %3091 = vmatpush1.msra.mxu0 0.0
    %3092 = vmatprep.subr.mxu0 0.0
    %3093 = vmatpush1.msra.mxu0 0.0
    %3094 = vmatprep.subr.mxu0 0.0
    %3095 = vmatpush1.msra.mxu0 0.0
    %3096 = vmatprep.subr.mxu0 0.0
    %3097 = vmatpush1.msra.mxu0 0.0
    %3098 = vmatprep.subr.mxu0 0.0
    %3099 = vmatpush1.msra.mxu0 0.0
    %3100 = vmatprep.subr.mxu0 0.0
    %3101 = vmatpush1.msra.mxu0 0.0
    %3102 = vmatprep.subr.mxu0 0.0
    %3103 = vmatpush1.msra.mxu0 0.0
    %3104 = vmatprep.subr.mxu0 0.0
    %3105 = vmatpush1.msra.mxu0 0.0
    %3106 = vmatprep.subr.mxu0 0.0
    %3107 = vmatpush1.msra.mxu0 0.0
    %3108 = vmatprep.subr.mxu0 0.0
    %3109 = vmatpush1.msra.mxu0 0.0
    %3110 = vmatprep.subr.mxu0 0.0
    %3111 = vmatpush1.msra.mxu0 0.0
    %3112 = vmatprep.mubr.f32.mxu0 0.0
    %3113 = vmatmul.mubr.f32.gmra.mrb[0].mxu0 %v3046
    %v3114 = vpop.f32.mrb[0].mxu0
    %v3115 = vadd.f32 0.0, %v3114
    %v3116 = vpop.f32.mrb[0].mxu0
    %v3117 = vadd.f32 0.0, %v3116
    %3118 = vdwg.mxu0
    %3119 = vmatprep.subr.mxu0 0.0
    %3120 = vmatpush1.msra.mxu0 %v2194
    %3121 = vmatprep.subr.mxu0 0.0
    %3122 = vmatpush1.msra.mxu0 %v2197
    %3123 = vmatprep.subr.mxu0 0.0
    %3124 = vmatpush1.msra.mxu0 %v2200
    %3125 = vmatprep.subr.mxu0 0.0
    %3126 = vmatpush1.msra.mxu0 %v2203
    %3127 = vmatprep.subr.mxu0 0.0
    %3128 = vmatpush1.msra.mxu0 %v2206
    %3129 = vmatprep.subr.mxu0 0.0
    %3130 = vmatpush1.msra.mxu0 %v2209
    %3131 = vmatprep.subr.mxu0 0.0
    %3132 = vmatpush1.msra.mxu0 %v2212
    %3133 = vmatprep.subr.mxu0 0.0
    %3134 = vmatpush1.msra.mxu0 %v2215
    %3135 = vmatprep.subr.mxu0 0.0
    %3136 = vmatpush1.msra.mxu0 %v2218
    %3137 = vmatprep.subr.mxu0 0.0
    %3138 = vmatpush1.msra.mxu0 %v2221
    %3139 = vmatprep.subr.mxu0 0.0
    %3140 = vmatpush1.msra.mxu0 %v2224
    %3141 = vmatprep.subr.mxu0 0.0
    %3142 = vmatpush1.msra.mxu0 %v2227
    %3143 = vmatprep.subr.mxu0 0.0
    %3144 = vmatpush1.msra.mxu0 0.0
    %3145 = vmatprep.subr.mxu0 0.0
    %3146 = vmatpush1.msra.mxu0 0.0
    %3147 = vmatprep.subr.mxu0 0.0
    %3148 = vmatpush1.msra.mxu0 0.0
    %3149 = vmatprep.subr.mxu0 0.0
    %3150 = vmatpush1.msra.mxu0 0.0
    %3151 = vmatprep.subr.mxu0 0.0
    %3152 = vmatpush1.msra.mxu0 0.0
    %3153 = vmatprep.subr.mxu0 0.0
    %3154 = vmatpush1.msra.mxu0 0.0
    %3155 = vmatprep.subr.mxu0 0.0
    %3156 = vmatpush1.msra.mxu0 0.0
    %3157 = vmatprep.subr.mxu0 0.0
    %3158 = vmatpush1.msra.mxu0 0.0
    %3159 = vmatprep.subr.mxu0 0.0
    %3160 = vmatpush1.msra.mxu0 0.0
    %3161 = vmatprep.subr.mxu0 0.0
    %3162 = vmatpush1.msra.mxu0 0.0
    %3163 = vmatprep.subr.mxu0 0.0
    %3164 = vmatpush1.msra.mxu0 0.0
    %3165 = vmatprep.subr.mxu0 0.0
    %3166 = vmatpush1.msra.mxu0 0.0
    %3167 = vmatprep.subr.mxu0 0.0
    %3168 = vmatpush1.msra.mxu0 0.0
    %3169 = vmatprep.subr.mxu0 0.0
    %3170 = vmatpush1.msra.mxu0 0.0
    %3171 = vmatprep.subr.mxu0 0.0
    %3172 = vmatpush1.msra.mxu0 0.0
    %3173 = vmatprep.subr.mxu0 0.0
    %3174 = vmatpush1.msra.mxu0 0.0
    %3175 = vmatprep.subr.mxu0 0.0
    %3176 = vmatpush1.msra.mxu0 0.0
    %3177 = vmatprep.subr.mxu0 0.0
    %3178 = vmatpush1.msra.mxu0 0.0
    %3179 = vmatprep.subr.mxu0 0.0
    %3180 = vmatpush1.msra.mxu0 0.0
    %3181 = vmatprep.subr.mxu0 0.0
    %3182 = vmatpush1.msra.mxu0 0.0
    %3183 = vmatprep.mubr.f32.mxu0 0.0
    %3184 = vmatmul.mubr.f32.gmra.mrb[0].mxu0 %v3046
    %v3185 = vpop.f32.mrb[0].mxu0
    %v3186 = vadd.f32 0.0, %v3185
    %v3187 = vpop.f32.mrb[0].mxu0
    %3188 = vdwg.mxu0
    %v3192 = vrot.slane %v3115, 2
    %v3193 = vrot.slane %v3117, 2
    %v3194 = vrot.slane %v3186, 2
    %v3198 = vadd.f32 %v2319, %v3192
    %v3199 = vadd.f32 %v2321, %v3193
    %v3200 = vadd.f32 %v2396, %v3194
    %v3201 = vxor.u32 %v3198, 2147483648
    %v3202 = vmul.f32 %v3201, 1.442695
    %v3203 = vpow.pop %v3202
    %v3204 = vadd.f32 %v3203, 1.0
    %v3205 = vrcp.pop %v3204
    %v3206 = vmul.f32 1.0, %v3205
    %v3207 = vxor.u32 %v3199, 2147483648
    %v3208 = vmul.f32 %v3207, 1.442695
    %v3209 = vpow.pop %v3208
    %v3210 = vadd.f32 %v3209, 1.0
    %v3211 = vrcp.pop %v3210
    %v3212 = vmul.f32 1.0, %v3211
    %v3213 = vtanh.pop %v3199
    %v3214 = vtanh.pop %v3200
    %v3215 = vxor.u32 %v3200, 2147483648
    %v3216 = vmul.f32 %v3215, 1.442695
    %v3217 = vpow.pop %v3216
    %v3218 = vadd.f32 %v3217, 1.0
    %v3219 = vrcp.pop %v3218
    %v3220 = vmul.f32 1.0, %v3219
    %v3223 = vrot.slane %v3025, 6
    %v3224 = vrot.slane %v3026, 6
    %v3227 = vmul.f32 %v3206, %v3223
    %v3228 = vmul.f32 %v3212, %v3224
    %3231 = vrot.lane.b32.xlu0 %v3213, 64
    %v3232 = vpop.permute.xlu0 %3231
    %3233 = vrot.lane.b32.xlu0 %v3214, 64
    %v3234 = vpop.permute.xlu0 %3233
    %v3235 = vsel %vm618, %v3232, %v3234
    %v3237 = vmul.f32 %v3206, %v3235
    %3239 = vrot.lane.b32.xlu0 %v3237, 96
    %v3240 = vpop.permute.xlu0 %3239
    %v3242 = vadd.f32 %v3227, %v3240
    %v3243 = vadd.f32 %v3228, %v3240
    %v3244 = vtanh.pop %v3242
    %v3245 = vtanh.pop %v3243
    %3248 = vrot.lane.b32.xlu0 %v3244, 64
    %v3249 = vpop.permute.xlu0 %3248
    %3250 = vrot.lane.b32.xlu0 %v3245, 64
    %v3251 = vpop.permute.xlu0 %3250
    %v3252 = vsel %vm618, %v3249, %v3251
    %v3254 = vmul.f32 %v3220, %v3252
    %3256 = vrot.lane.b32.xlu0 %v3254, 96
    %v3257 = vpop.permute.xlu0 %3256
    %3259 = vst.msk [vmem:[#allocation2] sm:$0xc0] %vm1294, %v3257
    %v3260 = vrot.slane %v3254, 6
    %3261 = vrot.lane.b32.xlu0 %v3260, 96
    %v3262 = vpop.permute.xlu0 %3261
    %v3263 = vsel %vm278, %v3262, 0
    %3265 = vmatprep.subr.mxu0 %v2193
    %3266 = vmatpush1.msra.mxu0 %v2192
    %3267 = vmatprep.subr.mxu0 %v2196
    %3268 = vmatpush1.msra.mxu0 %v2195
    %3269 = vmatprep.subr.mxu0 %v2199
    %3270 = vmatpush1.msra.mxu0 %v2198
    %3271 = vmatprep.subr.mxu0 %v2202
    %3272 = vmatpush1.msra.mxu0 %v2201
    %3273 = vmatprep.subr.mxu0 %v2205
    %3274 = vmatpush1.msra.mxu0 %v2204
    %3275 = vmatprep.subr.mxu0 %v2208
    %3276 = vmatpush1.msra.mxu0 %v2207
    %3277 = vmatprep.subr.mxu0 %v2211
    %3278 = vmatpush1.msra.mxu0 %v2210
    %3279 = vmatprep.subr.mxu0 %v2214
    %3280 = vmatpush1.msra.mxu0 %v2213
    %3281 = vmatprep.subr.mxu0 %v2217
    %3282 = vmatpush1.msra.mxu0 %v2216
    %3283 = vmatprep.subr.mxu0 %v2220
    %3284 = vmatpush1.msra.mxu0 %v2219
    %3285 = vmatprep.subr.mxu0 %v2223
    %3286 = vmatpush1.msra.mxu0 %v2222
    %3287 = vmatprep.subr.mxu0 %v2226
    %3288 = vmatpush1.msra.mxu0 %v2225
    %3289 = vmatprep.subr.mxu0 0.0
    %3290 = vmatpush1.msra.mxu0 0.0
    %3291 = vmatprep.subr.mxu0 0.0
    %3292 = vmatpush1.msra.mxu0 0.0
    %3293 = vmatprep.subr.mxu0 0.0
    %3294 = vmatpush1.msra.mxu0 0.0
    %3295 = vmatprep.subr.mxu0 0.0
    %3296 = vmatpush1.msra.mxu0 0.0
    %3297 = vmatprep.subr.mxu0 0.0
    %3298 = vmatpush1.msra.mxu0 0.0
    %3299 = vmatprep.subr.mxu0 0.0
    %3300 = vmatpush1.msra.mxu0 0.0
    %3301 = vmatprep.subr.mxu0 0.0
    %3302 = vmatpush1.msra.mxu0 0.0
    %3303 = vmatprep.subr.mxu0 0.0
    %3304 = vmatpush1.msra.mxu0 0.0
    %3305 = vmatprep.subr.mxu0 0.0
    %3306 = vmatpush1.msra.mxu0 0.0
    %3307 = vmatprep.subr.mxu0 0.0
    %3308 = vmatpush1.msra.mxu0 0.0
    %3309 = vmatprep.subr.mxu0 0.0
    %3310 = vmatpush1.msra.mxu0 0.0
    %3311 = vmatprep.subr.mxu0 0.0
    %3312 = vmatpush1.msra.mxu0 0.0
    %3313 = vmatprep.subr.mxu0 0.0
    %3314 = vmatpush1.msra.mxu0 0.0
    %3315 = vmatprep.subr.mxu0 0.0
    %3316 = vmatpush1.msra.mxu0 0.0
    %3317 = vmatprep.subr.mxu0 0.0
    %3318 = vmatpush1.msra.mxu0 0.0
    %3319 = vmatprep.subr.mxu0 0.0
    %3320 = vmatpush1.msra.mxu0 0.0
    %3321 = vmatprep.subr.mxu0 0.0
    %3322 = vmatpush1.msra.mxu0 0.0
    %3323 = vmatprep.subr.mxu0 0.0
    %3324 = vmatpush1.msra.mxu0 0.0
    %3325 = vmatprep.subr.mxu0 0.0
    %3326 = vmatpush1.msra.mxu0 0.0
    %3327 = vmatprep.subr.mxu0 0.0
    %3328 = vmatpush1.msra.mxu0 0.0
    %3329 = vmatprep.mubr.f32.mxu0 0.0
    %3330 = vmatmul.mubr.f32.gmra.mrb[0].mxu0 %v3263
    %v3331 = vpop.f32.mrb[0].mxu0
    %v3332 = vadd.f32 0.0, %v3331
    %v3333 = vpop.f32.mrb[0].mxu0
    %v3334 = vadd.f32 0.0, %v3333
    %3335 = vdwg.mxu0
    %3336 = vmatprep.subr.mxu0 0.0
    %3337 = vmatpush1.msra.mxu0 %v2194
    %3338 = vmatprep.subr.mxu0 0.0
    %3339 = vmatpush1.msra.mxu0 %v2197
    %3340 = vmatprep.subr.mxu0 0.0
    %3341 = vmatpush1.msra.mxu0 %v2200
    %3342 = vmatprep.subr.mxu0 0.0
    %3343 = vmatpush1.msra.mxu0 %v2203
    %3344 = vmatprep.subr.mxu0 0.0
    %3345 = vmatpush1.msra.mxu0 %v2206
    %3346 = vmatprep.subr.mxu0 0.0
    %3347 = vmatpush1.msra.mxu0 %v2209
    %3348 = vmatprep.subr.mxu0 0.0
    %3349 = vmatpush1.msra.mxu0 %v2212
    %3350 = vmatprep.subr.mxu0 0.0
    %3351 = vmatpush1.msra.mxu0 %v2215
    %3352 = vmatprep.subr.mxu0 0.0
    %3353 = vmatpush1.msra.mxu0 %v2218
    %3354 = vmatprep.subr.mxu0 0.0
    %3355 = vmatpush1.msra.mxu0 %v2221
    %3356 = vmatprep.subr.mxu0 0.0
    %3357 = vmatpush1.msra.mxu0 %v2224
    %3358 = vmatprep.subr.mxu0 0.0
    %3359 = vmatpush1.msra.mxu0 %v2227
    %3360 = vmatprep.subr.mxu0 0.0
    %3361 = vmatpush1.msra.mxu0 0.0
    %3362 = vmatprep.subr.mxu0 0.0
    %3363 = vmatpush1.msra.mxu0 0.0
    %3364 = vmatprep.subr.mxu0 0.0
    %3365 = vmatpush1.msra.mxu0 0.0
    %3366 = vmatprep.subr.mxu0 0.0
    %3367 = vmatpush1.msra.mxu0 0.0
    %3368 = vmatprep.subr.mxu0 0.0
    %3369 = vmatpush1.msra.mxu0 0.0
    %3370 = vmatprep.subr.mxu0 0.0
    %3371 = vmatpush1.msra.mxu0 0.0
    %3372 = vmatprep.subr.mxu0 0.0
    %3373 = vmatpush1.msra.mxu0 0.0
    %3374 = vmatprep.subr.mxu0 0.0
    %3375 = vmatpush1.msra.mxu0 0.0
    %3376 = vmatprep.subr.mxu0 0.0
    %3377 = vmatpush1.msra.mxu0 0.0
    %3378 = vmatprep.subr.mxu0 0.0
    %3379 = vmatpush1.msra.mxu0 0.0
    %3380 = vmatprep.subr.mxu0 0.0
    %3381 = vmatpush1.msra.mxu0 0.0
    %3382 = vmatprep.subr.mxu0 0.0
    %3383 = vmatpush1.msra.mxu0 0.0
    %3384 = vmatprep.subr.mxu0 0.0
    %3385 = vmatpush1.msra.mxu0 0.0
    %3386 = vmatprep.subr.mxu0 0.0
    %3387 = vmatpush1.msra.mxu0 0.0
    %3388 = vmatprep.subr.mxu0 0.0
    %3389 = vmatpush1.msra.mxu0 0.0
    %3390 = vmatprep.subr.mxu0 0.0
    %3391 = vmatpush1.msra.mxu0 0.0
    %3392 = vmatprep.subr.mxu0 0.0
    %3393 = vmatpush1.msra.mxu0 0.0
    %3394 = vmatprep.subr.mxu0 0.0
    %3395 = vmatpush1.msra.mxu0 0.0
    %3396 = vmatprep.subr.mxu0 0.0
    %3397 = vmatpush1.msra.mxu0 0.0
    %3398 = vmatprep.subr.mxu0 0.0
    %3399 = vmatpush1.msra.mxu0 0.0
    %3400 = vmatprep.mubr.f32.mxu0 0.0
    %3401 = vmatmul.mubr.f32.gmra.mrb[0].mxu0 %v3263
    %v3402 = vpop.f32.mrb[0].mxu0
    %v3403 = vadd.f32 0.0, %v3402
    %v3404 = vpop.f32.mrb[0].mxu0
    %3405 = vdwg.mxu0
    %v3406 = vadd.f32 %v2325, %v3332
    %v3407 = vadd.f32 %v2327, %v3334
    %v3408 = vadd.f32 %v2401, %v3403
    %v3409 = vxor.u32 %v3406, 2147483648
    %v3410 = vmul.f32 %v3409, 1.442695
    %v3411 = vpow.pop %v3410
    %v3412 = vadd.f32 %v3411, 1.0
    %v3413 = vrcp.pop %v3412
    %v3414 = vmul.f32 1.0, %v3413
    %v3415 = vxor.u32 %v3407, 2147483648
    %v3416 = vmul.f32 %v3415, 1.442695
    %v3417 = vpow.pop %v3416
    %v3418 = vadd.f32 %v3417, 1.0
    %v3419 = vrcp.pop %v3418
    %v3420 = vmul.f32 1.0, %v3419
    %v3421 = vtanh.pop %v3407
    %v3422 = vtanh.pop %v3408
    %v3423 = vxor.u32 %v3408, 2147483648
    %v3424 = vmul.f32 %v3423, 1.442695
    %v3425 = vpow.pop %v3424
    %v3426 = vadd.f32 %v3425, 1.0
    %v3427 = vrcp.pop %v3426
    %v3428 = vmul.f32 1.0, %v3427
    %v3431 = vrot.slane %v3242, 6
    %v3432 = vrot.slane %v3243, 6
    %v3435 = vmul.f32 %v3414, %v3431
    %v3436 = vmul.f32 %v3420, %v3432
    %3439 = vrot.lane.b32.xlu0 %v3421, 64
    %v3440 = vpop.permute.xlu0 %3439
    %3441 = vrot.lane.b32.xlu0 %v3422, 64
    %v3442 = vpop.permute.xlu0 %3441
    %v3443 = vsel %vm618, %v3440, %v3442
    %v3445 = vmul.f32 %v3414, %v3443
    %3447 = vrot.lane.b32.xlu0 %v3445, 96
    %v3448 = vpop.permute.xlu0 %3447
    %v3450 = vadd.f32 %v3435, %v3448
    %v3451 = vadd.f32 %v3436, %v3448
    %v3452 = vtanh.pop %v3450
    %v3453 = vtanh.pop %v3451
    %3456 = vrot.lane.b32.xlu0 %v3452, 64
    %v3457 = vpop.permute.xlu0 %3456
    %3458 = vrot.lane.b32.xlu0 %v3453, 64
    %v3459 = vpop.permute.xlu0 %3458
    %v3460 = vsel %vm618, %v3457, %v3459
    %v3462 = vmul.f32 %v3428, %v3460
    %3464 = vrot.lane.b32.xlu0 %v3462, 96
    %v3465 = vpop.permute.xlu0 %3464
    %3467 = vst.msk [vmem:[#allocation2 + $0x8] sm:$0x3] %vm643, %v3465
    %v3468 = vsel %vm278, %v3465, 0
    %3470 = vmatprep.subr.mxu0 %v2193
    %3471 = vmatpush1.msra.mxu0 %v2192
    %3472 = vmatprep.subr.mxu0 %v2196
    %3473 = vmatpush1.msra.mxu0 %v2195
    %3474 = vmatprep.subr.mxu0 %v2199
    %3475 = vmatpush1.msra.mxu0 %v2198
    %3476 = vmatprep.subr.mxu0 %v2202
    %3477 = vmatpush1.msra.mxu0 %v2201
    %3478 = vmatprep.subr.mxu0 %v2205
    %3479 = vmatpush1.msra.mxu0 %v2204
    %3480 = vmatprep.subr.mxu0 %v2208
    %3481 = vmatpush1.msra.mxu0 %v2207
    %3482 = vmatprep.subr.mxu0 %v2211
    %3483 = vmatpush1.msra.mxu0 %v2210
    %3484 = vmatprep.subr.mxu0 %v2214
    %3485 = vmatpush1.msra.mxu0 %v2213
    %3486 = vmatprep.subr.mxu0 %v2217
    %3487 = vmatpush1.msra.mxu0 %v2216
    %3488 = vmatprep.subr.mxu0 %v2220
    %3489 = vmatpush1.msra.mxu0 %v2219
    %3490 = vmatprep.subr.mxu0 %v2223
    %3491 = vmatpush1.msra.mxu0 %v2222
    %3492 = vmatprep.subr.mxu0 %v2226
    %3493 = vmatpush1.msra.mxu0 %v2225
    %3494 = vmatprep.subr.mxu0 0.0
    %3495 = vmatpush1.msra.mxu0 0.0
    %3496 = vmatprep.subr.mxu0 0.0
    %3497 = vmatpush1.msra.mxu0 0.0
    %3498 = vmatprep.subr.mxu0 0.0
    %3499 = vmatpush1.msra.mxu0 0.0
    %3500 = vmatprep.subr.mxu0 0.0
    %3501 = vmatpush1.msra.mxu0 0.0
    %3502 = vmatprep.subr.mxu0 0.0
    %3503 = vmatpush1.msra.mxu0 0.0
    %3504 = vmatprep.subr.mxu0 0.0
    %3505 = vmatpush1.msra.mxu0 0.0
    %3506 = vmatprep.subr.mxu0 0.0
    %3507 = vmatpush1.msra.mxu0 0.0
    %3508 = vmatprep.subr.mxu0 0.0
    %3509 = vmatpush1.msra.mxu0 0.0
    %3510 = vmatprep.subr.mxu0 0.0
    %3511 = vmatpush1.msra.mxu0 0.0
    %3512 = vmatprep.subr.mxu0 0.0
    %3513 = vmatpush1.msra.mxu0 0.0
    %3514 = vmatprep.subr.mxu0 0.0
    %3515 = vmatpush1.msra.mxu0 0.0
    %3516 = vmatprep.subr.mxu0 0.0
    %3517 = vmatpush1.msra.mxu0 0.0
    %3518 = vmatprep.subr.mxu0 0.0
    %3519 = vmatpush1.msra.mxu0 0.0
    %3520 = vmatprep.subr.mxu0 0.0
    %3521 = vmatpush1.msra.mxu0 0.0
    %3522 = vmatprep.subr.mxu0 0.0
    %3523 = vmatpush1.msra.mxu0 0.0
    %3524 = vmatprep.subr.mxu0 0.0
    %3525 = vmatpush1.msra.mxu0 0.0
    %3526 = vmatprep.subr.mxu0 0.0
    %3527 = vmatpush1.msra.mxu0 0.0
    %3528 = vmatprep.subr.mxu0 0.0
    %3529 = vmatpush1.msra.mxu0 0.0
    %3530 = vmatprep.subr.mxu0 0.0
    %3531 = vmatpush1.msra.mxu0 0.0
    %3532 = vmatprep.subr.mxu0 0.0
    %3533 = vmatpush1.msra.mxu0 0.0
    %3534 = vmatprep.mubr.f32.mxu0 0.0
    %3535 = vmatmul.mubr.f32.gmra.mrb[0].mxu0 %v3468
    %v3536 = vpop.f32.mrb[0].mxu0
    %v3537 = vadd.f32 0.0, %v3536
    %v3538 = vpop.f32.mrb[0].mxu0
    %v3539 = vadd.f32 0.0, %v3538
    %3540 = vdwg.mxu0
    %3541 = vmatprep.subr.mxu0 0.0
    %3542 = vmatpush1.msra.mxu0 %v2194
    %3543 = vmatprep.subr.mxu0 0.0
    %3544 = vmatpush1.msra.mxu0 %v2197
    %3545 = vmatprep.subr.mxu0 0.0
    %3546 = vmatpush1.msra.mxu0 %v2200
    %3547 = vmatprep.subr.mxu0 0.0
    %3548 = vmatpush1.msra.mxu0 %v2203
    %3549 = vmatprep.subr.mxu0 0.0
    %3550 = vmatpush1.msra.mxu0 %v2206
    %3551 = vmatprep.subr.mxu0 0.0
    %3552 = vmatpush1.msra.mxu0 %v2209
    %3553 = vmatprep.subr.mxu0 0.0
    %3554 = vmatpush1.msra.mxu0 %v2212
    %3555 = vmatprep.subr.mxu0 0.0
    %3556 = vmatpush1.msra.mxu0 %v2215
    %3557 = vmatprep.subr.mxu0 0.0
    %3558 = vmatpush1.msra.mxu0 %v2218
    %3559 = vmatprep.subr.mxu0 0.0
    %3560 = vmatpush1.msra.mxu0 %v2221
    %3561 = vmatprep.subr.mxu0 0.0
    %3562 = vmatpush1.msra.mxu0 %v2224
    %3563 = vmatprep.subr.mxu0 0.0
    %3564 = vmatpush1.msra.mxu0 %v2227
    %3565 = vmatprep.subr.mxu0 0.0
    %3566 = vmatpush1.msra.mxu0 0.0
    %3567 = vmatprep.subr.mxu0 0.0
    %3568 = vmatpush1.msra.mxu0 0.0
    %3569 = vmatprep.subr.mxu0 0.0
    %3570 = vmatpush1.msra.mxu0 0.0
    %3571 = vmatprep.subr.mxu0 0.0
    %3572 = vmatpush1.msra.mxu0 0.0
    %3573 = vmatprep.subr.mxu0 0.0
    %3574 = vmatpush1.msra.mxu0 0.0
    %3575 = vmatprep.subr.mxu0 0.0
    %3576 = vmatpush1.msra.mxu0 0.0
    %3577 = vmatprep.subr.mxu0 0.0
    %3578 = vmatpush1.msra.mxu0 0.0
    %3579 = vmatprep.subr.mxu0 0.0
    %3580 = vmatpush1.msra.mxu0 0.0
    %3581 = vmatprep.subr.mxu0 0.0
    %3582 = vmatpush1.msra.mxu0 0.0
    %3583 = vmatprep.subr.mxu0 0.0
    %3584 = vmatpush1.msra.mxu0 0.0
    %3585 = vmatprep.subr.mxu0 0.0
    %3586 = vmatpush1.msra.mxu0 0.0
    %3587 = vmatprep.subr.mxu0 0.0
    %3588 = vmatpush1.msra.mxu0 0.0
    %3589 = vmatprep.subr.mxu0 0.0
    %3590 = vmatpush1.msra.mxu0 0.0
    %3591 = vmatprep.subr.mxu0 0.0
    %3592 = vmatpush1.msra.mxu0 0.0
    %3593 = vmatprep.subr.mxu0 0.0
    %3594 = vmatpush1.msra.mxu0 0.0
    %3595 = vmatprep.subr.mxu0 0.0
    %3596 = vmatpush1.msra.mxu0 0.0
    %3597 = vmatprep.subr.mxu0 0.0
    %3598 = vmatpush1.msra.mxu0 0.0
    %3599 = vmatprep.subr.mxu0 0.0
    %3600 = vmatpush1.msra.mxu0 0.0
    %3601 = vmatprep.subr.mxu0 0.0
    %3602 = vmatpush1.msra.mxu0 0.0
    %3603 = vmatprep.subr.mxu0 0.0
    %3604 = vmatpush1.msra.mxu0 0.0
    %3605 = vmatprep.mubr.f32.mxu0 0.0
    %3606 = vmatmul.mubr.f32.gmra.mrb[0].mxu0 %v3468
    %v3607 = vpop.f32.mrb[0].mxu0
    %v3608 = vadd.f32 0.0, %v3607
    %v3609 = vpop.f32.mrb[0].mxu0
    %3610 = vdwg.mxu0
    %v3614 = vrot.slane %v3537, 6
    %v3615 = vrot.slane %v3539, 6
    %v3616 = vrot.slane %v3608, 6
    %v3620 = vadd.f32 %v2325, %v3614
    %v3621 = vadd.f32 %v2327, %v3615
    %v3622 = vadd.f32 %v2401, %v3616
    %v3623 = vxor.u32 %v3620, 2147483648
    %v3624 = vmul.f32 %v3623, 1.442695
    %v3625 = vpow.pop %v3624
    %v3626 = vadd.f32 %v3625, 1.0
    %v3627 = vrcp.pop %v3626
    %v3628 = vmul.f32 1.0, %v3627
    %v3629 = vxor.u32 %v3621, 2147483648
    %v3630 = vmul.f32 %v3629, 1.442695
    %v3631 = vpow.pop %v3630
    %v3632 = vadd.f32 %v3631, 1.0
    %v3633 = vrcp.pop %v3632
    %v3634 = vmul.f32 1.0, %v3633
    %v3635 = vtanh.pop %v3621
    %v3636 = vtanh.pop %v3622
    %v3637 = vxor.u32 %v3622, 2147483648
    %v3638 = vmul.f32 %v3637, 1.442695
    %v3639 = vpow.pop %v3638
    %v3640 = vadd.f32 %v3639, 1.0
    %v3641 = vrcp.pop %v3640
    %v3642 = vmul.f32 1.0, %v3641
    %v3645 = vrot.slane %v3450, 6
    %v3646 = vrot.slane %v3451, 6
    %v3649 = vmul.f32 %v3628, %v3645
    %v3650 = vmul.f32 %v3634, %v3646
    %3653 = vrot.lane.b32.xlu0 %v3635, 64
    %v3654 = vpop.permute.xlu0 %3653
    %3655 = vrot.lane.b32.xlu0 %v3636, 64
    %v3656 = vpop.permute.xlu0 %3655
    %v3657 = vsel %vm618, %v3654, %v3656
    %v3659 = vmul.f32 %v3628, %v3657
    %3661 = vrot.lane.b32.xlu0 %v3659, 96
    %v3662 = vpop.permute.xlu0 %3661
    %v3664 = vadd.f32 %v3649, %v3662
    %v3665 = vadd.f32 %v3650, %v3662
    %v3666 = vtanh.pop %v3664
    %v3667 = vtanh.pop %v3665
    %3670 = vrot.lane.b32.xlu0 %v3666, 64
    %v3671 = vpop.permute.xlu0 %3670
    %3672 = vrot.lane.b32.xlu0 %v3667, 64
    %v3673 = vpop.permute.xlu0 %3672
    %v3674 = vsel %vm618, %v3671, %v3673
    %v3676 = vmul.f32 %v3642, %v3674
    %3678 = vrot.lane.b32.xlu0 %v3676, 96
    %v3679 = vpop.permute.xlu0 %3678
    %3681 = vst.msk [vmem:[#allocation2 + $0x8] sm:$0xc] %vm858, %v3679
    %v3682 = vrot.slane %v3676, 2
    %3683 = vrot.lane.b32.xlu0 %v3682, 96
    %v3684 = vpop.permute.xlu0 %3683
    %v3685 = vsel %vm278, %v3684, 0
    %3687 = vmatprep.subr.mxu0 %v2193
    %3688 = vmatpush1.msra.mxu0 %v2192
    %3689 = vmatprep.subr.mxu0 %v2196
    %3690 = vmatpush1.msra.mxu0 %v2195
    %3691 = vmatprep.subr.mxu0 %v2199
    %3692 = vmatpush1.msra.mxu0 %v2198
    %3693 = vmatprep.subr.mxu0 %v2202
    %3694 = vmatpush1.msra.mxu0 %v2201
    %3695 = vmatprep.subr.mxu0 %v2205
    %3696 = vmatpush1.msra.mxu0 %v2204
    %3697 = vmatprep.subr.mxu0 %v2208
    %3698 = vmatpush1.msra.mxu0 %v2207
    %3699 = vmatprep.subr.mxu0 %v2211
    %3700 = vmatpush1.msra.mxu0 %v2210
    %3701 = vmatprep.subr.mxu0 %v2214
    %3702 = vmatpush1.msra.mxu0 %v2213
    %3703 = vmatprep.subr.mxu0 %v2217
    %3704 = vmatpush1.msra.mxu0 %v2216
    %3705 = vmatprep.subr.mxu0 %v2220
    %3706 = vmatpush1.msra.mxu0 %v2219
    %3707 = vmatprep.subr.mxu0 %v2223
    %3708 = vmatpush1.msra.mxu0 %v2222
    %3709 = vmatprep.subr.mxu0 %v2226
    %3710 = vmatpush1.msra.mxu0 %v2225
    %3711 = vmatprep.subr.mxu0 0.0
    %3712 = vmatpush1.msra.mxu0 0.0
    %3713 = vmatprep.subr.mxu0 0.0
    %3714 = vmatpush1.msra.mxu0 0.0
    %3715 = vmatprep.subr.mxu0 0.0
    %3716 = vmatpush1.msra.mxu0 0.0
    %3717 = vmatprep.subr.mxu0 0.0
    %3718 = vmatpush1.msra.mxu0 0.0
    %3719 = vmatprep.subr.mxu0 0.0
    %3720 = vmatpush1.msra.mxu0 0.0
    %3721 = vmatprep.subr.mxu0 0.0
    %3722 = vmatpush1.msra.mxu0 0.0
    %3723 = vmatprep.subr.mxu0 0.0
    %3724 = vmatpush1.msra.mxu0 0.0
    %3725 = vmatprep.subr.mxu0 0.0
    %3726 = vmatpush1.msra.mxu0 0.0
    %3727 = vmatprep.subr.mxu0 0.0
    %3728 = vmatpush1.msra.mxu0 0.0
    %3729 = vmatprep.subr.mxu0 0.0
    %3730 = vmatpush1.msra.mxu0 0.0
    %3731 = vmatprep.subr.mxu0 0.0
    %3732 = vmatpush1.msra.mxu0 0.0
    %3733 = vmatprep.subr.mxu0 0.0
    %3734 = vmatpush1.msra.mxu0 0.0
    %3735 = vmatprep.subr.mxu0 0.0
    %3736 = vmatpush1.msra.mxu0 0.0
    %3737 = vmatprep.subr.mxu0 0.0
    %3738 = vmatpush1.msra.mxu0 0.0
    %3739 = vmatprep.subr.mxu0 0.0
    %3740 = vmatpush1.msra.mxu0 0.0
    %3741 = vmatprep.subr.mxu0 0.0
    %3742 = vmatpush1.msra.mxu0 0.0
    %3743 = vmatprep.subr.mxu0 0.0
    %3744 = vmatpush1.msra.mxu0 0.0
    %3745 = vmatprep.subr.mxu0 0.0
    %3746 = vmatpush1.msra.mxu0 0.0
    %3747 = vmatprep.subr.mxu0 0.0
    %3748 = vmatpush1.msra.mxu0 0.0
    %3749 = vmatprep.subr.mxu0 0.0
    %3750 = vmatpush1.msra.mxu0 0.0
    %3751 = vmatprep.mubr.f32.mxu0 0.0
    %3752 = vmatmul.mubr.f32.gmra.mrb[0].mxu0 %v3685
    %v3753 = vpop.f32.mrb[0].mxu0
    %v3754 = vadd.f32 0.0, %v3753
    %v3755 = vpop.f32.mrb[0].mxu0
    %v3756 = vadd.f32 0.0, %v3755
    %3757 = vdwg.mxu0
    %3758 = vmatprep.subr.mxu0 0.0
    %3759 = vmatpush1.msra.mxu0 %v2194
    %3760 = vmatprep.subr.mxu0 0.0
    %3761 = vmatpush1.msra.mxu0 %v2197
    %3762 = vmatprep.subr.mxu0 0.0
    %3763 = vmatpush1.msra.mxu0 %v2200
    %3764 = vmatprep.subr.mxu0 0.0
    %3765 = vmatpush1.msra.mxu0 %v2203
    %3766 = vmatprep.subr.mxu0 0.0
    %3767 = vmatpush1.msra.mxu0 %v2206
    %3768 = vmatprep.subr.mxu0 0.0
    %3769 = vmatpush1.msra.mxu0 %v2209
    %3770 = vmatprep.subr.mxu0 0.0
    %3771 = vmatpush1.msra.mxu0 %v2212
    %3772 = vmatprep.subr.mxu0 0.0
    %3773 = vmatpush1.msra.mxu0 %v2215
    %3774 = vmatprep.subr.mxu0 0.0
    %3775 = vmatpush1.msra.mxu0 %v2218
    %3776 = vmatprep.subr.mxu0 0.0
    %3777 = vmatpush1.msra.mxu0 %v2221
    %3778 = vmatprep.subr.mxu0 0.0
    %3779 = vmatpush1.msra.mxu0 %v2224
    %3780 = vmatprep.subr.mxu0 0.0
    %3781 = vmatpush1.msra.mxu0 %v2227
    %3782 = vmatprep.subr.mxu0 0.0
    %3783 = vmatpush1.msra.mxu0 0.0
    %3784 = vmatprep.subr.mxu0 0.0
    %3785 = vmatpush1.msra.mxu0 0.0
    %3786 = vmatprep.subr.mxu0 0.0
    %3787 = vmatpush1.msra.mxu0 0.0
    %3788 = vmatprep.subr.mxu0 0.0
    %3789 = vmatpush1.msra.mxu0 0.0
    %3790 = vmatprep.subr.mxu0 0.0
    %3791 = vmatpush1.msra.mxu0 0.0
    %3792 = vmatprep.subr.mxu0 0.0
    %3793 = vmatpush1.msra.mxu0 0.0
    %3794 = vmatprep.subr.mxu0 0.0
    %3795 = vmatpush1.msra.mxu0 0.0
    %3796 = vmatprep.subr.mxu0 0.0
    %3797 = vmatpush1.msra.mxu0 0.0
    %3798 = vmatprep.subr.mxu0 0.0
    %3799 = vmatpush1.msra.mxu0 0.0
    %3800 = vmatprep.subr.mxu0 0.0
    %3801 = vmatpush1.msra.mxu0 0.0
    %3802 = vmatprep.subr.mxu0 0.0
    %3803 = vmatpush1.msra.mxu0 0.0
    %3804 = vmatprep.subr.mxu0 0.0
    %3805 = vmatpush1.msra.mxu0 0.0
    %3806 = vmatprep.subr.mxu0 0.0
    %3807 = vmatpush1.msra.mxu0 0.0
    %3808 = vmatprep.subr.mxu0 0.0
    %3809 = vmatpush1.msra.mxu0 0.0
    %3810 = vmatprep.subr.mxu0 0.0
    %3811 = vmatpush1.msra.mxu0 0.0
    %3812 = vmatprep.subr.mxu0 0.0
    %3813 = vmatpush1.msra.mxu0 0.0
    %3814 = vmatprep.subr.mxu0 0.0
    %3815 = vmatpush1.msra.mxu0 0.0
    %3816 = vmatprep.subr.mxu0 0.0
    %3817 = vmatpush1.msra.mxu0 0.0
    %3818 = vmatprep.subr.mxu0 0.0
    %3819 = vmatpush1.msra.mxu0 0.0
    %3820 = vmatprep.subr.mxu0 0.0
    %3821 = vmatpush1.msra.mxu0 0.0
    %3822 = vmatprep.mubr.f32.mxu0 0.0
    %3823 = vmatmul.mubr.f32.gmra.mrb[0].mxu0 %v3685
    %v3824 = vpop.f32.mrb[0].mxu0
    %v3825 = vadd.f32 0.0, %v3824
    %v3826 = vpop.f32.mrb[0].mxu0
    %3827 = vdwg.mxu0
    %v3831 = vrot.slane %v3754, 4
    %v3832 = vrot.slane %v3756, 4
    %v3833 = vrot.slane %v3825, 4
    %v3837 = vadd.f32 %v2325, %v3831
    %v3838 = vadd.f32 %v2327, %v3832
    %v3839 = vadd.f32 %v2401, %v3833
    %v3840 = vxor.u32 %v3837, 2147483648
    %v3841 = vmul.f32 %v3840, 1.442695
    %v3842 = vpow.pop %v3841
    %v3843 = vadd.f32 %v3842, 1.0
    %v3844 = vrcp.pop %v3843
    %v3845 = vmul.f32 1.0, %v3844
    %v3846 = vxor.u32 %v3838, 2147483648
    %v3847 = vmul.f32 %v3846, 1.442695
    %v3848 = vpow.pop %v3847
    %v3849 = vadd.f32 %v3848, 1.0
    %v3850 = vrcp.pop %v3849
    %v3851 = vmul.f32 1.0, %v3850
    %v3852 = vtanh.pop %v3838
    %v3853 = vtanh.pop %v3839
    %v3854 = vxor.u32 %v3839, 2147483648
    %v3855 = vmul.f32 %v3854, 1.442695
    %v3856 = vpow.pop %v3855
    %v3857 = vadd.f32 %v3856, 1.0
    %v3858 = vrcp.pop %v3857
    %v3859 = vmul.f32 1.0, %v3858
    %v3862 = vrot.slane %v3664, 6
    %v3863 = vrot.slane %v3665, 6
    %v3866 = vmul.f32 %v3845, %v3862
    %v3867 = vmul.f32 %v3851, %v3863
    %3870 = vrot.lane.b32.xlu0 %v3852, 64
    %v3871 = vpop.permute.xlu0 %3870
    %3872 = vrot.lane.b32.xlu0 %v3853, 64
    %v3873 = vpop.permute.xlu0 %3872
    %v3874 = vsel %vm618, %v3871, %v3873
    %v3876 = vmul.f32 %v3845, %v3874
    %3878 = vrot.lane.b32.xlu0 %v3876, 96
    %v3879 = vpop.permute.xlu0 %3878
    %v3881 = vadd.f32 %v3866, %v3879
    %v3882 = vadd.f32 %v3867, %v3879
    %v3883 = vtanh.pop %v3881
    %v3884 = vtanh.pop %v3882
    %3887 = vrot.lane.b32.xlu0 %v3883, 64
    %v3888 = vpop.permute.xlu0 %3887
    %3889 = vrot.lane.b32.xlu0 %v3884, 64
    %v3890 = vpop.permute.xlu0 %3889
    %v3891 = vsel %vm618, %v3888, %v3890
    %v3893 = vmul.f32 %v3859, %v3891
    %3895 = vrot.lane.b32.xlu0 %v3893, 96
    %v3896 = vpop.permute.xlu0 %3895
    %3898 = vst.msk [vmem:[#allocation2 + $0x8] sm:$0x30] %vm1076, %v3896
    %v3899 = vrot.slane %v3893, 4
    %3900 = vrot.lane.b32.xlu0 %v3899, 96
    %v3901 = vpop.permute.xlu0 %3900
    %v3902 = vsel %vm278, %v3901, 0
    %3904 = vmatprep.subr.mxu0 %v2193
    %3905 = vmatpush1.msra.mxu0 %v2192
    %3906 = vmatprep.subr.mxu0 %v2196
    %3907 = vmatpush1.msra.mxu0 %v2195
    %3908 = vmatprep.subr.mxu0 %v2199
    %3909 = vmatpush1.msra.mxu0 %v2198
    %3910 = vmatprep.subr.mxu0 %v2202
    %3911 = vmatpush1.msra.mxu0 %v2201
    %3912 = vmatprep.subr.mxu0 %v2205
    %3913 = vmatpush1.msra.mxu0 %v2204
    %3914 = vmatprep.subr.mxu0 %v2208
    %3915 = vmatpush1.msra.mxu0 %v2207
    %3916 = vmatprep.subr.mxu0 %v2211
    %3917 = vmatpush1.msra.mxu0 %v2210
    %3918 = vmatprep.subr.mxu0 %v2214
    %3919 = vmatpush1.msra.mxu0 %v2213
    %3920 = vmatprep.subr.mxu0 %v2217
    %3921 = vmatpush1.msra.mxu0 %v2216
    %3922 = vmatprep.subr.mxu0 %v2220
    %3923 = vmatpush1.msra.mxu0 %v2219
    %3924 = vmatprep.subr.mxu0 %v2223
    %3925 = vmatpush1.msra.mxu0 %v2222
    %3926 = vmatprep.subr.mxu0 %v2226
    %3927 = vmatpush1.msra.mxu0 %v2225
    %3928 = vmatprep.subr.mxu0 0.0
    %3929 = vmatpush1.msra.mxu0 0.0
    %3930 = vmatprep.subr.mxu0 0.0
    %3931 = vmatpush1.msra.mxu0 0.0
    %3932 = vmatprep.subr.mxu0 0.0
    %3933 = vmatpush1.msra.mxu0 0.0
    %3934 = vmatprep.subr.mxu0 0.0
    %3935 = vmatpush1.msra.mxu0 0.0
    %3936 = vmatprep.subr.mxu0 0.0
    %3937 = vmatpush1.msra.mxu0 0.0
    %3938 = vmatprep.subr.mxu0 0.0
    %3939 = vmatpush1.msra.mxu0 0.0
    %3940 = vmatprep.subr.mxu0 0.0
    %3941 = vmatpush1.msra.mxu0 0.0
    %3942 = vmatprep.subr.mxu0 0.0
    %3943 = vmatpush1.msra.mxu0 0.0
    %3944 = vmatprep.subr.mxu0 0.0
    %3945 = vmatpush1.msra.mxu0 0.0
    %3946 = vmatprep.subr.mxu0 0.0
    %3947 = vmatpush1.msra.mxu0 0.0
    %3948 = vmatprep.subr.mxu0 0.0
    %3949 = vmatpush1.msra.mxu0 0.0
    %3950 = vmatprep.subr.mxu0 0.0
    %3951 = vmatpush1.msra.mxu0 0.0
    %3952 = vmatprep.subr.mxu0 0.0
    %3953 = vmatpush1.msra.mxu0 0.0
    %3954 = vmatprep.subr.mxu0 0.0
    %3955 = vmatpush1.msra.mxu0 0.0
    %3956 = vmatprep.subr.mxu0 0.0
    %3957 = vmatpush1.msra.mxu0 0.0
    %3958 = vmatprep.subr.mxu0 0.0
    %3959 = vmatpush1.msra.mxu0 0.0
    %3960 = vmatprep.subr.mxu0 0.0
    %3961 = vmatpush1.msra.mxu0 0.0
    %3962 = vmatprep.subr.mxu0 0.0
    %3963 = vmatpush1.msra.mxu0 0.0
    %3964 = vmatprep.subr.mxu0 0.0
    %3965 = vmatpush1.msra.mxu0 0.0
    %3966 = vmatprep.subr.mxu0 0.0
    %3967 = vmatpush1.msra.mxu0 0.0
    %3968 = vmatprep.mubr.f32.mxu0 0.0
    %3969 = vmatmul.mubr.f32.gmra.mrb[0].mxu0 %v3902
    %v3970 = vpop.f32.mrb[0].mxu0
    %v3971 = vadd.f32 0.0, %v3970
    %v3972 = vpop.f32.mrb[0].mxu0
    %v3973 = vadd.f32 0.0, %v3972
    %3974 = vdwg.mxu0
    %3975 = vmatprep.subr.mxu0 0.0
    %3976 = vmatpush1.msra.mxu0 %v2194
    %3977 = vmatprep.subr.mxu0 0.0
    %3978 = vmatpush1.msra.mxu0 %v2197
    %3979 = vmatprep.subr.mxu0 0.0
    %3980 = vmatpush1.msra.mxu0 %v2200
    %3981 = vmatprep.subr.mxu0 0.0
    %3982 = vmatpush1.msra.mxu0 %v2203
    %3983 = vmatprep.subr.mxu0 0.0
    %3984 = vmatpush1.msra.mxu0 %v2206
    %3985 = vmatprep.subr.mxu0 0.0
    %3986 = vmatpush1.msra.mxu0 %v2209
    %3987 = vmatprep.subr.mxu0 0.0
    %3988 = vmatpush1.msra.mxu0 %v2212
    %3989 = vmatprep.subr.mxu0 0.0
    %3990 = vmatpush1.msra.mxu0 %v2215
    %3991 = vmatprep.subr.mxu0 0.0
    %3992 = vmatpush1.msra.mxu0 %v2218
    %3993 = vmatprep.subr.mxu0 0.0
    %3994 = vmatpush1.msra.mxu0 %v2221
    %3995 = vmatprep.subr.mxu0 0.0
    %3996 = vmatpush1.msra.mxu0 %v2224
    %3997 = vmatprep.subr.mxu0 0.0
    %3998 = vmatpush1.msra.mxu0 %v2227
    %3999 = vmatprep.subr.mxu0 0.0
    %4000 = vmatpush1.msra.mxu0 0.0
    %4001 = vmatprep.subr.mxu0 0.0
    %4002 = vmatpush1.msra.mxu0 0.0
    %4003 = vmatprep.subr.mxu0 0.0
    %4004 = vmatpush1.msra.mxu0 0.0
    %4005 = vmatprep.subr.mxu0 0.0
    %4006 = vmatpush1.msra.mxu0 0.0
    %4007 = vmatprep.subr.mxu0 0.0
    %4008 = vmatpush1.msra.mxu0 0.0
    %4009 = vmatprep.subr.mxu0 0.0
    %4010 = vmatpush1.msra.mxu0 0.0
    %4011 = vmatprep.subr.mxu0 0.0
    %4012 = vmatpush1.msra.mxu0 0.0
    %4013 = vmatprep.subr.mxu0 0.0
    %4014 = vmatpush1.msra.mxu0 0.0
    %4015 = vmatprep.subr.mxu0 0.0
    %4016 = vmatpush1.msra.mxu0 0.0
    %4017 = vmatprep.subr.mxu0 0.0
    %4018 = vmatpush1.msra.mxu0 0.0
    %4019 = vmatprep.subr.mxu0 0.0
    %4020 = vmatpush1.msra.mxu0 0.0
    %4021 = vmatprep.subr.mxu0 0.0
    %4022 = vmatpush1.msra.mxu0 0.0
    %4023 = vmatprep.subr.mxu0 0.0
    %4024 = vmatpush1.msra.mxu0 0.0
    %4025 = vmatprep.subr.mxu0 0.0
    %4026 = vmatpush1.msra.mxu0 0.0
    %4027 = vmatprep.subr.mxu0 0.0
    %4028 = vmatpush1.msra.mxu0 0.0
    %4029 = vmatprep.subr.mxu0 0.0
    %4030 = vmatpush1.msra.mxu0 0.0
    %4031 = vmatprep.subr.mxu0 0.0
    %4032 = vmatpush1.msra.mxu0 0.0
    %4033 = vmatprep.subr.mxu0 0.0
    %4034 = vmatpush1.msra.mxu0 0.0
    %4035 = vmatprep.subr.mxu0 0.0
    %4036 = vmatpush1.msra.mxu0 0.0
    %4037 = vmatprep.subr.mxu0 0.0
    %4038 = vmatpush1.msra.mxu0 0.0
    %4039 = vmatprep.mubr.f32.mxu0 0.0
    %4040 = vmatmul.mubr.f32.gmra.mrb[0].mxu0 %v3902
    %v4041 = vpop.f32.mrb[0].mxu0
    %v4042 = vadd.f32 0.0, %v4041
    %v4043 = vpop.f32.mrb[0].mxu0
    %4044 = vdwg.mxu0
    %v4048 = vrot.slane %v3971, 2
    %v4049 = vrot.slane %v3973, 2
    %v4050 = vrot.slane %v4042, 2
    %v4054 = vadd.f32 %v2325, %v4048
    %v4055 = vadd.f32 %v2327, %v4049
    %v4056 = vadd.f32 %v2401, %v4050
    %v4057 = vxor.u32 %v4054, 2147483648
    %v4058 = vmul.f32 %v4057, 1.442695
    %v4059 = vpow.pop %v4058
    %v4060 = vadd.f32 %v4059, 1.0
    %v4061 = vrcp.pop %v4060
    %v4062 = vmul.f32 1.0, %v4061
    %v4063 = vxor.u32 %v4055, 2147483648
    %v4064 = vmul.f32 %v4063, 1.442695
    %v4065 = vpow.pop %v4064
    %v4066 = vadd.f32 %v4065, 1.0
    %v4067 = vrcp.pop %v4066
    %v4068 = vmul.f32 1.0, %v4067
    %v4069 = vtanh.pop %v4055
    %v4070 = vtanh.pop %v4056
    %v4071 = vxor.u32 %v4056, 2147483648
    %v4072 = vmul.f32 %v4071, 1.442695
    %v4073 = vpow.pop %v4072
    %v4074 = vadd.f32 %v4073, 1.0
    %v4075 = vrcp.pop %v4074
    %v4076 = vmul.f32 1.0, %v4075
    %v4079 = vrot.slane %v3881, 6
    %v4080 = vrot.slane %v3882, 6
    %v4083 = vmul.f32 %v4062, %v4079
    %v4084 = vmul.f32 %v4068, %v4080
    %4087 = vrot.lane.b32.xlu0 %v4069, 64
    %v4088 = vpop.permute.xlu0 %4087
    %4089 = vrot.lane.b32.xlu0 %v4070, 64
    %v4090 = vpop.permute.xlu0 %4089
    %v4091 = vsel %vm618, %v4088, %v4090
    %v4093 = vmul.f32 %v4062, %v4091
    %4095 = vrot.lane.b32.xlu0 %v4093, 96
    %v4096 = vpop.permute.xlu0 %4095
    %v4098 = vadd.f32 %v4083, %v4096
    %v4099 = vadd.f32 %v4084, %v4096
    %v4100 = vtanh.pop %v4098
    %v4101 = vtanh.pop %v4099
    %4104 = vrot.lane.b32.xlu0 %v4100, 64
    %v4105 = vpop.permute.xlu0 %4104
    %4106 = vrot.lane.b32.xlu0 %v4101, 64
    %v4107 = vpop.permute.xlu0 %4106
    %v4108 = vsel %vm618, %v4105, %v4107
    %v4110 = vmul.f32 %v4076, %v4108
    %4112 = vrot.lane.b32.xlu0 %v4110, 96
    %v4113 = vpop.permute.xlu0 %4112
    %4115 = vst.msk [vmem:[#allocation2 + $0x8] sm:$0xc0] %vm1294, %v4113
    %v4116 = vld [vmem:[#allocation2] sm:$0xff]
    %v4117 = vld [vmem:[#allocation2 + $0x8] sm:$0xff]
    %v4118 = vld [vmem:[#allocation14] sm:$0xff]
    %v4119 = vld [vmem:[#allocation14 + $0x8] sm:$0xff]
    %v4120 = vld [vmem:[#allocation14 + $0x10] sm:$0xff]
    %v4121 = vld [vmem:[#allocation14 + $0x18] sm:$0xff]
    %v4122 = vld [vmem:[%s10] sm:$0x1]
    %v4124 = vlaneseq
    %v4125 = vshrl.u32 %v4124, 7
    %v4126 = vsub.s32 0, %v4125
    %v4127 = vrot.slane %v4122, %v4126
    %vm4129 = vcmask 261120
    %v4131 = vsel %vm4129, %v4116, 0
    %v4134 = vsel %vm4129, %v4117, 0
    %4136 = vmatprep.subr.mxu0 0.0
    %4137 = vmatpush1.msra.mxu0 %v4118
    %4138 = vmatprep.subr.mxu0 0.0
    %4139 = vmatpush1.msra.mxu0 %v4119
    %4140 = vmatprep.subr.mxu0 0.0
    %4141 = vmatpush1.msra.mxu0 %v4120
    %4142 = vmatprep.subr.mxu0 0.0
    %4143 = vmatpush1.msra.mxu0 %v4121
    %4144 = vmatprep.subr.mxu0 0.0
    %4145 = vmatpush1.msra.mxu0 0.0
    %4146 = vmatprep.subr.mxu0 0.0
    %4147 = vmatpush1.msra.mxu0 0.0
    %4148 = vmatprep.subr.mxu0 0.0
    %4149 = vmatpush1.msra.mxu0 0.0
    %4150 = vmatprep.subr.mxu0 0.0
    %4151 = vmatpush1.msra.mxu0 0.0
    %4152 = vmatprep.subr.mxu0 0.0
    %4153 = vmatpush1.msra.mxu0 0.0
    %4154 = vmatprep.subr.mxu0 0.0
    %4155 = vmatpush1.msra.mxu0 0.0
    %4156 = vmatprep.subr.mxu0 0.0
    %4157 = vmatpush1.msra.mxu0 0.0
    %4158 = vmatprep.subr.mxu0 0.0
    %4159 = vmatpush1.msra.mxu0 0.0
    %4160 = vmatprep.subr.mxu0 0.0
    %4161 = vmatpush1.msra.mxu0 0.0
    %4162 = vmatprep.subr.mxu0 0.0
    %4163 = vmatpush1.msra.mxu0 0.0
    %4164 = vmatprep.subr.mxu0 0.0
    %4165 = vmatpush1.msra.mxu0 0.0
    %4166 = vmatprep.subr.mxu0 0.0
    %4167 = vmatpush1.msra.mxu0 0.0
    %4168 = vmatprep.subr.mxu0 0.0
    %4169 = vmatpush1.msra.mxu0 0.0
    %4170 = vmatprep.subr.mxu0 0.0
    %4171 = vmatpush1.msra.mxu0 0.0
    %4172 = vmatprep.subr.mxu0 0.0
    %4173 = vmatpush1.msra.mxu0 0.0
    %4174 = vmatprep.subr.mxu0 0.0
    %4175 = vmatpush1.msra.mxu0 0.0
    %4176 = vmatprep.subr.mxu0 0.0
    %4177 = vmatpush1.msra.mxu0 0.0
    %4178 = vmatprep.subr.mxu0 0.0
    %4179 = vmatpush1.msra.mxu0 0.0
    %4180 = vmatprep.subr.mxu0 0.0
    %4181 = vmatpush1.msra.mxu0 0.0
    %4182 = vmatprep.subr.mxu0 0.0
    %4183 = vmatpush1.msra.mxu0 0.0
    %4184 = vmatprep.subr.mxu0 0.0
    %4185 = vmatpush1.msra.mxu0 0.0
    %4186 = vmatprep.subr.mxu0 0.0
    %4187 = vmatpush1.msra.mxu0 0.0
    %4188 = vmatprep.subr.mxu0 0.0
    %4189 = vmatpush1.msra.mxu0 0.0
    %4190 = vmatprep.subr.mxu0 0.0
    %4191 = vmatpush1.msra.mxu0 0.0
    %4192 = vmatprep.subr.mxu0 0.0
    %4193 = vmatpush1.msra.mxu0 0.0
    %4194 = vmatprep.subr.mxu0 0.0
    %4195 = vmatpush1.msra.mxu0 0.0
    %4196 = vmatprep.subr.mxu0 0.0
    %4197 = vmatpush1.msra.mxu0 0.0
    %4198 = vmatprep.subr.mxu0 0.0
    %4199 = vmatpush1.msra.mxu0 0.0
    %4200 = vmatprep.mubr.f32.mxu0 0.0
    %4201 = vmatmul.mubr.f32.gmra.mrb[0].mxu0 %v4131
    %v4202 = vpop.f32.mrb[0].mxu0
    %v4203 = vadd.f32 %v4127, %v4202
    %v4204 = vpop.f32.mrb[0].mxu0
    %4205 = vmatprep.mubr.f32.mxu0 0.0
    %4206 = vmatmul.mubr.f32.gmra.mrb[0].mxu0 %v4134
    %v4207 = vpop.f32.mrb[0].mxu0
    %v4208 = vadd.f32 %v4127, %v4207
    %v4209 = vpop.f32.mrb[0].mxu0
    %4210 = vdwg.mxu0
    %v4211 = vmul.f32 %v4203, 0.35355338
    %v4212 = vmul.f32 %v4208, 0.35355338
    %v4213 = vld [vmem:[#allocation15] sm:$0xff]
    %v4214 = vld [vmem:[#allocation15 + $0x8] sm:$0xff]
    %v4215 = vld [vmem:[#allocation15 + $0x10] sm:$0xff]
    %v4216 = vld [vmem:[#allocation15 + $0x18] sm:$0xff]
    %v4217 = vld [vmem:[%s11] sm:$0x1]
    %v4219 = vlaneseq
    %v4220 = vshrl.u32 %v4219, 7
    %v4221 = vsub.s32 0, %v4220
    %v4222 = vrot.slane %v4217, %v4221
    %4224 = vrot.lane.b32.xlu0 %v4116, 96
    %v4225 = vpop.permute.xlu0 %4224
    %4226 = vrot.lane.b32.xlu0 %v4117, 96
    %v4227 = vpop.permute.xlu0 %4226
    %v4228 = vsel %vm4129, %v4225, 0
    %v4230 = vsel %vm4129, %v4227, 0
    %4232 = vmatprep.subr.mxu0 0.0
    %4233 = vmatpush1.msra.mxu0 %v4213
    %4234 = vmatprep.subr.mxu0 0.0
    %4235 = vmatpush1.msra.mxu0 %v4214
    %4236 = vmatprep.subr.mxu0 0.0
    %4237 = vmatpush1.msra.mxu0 %v4215
    %4238 = vmatprep.subr.mxu0 0.0
    %4239 = vmatpush1.msra.mxu0 %v4216
    %4240 = vmatprep.subr.mxu0 0.0
    %4241 = vmatpush1.msra.mxu0 0.0
    %4242 = vmatprep.subr.mxu0 0.0
    %4243 = vmatpush1.msra.mxu0 0.0
    %4244 = vmatprep.subr.mxu0 0.0
    %4245 = vmatpush1.msra.mxu0 0.0
    %4246 = vmatprep.subr.mxu0 0.0
    %4247 = vmatpush1.msra.mxu0 0.0
    %4248 = vmatprep.subr.mxu0 0.0
    %4249 = vmatpush1.msra.mxu0 0.0
    %4250 = vmatprep.subr.mxu0 0.0
    %4251 = vmatpush1.msra.mxu0 0.0
    %4252 = vmatprep.subr.mxu0 0.0
    %4253 = vmatpush1.msra.mxu0 0.0
    %4254 = vmatprep.subr.mxu0 0.0
    %4255 = vmatpush1.msra.mxu0 0.0
    %4256 = vmatprep.subr.mxu0 0.0
    %4257 = vmatpush1.msra.mxu0 0.0
    %4258 = vmatprep.subr.mxu0 0.0
    %4259 = vmatpush1.msra.mxu0 0.0
    %4260 = vmatprep.subr.mxu0 0.0
    %4261 = vmatpush1.msra.mxu0 0.0
    %4262 = vmatprep.subr.mxu0 0.0
    %4263 = vmatpush1.msra.mxu0 0.0
    %4264 = vmatprep.subr.mxu0 0.0
    %4265 = vmatpush1.msra.mxu0 0.0
    %4266 = vmatprep.subr.mxu0 0.0
    %4267 = vmatpush1.msra.mxu0 0.0
    %4268 = vmatprep.subr.mxu0 0.0
    %4269 = vmatpush1.msra.mxu0 0.0
    %4270 = vmatprep.subr.mxu0 0.0
    %4271 = vmatpush1.msra.mxu0 0.0
    %4272 = vmatprep.subr.mxu0 0.0
    %4273 = vmatpush1.msra.mxu0 0.0
    %4274 = vmatprep.subr.mxu0 0.0
    %4275 = vmatpush1.msra.mxu0 0.0
    %4276 = vmatprep.subr.mxu0 0.0
    %4277 = vmatpush1.msra.mxu0 0.0
    %4278 = vmatprep.subr.mxu0 0.0
    %4279 = vmatpush1.msra.mxu0 0.0
    %4280 = vmatprep.subr.mxu0 0.0
    %4281 = vmatpush1.msra.mxu0 0.0
    %4282 = vmatprep.subr.mxu0 0.0
    %4283 = vmatpush1.msra.mxu0 0.0
    %4284 = vmatprep.subr.mxu0 0.0
    %4285 = vmatpush1.msra.mxu0 0.0
    %4286 = vmatprep.subr.mxu0 0.0
    %4287 = vmatpush1.msra.mxu0 0.0
    %4288 = vmatprep.subr.mxu0 0.0
    %4289 = vmatpush1.msra.mxu0 0.0
    %4290 = vmatprep.subr.mxu0 0.0
    %4291 = vmatpush1.msra.mxu0 0.0
    %4292 = vmatprep.subr.mxu0 0.0
    %4293 = vmatpush1.msra.mxu0 0.0
    %4294 = vmatprep.subr.mxu0 0.0
    %4295 = vmatpush1.msra.mxu0 0.0
    %4296 = vmatprep.mubr.f32.mxu0 0.0
    %4297 = vmatmul.mubr.f32.gmra.mrb[0].mxu0 %v4228
    %v4298 = vpop.f32.mrb[0].mxu0
    %v4299 = vadd.f32 %v4222, %v4298
    %v4300 = vpop.f32.mrb[0].mxu0
    %4301 = vmatprep.mubr.f32.mxu0 0.0
    %4302 = vmatmul.mubr.f32.gmra.mrb[0].mxu0 %v4230
    %v4303 = vpop.f32.mrb[0].mxu0
    %v4304 = vadd.f32 %v4222, %v4303
    %v4305 = vpop.f32.mrb[0].mxu0
    %4306 = vdwg.mxu0
    %v4307 = vld [vmem:[#allocation17] sm:$0xff]
    %v4308 = vld [vmem:[#allocation17 + $0x8] sm:$0xff]
    %v4309 = vld [vmem:[#allocation17 + $0x10] sm:$0xff]
    %v4310 = vld [vmem:[#allocation17 + $0x18] sm:$0xff]
    %v4311 = vld [vmem:[%s12] sm:$0x1]
    %v4313 = vlaneseq
    %v4314 = vshrl.u32 %v4313, 7
    %v4315 = vsub.s32 0, %v4314
    %v4316 = vrot.slane %v4311, %v4315
    %4318 = vrot.lane.b32.xlu0 %v4116, 64
    %v4319 = vpop.permute.xlu0 %4318
    %4320 = vrot.lane.b32.xlu0 %v4117, 64
    %v4321 = vpop.permute.xlu0 %4320
    %v4322 = vsel %vm4129, %v4319, 0
    %v4324 = vsel %vm4129, %v4321, 0
    %4326 = vmatprep.subr.mxu0 0.0
    %4327 = vmatpush1.msra.mxu0 %v4307
    %4328 = vmatprep.subr.mxu0 0.0
    %4329 = vmatpush1.msra.mxu0 %v4308
    %4330 = vmatprep.subr.mxu0 0.0
    %4331 = vmatpush1.msra.mxu0 %v4309
    %4332 = vmatprep.subr.mxu0 0.0
    %4333 = vmatpush1.msra.mxu0 %v4310
    %4334 = vmatprep.subr.mxu0 0.0
    %4335 = vmatpush1.msra.mxu0 0.0
    %4336 = vmatprep.subr.mxu0 0.0
    %4337 = vmatpush1.msra.mxu0 0.0
    %4338 = vmatprep.subr.mxu0 0.0
    %4339 = vmatpush1.msra.mxu0 0.0
    %4340 = vmatprep.subr.mxu0 0.0
    %4341 = vmatpush1.msra.mxu0 0.0
    %4342 = vmatprep.subr.mxu0 0.0
    %4343 = vmatpush1.msra.mxu0 0.0
    %4344 = vmatprep.subr.mxu0 0.0
    %4345 = vmatpush1.msra.mxu0 0.0
    %4346 = vmatprep.subr.mxu0 0.0
    %4347 = vmatpush1.msra.mxu0 0.0
    %4348 = vmatprep.subr.mxu0 0.0
    %4349 = vmatpush1.msra.mxu0 0.0
    %4350 = vmatprep.subr.mxu0 0.0
    %4351 = vmatpush1.msra.mxu0 0.0
    %4352 = vmatprep.subr.mxu0 0.0
    %4353 = vmatpush1.msra.mxu0 0.0
    %4354 = vmatprep.subr.mxu0 0.0
    %4355 = vmatpush1.msra.mxu0 0.0
    %4356 = vmatprep.subr.mxu0 0.0
    %4357 = vmatpush1.msra.mxu0 0.0
    %4358 = vmatprep.subr.mxu0 0.0
    %4359 = vmatpush1.msra.mxu0 0.0
    %4360 = vmatprep.subr.mxu0 0.0
    %4361 = vmatpush1.msra.mxu0 0.0
    %4362 = vmatprep.subr.mxu0 0.0
    %4363 = vmatpush1.msra.mxu0 0.0
    %4364 = vmatprep.subr.mxu0 0.0
    %4365 = vmatpush1.msra.mxu0 0.0
    %4366 = vmatprep.subr.mxu0 0.0
    %4367 = vmatpush1.msra.mxu0 0.0
    %4368 = vmatprep.subr.mxu0 0.0
    %4369 = vmatpush1.msra.mxu0 0.0
    %4370 = vmatprep.subr.mxu0 0.0
    %4371 = vmatpush1.msra.mxu0 0.0
    %4372 = vmatprep.subr.mxu0 0.0
    %4373 = vmatpush1.msra.mxu0 0.0
    %4374 = vmatprep.subr.mxu0 0.0
    %4375 = vmatpush1.msra.mxu0 0.0
    %4376 = vmatprep.subr.mxu0 0.0
    %4377 = vmatpush1.msra.mxu0 0.0
    %4378 = vmatprep.subr.mxu0 0.0
    %4379 = vmatpush1.msra.mxu0 0.0
    %4380 = vmatprep.subr.mxu0 0.0
    %4381 = vmatpush1.msra.mxu0 0.0
    %4382 = vmatprep.subr.mxu0 0.0
    %4383 = vmatpush1.msra.mxu0 0.0
    %4384 = vmatprep.subr.mxu0 0.0
    %4385 = vmatpush1.msra.mxu0 0.0
    %4386 = vmatprep.subr.mxu0 0.0
    %4387 = vmatpush1.msra.mxu0 0.0
    %4388 = vmatprep.subr.mxu0 0.0
    %4389 = vmatpush1.msra.mxu0 0.0
    %4390 = vmatprep.mubr.f32.mxu0 0.0
    %4391 = vmatmul.mubr.f32.gmra.mrb[0].mxu0 %v4322
    %v4392 = vpop.f32.mrb[0].mxu0
    %v4393 = vadd.f32 %v4316, %v4392
    %v4394 = vpop.f32.mrb[0].mxu0
    %4395 = vmatprep.mubr.f32.mxu0 0.0
    %4396 = vmatmul.mubr.f32.gmra.mrb[0].mxu0 %v4324
    %v4397 = vpop.f32.mrb[0].mxu0
    %v4398 = vadd.f32 %v4316, %v4397
    %v4399 = vpop.f32.mrb[0].mxu0
    %4400 = vdwg.mxu0
    %4403 = vrot.lane.b32.xlu0 %v4211, 120
    %v4404 = vpop.permute.xlu0 %4403
    %4405 = vrot.lane.b32.xlu0 %v4212, 120
    %v4406 = vpop.permute.xlu0 %4405
    %4407 = vrot.lane.b32.xlu0 %v4211, 112
    %v4408 = vpop.permute.xlu0 %4407
    %4409 = vrot.lane.b32.xlu0 %v4212, 112
    %v4410 = vpop.permute.xlu0 %4409
    %4411 = vrot.lane.b32.xlu0 %v4211, 104
    %v4412 = vpop.permute.xlu0 %4411
    %4413 = vrot.lane.b32.xlu0 %v4212, 104
    %v4414 = vpop.permute.xlu0 %4413
    %4417 = vrot.lane.b32.xlu0 %v4299, 120
    %v4418 = vpop.permute.xlu0 %4417
    %4419 = vrot.lane.b32.xlu0 %v4304, 120
    %v4420 = vpop.permute.xlu0 %4419
    %4421 = vrot.lane.b32.xlu0 %v4299, 112
    %v4422 = vpop.permute.xlu0 %4421
    %4423 = vrot.lane.b32.xlu0 %v4304, 112
    %v4424 = vpop.permute.xlu0 %4423
    %4425 = vrot.lane.b32.xlu0 %v4299, 104
    %v4426 = vpop.permute.xlu0 %4425
    %4427 = vrot.lane.b32.xlu0 %v4304, 104
    %v4428 = vpop.permute.xlu0 %4427
    %4431 = vrot.lane.b32.xlu0 %v4393, 120
    %v4432 = vpop.permute.xlu0 %4431
    %4433 = vrot.lane.b32.xlu0 %v4398, 120
    %v4434 = vpop.permute.xlu0 %4433
    %4437 = vrot.lane.b32.xlu0 %v4393, 112
    %v4438 = vpop.permute.xlu0 %4437
    %4439 = vrot.lane.b32.xlu0 %v4398, 112
    %v4440 = vpop.permute.xlu0 %4439
    %4443 = vrot.lane.b32.xlu0 %v4393, 104
    %v4444 = vpop.permute.xlu0 %4443
    %4445 = vrot.lane.b32.xlu0 %v4398, 104
    %v4446 = vpop.permute.xlu0 %4445
    %v4449 = vld [vmem:[#allocation18] sm:$0xff]
    %v4450 = vld [vmem:[#allocation18 + $0x8] sm:$0xff]
    %v4451 = vld [vmem:[#allocation18 + $0x10] sm:$0xff]
    %v4452 = vld [vmem:[#allocation18 + $0x18] sm:$0xff]
    %v4453 = vld [vmem:[#allocation18 + $0x20] sm:$0xff]
    %v4454 = vld [vmem:[#allocation18 + $0x28] sm:$0xff]
    %v4455 = vld [vmem:[#allocation18 + $0x30] sm:$0xff]
    %v4456 = vld [vmem:[#allocation18 + $0x38] sm:$0xff]
    %vm4457 = vcmask 64512
    %v4458 = vsel %vm4457, %v4211, 0
    %v4460 = vsel %vm4457, %v4212, 0
    %v4462 = vsel %vm4457, %v4404, 0
    %v4464 = vsel %vm4457, %v4406, 0
    %v4466 = vsel %vm4457, %v4408, 0
    %v4468 = vsel %vm4457, %v4410, 0
    %v4470 = vsel %vm4457, %v4412, 0
    %v4472 = vsel %vm4457, %v4414, 0
    %v4474 = vsel %vm4457, %v4299, 0
    %v4476 = vsel %vm4457, %v4304, 0
    %v4478 = vsel %vm4457, %v4418, 0
    %v4480 = vsel %vm4457, %v4420, 0
    %v4482 = vsel %vm4457, %v4422, 0
    %v4484 = vsel %vm4457, %v4424, 0
    %v4486 = vsel %vm4457, %v4426, 0
    %v4488 = vsel %vm4457, %v4428, 0
    %4490 = vmatprep.subr.mxu0 0.0
    %4491 = vmatpush1.xpose.msra.mxu0 %v4474
    %4492 = vmatprep.subr.mxu0 0.0
    %4493 = vmatpush1.xpose.msra.mxu0 %v4476
    %4494 = vmatprep.subr.mxu0 0.0
    %4495 = vmatpush1.xpose.msra.mxu0 %v4478
    %4496 = vmatprep.subr.mxu0 0.0
    %4497 = vmatpush1.xpose.msra.mxu0 %v4480
    %4498 = vmatprep.subr.mxu0 0.0
    %4499 = vmatpush1.xpose.msra.mxu0 %v4482
    %4500 = vmatprep.subr.mxu0 0.0
    %4501 = vmatpush1.xpose.msra.mxu0 %v4484
    %4502 = vmatprep.subr.mxu0 0.0
    %4503 = vmatpush1.xpose.msra.mxu0 %v4486
    %4504 = vmatprep.subr.mxu0 0.0
    %4505 = vmatpush1.xpose.msra.mxu0 %v4488
    %4506 = vmatprep.subr.mxu0 0.0
    %4507 = vmatpush1.xpose.msra.mxu0 0.0
    %4508 = vmatprep.subr.mxu0 0.0
    %4509 = vmatpush1.xpose.msra.mxu0 0.0
    %4510 = vmatprep.subr.mxu0 0.0
    %4511 = vmatpush1.xpose.msra.mxu0 0.0
    %4512 = vmatprep.subr.mxu0 0.0
    %4513 = vmatpush1.xpose.msra.mxu0 0.0
    %4514 = vmatprep.subr.mxu0 0.0
    %4515 = vmatpush1.xpose.msra.mxu0 0.0
    %4516 = vmatprep.subr.mxu0 0.0
    %4517 = vmatpush1.xpose.msra.mxu0 0.0
    %4518 = vmatprep.subr.mxu0 0.0
    %4519 = vmatpush1.xpose.msra.mxu0 0.0
    %4520 = vmatprep.subr.mxu0 0.0
    %4521 = vmatpush1.xpose.msra.mxu0 0.0
    %4522 = vmatprep.subr.mxu0 0.0
    %4523 = vmatpush1.xpose.msra.mxu0 0.0
    %4524 = vmatprep.subr.mxu0 0.0
    %4525 = vmatpush1.xpose.msra.mxu0 0.0
    %4526 = vmatprep.subr.mxu0 0.0
    %4527 = vmatpush1.xpose.msra.mxu0 0.0
    %4528 = vmatprep.subr.mxu0 0.0
    %4529 = vmatpush1.xpose.msra.mxu0 0.0
    %4530 = vmatprep.subr.mxu0 0.0
    %4531 = vmatpush1.xpose.msra.mxu0 0.0
    %4532 = vmatprep.subr.mxu0 0.0
    %4533 = vmatpush1.xpose.msra.mxu0 0.0
    %4534 = vmatprep.subr.mxu0 0.0
    %4535 = vmatpush1.xpose.msra.mxu0 0.0
    %4536 = vmatprep.subr.mxu0 0.0
    %4537 = vmatpush1.xpose.msra.mxu0 0.0
    %4538 = vmatprep.subr.mxu0 0.0
    %4539 = vmatpush1.xpose.msra.mxu0 0.0
    %4540 = vmatprep.subr.mxu0 0.0
    %4541 = vmatpush1.xpose.msra.mxu0 0.0
    %4542 = vmatprep.subr.mxu0 0.0
    %4543 = vmatpush1.xpose.msra.mxu0 0.0
    %4544 = vmatprep.subr.mxu0 0.0
    %4545 = vmatpush1.xpose.msra.mxu0 0.0
    %4546 = vmatprep.subr.mxu0 0.0
    %4547 = vmatpush1.xpose.msra.mxu0 0.0
    %4548 = vmatprep.subr.mxu0 0.0
    %4549 = vmatpush1.xpose.msra.mxu0 0.0
    %4550 = vmatprep.subr.mxu0 0.0
    %4551 = vmatpush1.xpose.msra.mxu0 0.0
    %4552 = vmatprep.subr.mxu0 0.0
    %4553 = vmatpush1.xpose.msra.mxu0 0.0
    %4554 = vmatprep.mubr.f32.mxu0 0.0
    %4555 = vmatmul.mubr.f32.gmra.mrb[0].mxu0 %v4458
    %v4556 = vpop.f32.mrb[0].mxu0
    %v4557 = vadd.f32 %v4449, %v4556
    %v4558 = vpop.f32.mrb[0].mxu0
    %4559 = vmatprep.mubr.f32.mxu0 0.0
    %4560 = vmatmul.mubr.f32.gmra.mrb[0].mxu0 %v4460
    %v4561 = vpop.f32.mrb[0].mxu0
    %v4562 = vadd.f32 %v4450, %v4561
    %v4563 = vpop.f32.mrb[0].mxu0
    %4564 = vmatprep.mubr.f32.mxu0 0.0
    %4565 = vmatmul.mubr.f32.gmra.mrb[0].mxu0 %v4462
    %v4566 = vpop.f32.mrb[0].mxu0
    %v4567 = vadd.f32 %v4451, %v4566
    %v4568 = vpop.f32.mrb[0].mxu0
    %4569 = vmatprep.mubr.f32.mxu0 0.0
    %4570 = vmatmul.mubr.f32.gmra.mrb[0].mxu0 %v4464
    %v4571 = vpop.f32.mrb[0].mxu0
    %v4572 = vadd.f32 %v4452, %v4571
    %v4573 = vpop.f32.mrb[0].mxu0
    %4574 = vmatprep.mubr.f32.mxu0 0.0
    %4575 = vmatmul.mubr.f32.gmra.mrb[0].mxu0 %v4466
    %v4576 = vpop.f32.mrb[0].mxu0
    %v4577 = vadd.f32 %v4453, %v4576
    %v4578 = vpop.f32.mrb[0].mxu0
    %4579 = vmatprep.mubr.f32.mxu0 0.0
    %4580 = vmatmul.mubr.f32.gmra.mrb[0].mxu0 %v4468
    %v4581 = vpop.f32.mrb[0].mxu0
    %v4582 = vadd.f32 %v4454, %v4581
    %v4583 = vpop.f32.mrb[0].mxu0
    %4584 = vmatprep.mubr.f32.mxu0 0.0
    %4585 = vmatmul.mubr.f32.gmra.mrb[0].mxu0 %v4470
    %v4586 = vpop.f32.mrb[0].mxu0
    %v4587 = vadd.f32 %v4455, %v4586
    %v4588 = vpop.f32.mrb[0].mxu0
    %4589 = vmatprep.mubr.f32.mxu0 0.0
    %4590 = vmatmul.mubr.f32.gmra.mrb[0].mxu0 %v4472
    %v4591 = vpop.f32.mrb[0].mxu0
    %v4592 = vadd.f32 %v4456, %v4591
    %v4593 = vpop.f32.mrb[0].mxu0
    %4594 = vdwg.mxu0
    %v4595 = vsel %vm618, %v4557, -inf
    %4596 = vmax.xlane.f32.xlu0 %v4595
    %v4597 = vpop.xlane.xlu0 %4596
    %v4598 = vsel %vm618, %v4562, -inf
    %4599 = vmax.xlane.f32.xlu0 %v4598
    %v4600 = vpop.xlane.xlu0 %4599
    %v4601 = vsel %vm618, %v4567, -inf
    %4602 = vmax.xlane.f32.xlu0 %v4601
    %v4603 = vpop.xlane.xlu0 %4602
    %v4604 = vsel %vm618, %v4572, -inf
    %4605 = vmax.xlane.f32.xlu0 %v4604
    %v4606 = vpop.xlane.xlu0 %4605
    %v4607 = vsel %vm618, %v4577, -inf
    %4608 = vmax.xlane.f32.xlu0 %v4607
    %v4609 = vpop.xlane.xlu0 %4608
    %v4610 = vsel %vm618, %v4582, -inf
    %4611 = vmax.xlane.f32.xlu0 %v4610
    %v4612 = vpop.xlane.xlu0 %4611
    %v4613 = vsel %vm618, %v4587, -inf
    %4614 = vmax.xlane.f32.xlu0 %v4613
    %v4615 = vpop.xlane.xlu0 %4614
    %v4616 = vsel %vm618, %v4592, -inf
    %4617 = vmax.xlane.f32.xlu0 %v4616
    %v4618 = vpop.xlane.xlu0 %4617
    %v4619 = vsub.f32 %v4557, %v4597
    %v4620 = vsub.f32 %v4562, %v4600
    %v4621 = vsub.f32 %v4567, %v4603
    %v4622 = vsub.f32 %v4572, %v4606
    %v4623 = vsub.f32 %v4577, %v4609
    %v4624 = vsub.f32 %v4582, %v4612
    %v4625 = vsub.f32 %v4587, %v4615
    %v4626 = vsub.f32 %v4592, %v4618
    %v4627 = vmul.f32 %v4619, 1.442695
    %v4628 = vpow.pop %v4627
    %v4629 = vmul.f32 %v4620, 1.442695
    %v4630 = vpow.pop %v4629
    %v4631 = vmul.f32 %v4621, 1.442695
    %v4632 = vpow.pop %v4631
    %v4633 = vmul.f32 %v4622, 1.442695
    %v4634 = vpow.pop %v4633
    %v4635 = vmul.f32 %v4623, 1.442695
    %v4636 = vpow.pop %v4635
    %v4637 = vmul.f32 %v4624, 1.442695
    %v4638 = vpow.pop %v4637
    %v4639 = vmul.f32 %v4625, 1.442695
    %v4640 = vpow.pop %v4639
    %v4641 = vmul.f32 %v4626, 1.442695
    %v4642 = vpow.pop %v4641
    %v4643 = vsel %vm618, %v4628, 0.0
    %4644 = vadd.xlane.f32.xlu0 %v4643
    %v4645 = vpop.xlane.xlu0 %4644
    %v4646 = vsel %vm618, %v4630, 0.0
    %4647 = vadd.xlane.f32.xlu0 %v4646
    %v4648 = vpop.xlane.xlu0 %4647
    %v4649 = vsel %vm618, %v4632, 0.0
    %4650 = vadd.xlane.f32.xlu0 %v4649
    %v4651 = vpop.xlane.xlu0 %4650
    %v4652 = vsel %vm618, %v4634, 0.0
    %4653 = vadd.xlane.f32.xlu0 %v4652
    %v4654 = vpop.xlane.xlu0 %4653
    %v4655 = vsel %vm618, %v4636, 0.0
    %4656 = vadd.xlane.f32.xlu0 %v4655
    %v4657 = vpop.xlane.xlu0 %4656
    %v4658 = vsel %vm618, %v4638, 0.0
    %4659 = vadd.xlane.f32.xlu0 %v4658
    %v4660 = vpop.xlane.xlu0 %4659
    %v4661 = vsel %vm618, %v4640, 0.0
    %4662 = vadd.xlane.f32.xlu0 %v4661
    %v4663 = vpop.xlane.xlu0 %4662
    %v4664 = vsel %vm618, %v4642, 0.0
    %4665 = vadd.xlane.f32.xlu0 %v4664
    %v4666 = vpop.xlane.xlu0 %4665
    %v4667 = vrcp.pop %v4645
    %v4668 = vmul.f32 %v4628, %v4667
    %v4669 = vrcp.pop %v4648
    %v4670 = vmul.f32 %v4630, %v4669
    %v4671 = vrcp.pop %v4651
    %v4672 = vmul.f32 %v4632, %v4671
    %v4673 = vrcp.pop %v4654
    %v4674 = vmul.f32 %v4634, %v4673
    %v4675 = vrcp.pop %v4657
    %v4676 = vmul.f32 %v4636, %v4675
    %v4677 = vrcp.pop %v4660
    %v4678 = vmul.f32 %v4638, %v4677
    %v4679 = vrcp.pop %v4663
    %v4680 = vmul.f32 %v4640, %v4679
    %v4681 = vrcp.pop %v4666
    %v4682 = vmul.f32 %v4642, %v4681
    %v4684 = vsel %vm618, %v4668, 0
    %v4687 = vsel %vm618, %v4670, 0
    %v4690 = vsel %vm618, %v4672, 0
    %v4693 = vsel %vm618, %v4674, 0
    %v4696 = vsel %vm618, %v4676, 0
    %v4699 = vsel %vm618, %v4678, 0
    %v4702 = vsel %vm618, %v4680, 0
    %v4705 = vsel %vm618, %v4682, 0
    %4707 = vmatprep.subr.mxu0 0.0
    %4708 = vmatpush1.msra.mxu0 %v4393
    %4709 = vmatprep.subr.mxu0 0.0
    %4710 = vmatpush1.msra.mxu0 %v4398
    %4711 = vmatprep.subr.mxu0 0.0
    %4712 = vmatpush1.msra.mxu0 %v4432
    %4713 = vmatprep.subr.mxu0 0.0
    %4714 = vmatpush1.msra.mxu0 %v4434
    %4715 = vmatprep.subr.mxu0 0.0
    %4716 = vmatpush1.msra.mxu0 %v4438
    %4717 = vmatprep.subr.mxu0 0.0
    %4718 = vmatpush1.msra.mxu0 %v4440
    %4719 = vmatprep.subr.mxu0 0.0
    %4720 = vmatpush1.msra.mxu0 %v4444
    %4721 = vmatprep.subr.mxu0 0.0
    %4722 = vmatpush1.msra.mxu0 %v4446
    %4723 = vmatprep.subr.mxu0 0.0
    %4724 = vmatpush1.msra.mxu0 0.0
    %4725 = vmatprep.subr.mxu0 0.0
    %4726 = vmatpush1.msra.mxu0 0.0
    %4727 = vmatprep.subr.mxu0 0.0
    %4728 = vmatpush1.msra.mxu0 0.0
    %4729 = vmatprep.subr.mxu0 0.0
    %4730 = vmatpush1.msra.mxu0 0.0
    %4731 = vmatprep.subr.mxu0 0.0
    %4732 = vmatpush1.msra.mxu0 0.0
    %4733 = vmatprep.subr.mxu0 0.0
    %4734 = vmatpush1.msra.mxu0 0.0
    %4735 = vmatprep.subr.mxu0 0.0
    %4736 = vmatpush1.msra.mxu0 0.0
    %4737 = vmatprep.subr.mxu0 0.0
    %4738 = vmatpush1.msra.mxu0 0.0
    %4739 = vmatprep.subr.mxu0 0.0
    %4740 = vmatpush1.msra.mxu0 0.0
    %4741 = vmatprep.subr.mxu0 0.0
    %4742 = vmatpush1.msra.mxu0 0.0
    %4743 = vmatprep.subr.mxu0 0.0
    %4744 = vmatpush1.msra.mxu0 0.0
    %4745 = vmatprep.subr.mxu0 0.0
    %4746 = vmatpush1.msra.mxu0 0.0
    %4747 = vmatprep.subr.mxu0 0.0
    %4748 = vmatpush1.msra.mxu0 0.0
    %4749 = vmatprep.subr.mxu0 0.0
    %4750 = vmatpush1.msra.mxu0 0.0
    %4751 = vmatprep.subr.mxu0 0.0
    %4752 = vmatpush1.msra.mxu0 0.0
    %4753 = vmatprep.subr.mxu0 0.0
    %4754 = vmatpush1.msra.mxu0 0.0
    %4755 = vmatprep.subr.mxu0 0.0
    %4756 = vmatpush1.msra.mxu0 0.0
    %4757 = vmatprep.subr.mxu0 0.0
    %4758 = vmatpush1.msra.mxu0 0.0
    %4759 = vmatprep.subr.mxu0 0.0
    %4760 = vmatpush1.msra.mxu0 0.0
    %4761 = vmatprep.subr.mxu0 0.0
    %4762 = vmatpush1.msra.mxu0 0.0
    %4763 = vmatprep.subr.mxu0 0.0
    %4764 = vmatpush1.msra.mxu0 0.0
    %4765 = vmatprep.subr.mxu0 0.0
    %4766 = vmatpush1.msra.mxu0 0.0
    %4767 = vmatprep.subr.mxu0 0.0
    %4768 = vmatpush1.msra.mxu0 0.0
    %4769 = vmatprep.subr.mxu0 0.0
    %4770 = vmatpush1.msra.mxu0 0.0
    %4771 = vmatprep.mubr.f32.mxu0 0.0
    %4772 = vmatmul.mubr.f32.gmra.mrb[0].mxu0 %v4684
    %v4773 = vpop.f32.mrb[0].mxu0
    %v4774 = vadd.f32 0.0, %v4773
    %v4775 = vpop.f32.mrb[0].mxu0
    %4776 = vmatprep.mubr.f32.mxu0 0.0
    %4777 = vmatmul.mubr.f32.gmra.mrb[0].mxu0 %v4687
    %v4778 = vpop.f32.mrb[0].mxu0
    %v4779 = vadd.f32 0.0, %v4778
    %v4780 = vpop.f32.mrb[0].mxu0
    %4781 = vmatprep.mubr.f32.mxu0 0.0
    %4782 = vmatmul.mubr.f32.gmra.mrb[0].mxu0 %v4690
    %v4783 = vpop.f32.mrb[0].mxu0
    %v4784 = vadd.f32 0.0, %v4783
    %v4785 = vpop.f32.mrb[0].mxu0
    %4786 = vmatprep.mubr.f32.mxu0 0.0
    %4787 = vmatmul.mubr.f32.gmra.mrb[0].mxu0 %v4693
    %v4788 = vpop.f32.mrb[0].mxu0
    %v4789 = vadd.f32 0.0, %v4788
    %v4790 = vpop.f32.mrb[0].mxu0
    %4791 = vmatprep.mubr.f32.mxu0 0.0
    %4792 = vmatmul.mubr.f32.gmra.mrb[0].mxu0 %v4696
    %v4793 = vpop.f32.mrb[0].mxu0
    %v4794 = vadd.f32 0.0, %v4793
    %v4795 = vpop.f32.mrb[0].mxu0
    %4796 = vmatprep.mubr.f32.mxu0 0.0
    %4797 = vmatmul.mubr.f32.gmra.mrb[0].mxu0 %v4699
    %v4798 = vpop.f32.mrb[0].mxu0
    %v4799 = vadd.f32 0.0, %v4798
    %v4800 = vpop.f32.mrb[0].mxu0
    %4801 = vmatprep.mubr.f32.mxu0 0.0
    %4802 = vmatmul.mubr.f32.gmra.mrb[0].mxu0 %v4702
    %v4803 = vpop.f32.mrb[0].mxu0
    %v4804 = vadd.f32 0.0, %v4803
    %v4805 = vpop.f32.mrb[0].mxu0
    %4806 = vmatprep.mubr.f32.mxu0 0.0
    %4807 = vmatmul.mubr.f32.gmra.mrb[0].mxu0 %v4705
    %v4808 = vpop.f32.mrb[0].mxu0
    %v4809 = vadd.f32 0.0, %v4808
    %v4810 = vpop.f32.mrb[0].mxu0
    %4811 = vdwg.mxu0
    %4814 = vrot.lane.b32.xlu0 %v4784, 8
    %v4815 = vpop.permute.xlu0 %4814
    %4816 = vrot.lane.b32.xlu0 %v4789, 8
    %v4817 = vpop.permute.xlu0 %4816
    %4822 = vrot.lane.b32.xlu0 %v4794, 16
    %v4823 = vpop.permute.xlu0 %4822
    %4824 = vrot.lane.b32.xlu0 %v4799, 16
    %v4825 = vpop.permute.xlu0 %4824
    %4830 = vrot.lane.b32.xlu0 %v4804, 24
    %v4831 = vpop.permute.xlu0 %4830
    %4832 = vrot.lane.b32.xlu0 %v4809, 24
    %v4833 = vpop.permute.xlu0 %4832
    %v4836 = vsel %vm4457, %v4774, %v4815
    %v4837 = vsel %vm4457, %v4779, %v4817
    %vm4838 = vcmask 130048
    %v4839 = vsel %vm4838, %v4836, %v4823
    %v4840 = vsel %vm4838, %v4837, %v4825
    %vm4841 = vcmask 195584
    %v4842 = vsel %vm4841, %v4839, %v4831
    %v4843 = vsel %vm4841, %v4840, %v4833
    %v4844 = vld [vmem:[%s9] sm:$0xff]
    %v4845 = vld [vmem:[%s9 + $0x8] sm:$0xff]
    %v4846 = vld [vmem:[%s9 + $0x10] sm:$0xff]
    %v4847 = vld [vmem:[%s9 + $0x18] sm:$0xff]
    %v4848 = vld [vmem:[%s13] sm:$0x1]
    %v4850 = vlaneseq
    %v4851 = vshrl.u32 %v4850, 7
    %v4852 = vsub.s32 0, %v4851
    %v4853 = vrot.slane %v4848, %v4852
    %v4856 = vsel %vm4129, %v4842, 0
    %v4859 = vsel %vm4129, %v4843, 0
    %4861 = vmatprep.subr.mxu0 0.0
    %4862 = vmatpush1.msra.mxu0 %v4844
    %4863 = vmatprep.subr.mxu0 0.0
    %4864 = vmatpush1.msra.mxu0 %v4845
    %4865 = vmatprep.subr.mxu0 0.0
    %4866 = vmatpush1.msra.mxu0 %v4846
    %4867 = vmatprep.subr.mxu0 0.0
    %4868 = vmatpush1.msra.mxu0 %v4847
    %4869 = vmatprep.subr.mxu0 0.0
    %4870 = vmatpush1.msra.mxu0 0.0
    %4871 = vmatprep.subr.mxu0 0.0
    %4872 = vmatpush1.msra.mxu0 0.0
    %4873 = vmatprep.subr.mxu0 0.0
    %4874 = vmatpush1.msra.mxu0 0.0
    %4875 = vmatprep.subr.mxu0 0.0
    %4876 = vmatpush1.msra.mxu0 0.0
    %4877 = vmatprep.subr.mxu0 0.0
    %4878 = vmatpush1.msra.mxu0 0.0
    %4879 = vmatprep.subr.mxu0 0.0
    %4880 = vmatpush1.msra.mxu0 0.0
    %4881 = vmatprep.subr.mxu0 0.0
    %4882 = vmatpush1.msra.mxu0 0.0
    %4883 = vmatprep.subr.mxu0 0.0
    %4884 = vmatpush1.msra.mxu0 0.0
    %4885 = vmatprep.subr.mxu0 0.0
    %4886 = vmatpush1.msra.mxu0 0.0
    %4887 = vmatprep.subr.mxu0 0.0
    %4888 = vmatpush1.msra.mxu0 0.0
    %4889 = vmatprep.subr.mxu0 0.0
    %4890 = vmatpush1.msra.mxu0 0.0
    %4891 = vmatprep.subr.mxu0 0.0
    %4892 = vmatpush1.msra.mxu0 0.0
    %4893 = vmatprep.subr.mxu0 0.0
    %4894 = vmatpush1.msra.mxu0 0.0
    %4895 = vmatprep.subr.mxu0 0.0
    %4896 = vmatpush1.msra.mxu0 0.0
    %4897 = vmatprep.subr.mxu0 0.0
    %4898 = vmatpush1.msra.mxu0 0.0
    %4899 = vmatprep.subr.mxu0 0.0
    %4900 = vmatpush1.msra.mxu0 0.0
    %4901 = vmatprep.subr.mxu0 0.0
    %4902 = vmatpush1.msra.mxu0 0.0
    %4903 = vmatprep.subr.mxu0 0.0
    %4904 = vmatpush1.msra.mxu0 0.0
    %4905 = vmatprep.subr.mxu0 0.0
    %4906 = vmatpush1.msra.mxu0 0.0
    %4907 = vmatprep.subr.mxu0 0.0
    %4908 = vmatpush1.msra.mxu0 0.0
    %4909 = vmatprep.subr.mxu0 0.0
    %4910 = vmatpush1.msra.mxu0 0.0
    %4911 = vmatprep.subr.mxu0 0.0
    %4912 = vmatpush1.msra.mxu0 0.0
    %4913 = vmatprep.subr.mxu0 0.0
    %4914 = vmatpush1.msra.mxu0 0.0
    %4915 = vmatprep.subr.mxu0 0.0
    %4916 = vmatpush1.msra.mxu0 0.0
    %4917 = vmatprep.subr.mxu0 0.0
    %4918 = vmatpush1.msra.mxu0 0.0
    %4919 = vmatprep.subr.mxu0 0.0
    %4920 = vmatpush1.msra.mxu0 0.0
    %4921 = vmatprep.subr.mxu0 0.0
    %4922 = vmatpush1.msra.mxu0 0.0
    %4923 = vmatprep.subr.mxu0 0.0
    %4924 = vmatpush1.msra.mxu0 0.0
    %4925 = vmatprep.mubr.f32.mxu0 0.0
    %4926 = vmatmul.mubr.f32.gmra.mrb[0].mxu0 %v4856
    %v4927 = vpop.f32.mrb[0].mxu0
    %v4928 = vadd.f32 %v4853, %v4927
    %v4929 = vpop.f32.mrb[0].mxu0
    %4930 = vmatprep.mubr.f32.mxu0 0.0
    %4931 = vmatmul.mubr.f32.gmra.mrb[0].mxu0 %v4859
    %v4932 = vpop.f32.mrb[0].mxu0
    %v4933 = vadd.f32 %v4853, %v4932
    %v4934 = vpop.f32.mrb[0].mxu0
    %4935 = vdwg.mxu0
    %4936 = vst.msk [vmem:[#allocation20] sm:$0xff] %vm4129, %v4928
    %4937 = vst.msk [vmem:[#allocation20 + $0x8] sm:$0xff] %vm4129, %v4933
    // Predicated region
    $region102: #{tpu_custom_call.1} parent=1 // pred_check
      _
    $region103: #{tpu_custom_call.1} parent=1 // pred_check_branch
      %4939 = sbr.rel (0) target = $region105
    $region104: #{tpu_custom_call.1} parent=1 // pred_region
      %s4941 = ssub.s32 256, 256
      %4942 = vsyncadd [#allocation5], %s4941
      %s4943 = sshll.u32 [#allocation20], 4
      %s4944 = int_to_ptr.vmem [resolvable:$true] %s4943
      %4949 = dma.vmem_to_hbm [thread:$0]  %s4944, 256, %s15, [#allocation5], 128, 128, 8
    $region105: #{tpu_custom_call.1} parent=1 // pred_fallthru
      _
    // Predicated region
    $region106: #{tpu_custom_call.1} parent=1 // pred_check
      _
    $region107: #{tpu_custom_call.1} parent=1 // pred_check_branch
      %4951 = sbr.rel (0) target = $region109
    $region108: #{tpu_custom_call.1} parent=1 // pred_region
      %4952 = dma.done [#allocation5], 256
    $region109: #{tpu_custom_call.1} parent=1 // pred_fallthru
      _
    %4953 = vsyncpa [#allocation4], 1
    %4954 = vsyncpa [#allocation7], 1
    %4955 = vsyncpa [#allocation10], 1
    %4956 = vsyncpa [#allocation13], 1
    %4957 = vsyncpa [#allocation16], 1
    %4958 = vsyncpa [#allocation19], 1
    %4959 = vsyncpa [#allocation5], 1

</llo_original>
